<compile_context>
chip_gen: v7x
topology: tpu7x:2x2x1
jax: 0.10.0
libtpu: 0.0.40
codegen_flags: <defaults>
</compile_context>

<pallas_src>
import functools
import math

import jax
import jax.numpy as jnp
from jax.experimental import pallas as pl
from jax.experimental.pallas import tpu as pltpu


def _round_up(x, m):
    return ((x + m - 1) // m) * m


def _detect_vmem_cap():
    cap = 64 * 1024 * 1024
    try:
        info = pltpu.get_tpu_info()
        cap = int(getattr(info, "vmem_capacity_bytes", cap))
    except Exception:
        pass
    return cap


_VMEM_CAP = _detect_vmem_cap()
# Leave ~16 MiB headroom below physical VMEM; clamp to a sane range.
_VMEM_LIMIT = int(min(max(32 * 2**20, _VMEM_CAP - 16 * 2**20), 112 * 2**20))
# v5e/v6e (128 MiB VMEM) afford 1024-row tiles; v7x (64 MiB) stays at 512.
_BM_DEFAULT = 1024 if _VMEM_CAP >= 96 * 2**20 else 512
_BN_DEFAULT = 512


def _pick_tile(dim, cap, quantum):
    """Largest tile <= cap that exactly divides `dim` and is a multiple of `quantum`,
    or the full dim if it already fits.  Returns None if no such tile exists."""
    if dim <= cap:
        return dim
    t = (cap // quantum) * quantum
    while t >= quantum:
        if dim % t == 0:
            return t
        t -= quantum
    return None


# ----------------------------------------------------------------------------
# Fused (LayerNorm?) -> bf16 matmul (f32 acc) -> bias -> (GELU?) -> (+residual?)
# ----------------------------------------------------------------------------
def _fused_matmul_kernel(*refs, ln, activation, residual, eps):
    idx = 0
    x_ref = refs[idx]; idx += 1
    if ln:
        g_ref = refs[idx]; bln_ref = refs[idx + 1]; idx += 2
    w_ref = refs[idx]; bias_ref = refs[idx + 1]; idx += 2
    if residual:
        res_ref = refs[idx]; idx += 1
    o_ref = refs[idx]

    x = x_ref[...]
    if ln:
        # LayerNorm math kept in f32 (v5e has no bf16 VPU/EUP); matmul inputs are bf16.
        xf = x.astype(jnp.float32)
        mean = jnp.mean(xf, axis=-1, keepdims=True)
        var = jnp.mean((xf - mean) ** 2, axis=-1, keepdims=True)
        xf = (xf - mean) * jax.lax.rsqrt(var + eps)
        xf = xf * g_ref[...] + bln_ref[...]
        xb = xf.astype(jnp.bfloat16)
    else:
        xb = x if x.dtype == jnp.bfloat16 else x.astype(jnp.bfloat16)

    acc = jnp.dot(xb, w_ref[...], preferred_element_type=jnp.float32)
    acc = acc + bias_ref[...]
    if activation == "gelu":
        # TODO(synk): nn.GELU defaults to the erf form; tanh approximation used (EUP-friendly).
        acc = jax.nn.gelu(acc, approximate=True)
    if residual:
        acc = acc + res_ref[...].astype(jnp.float32)
    o_ref[...] = acc.astype(o_ref.dtype)


def fused_matmul(x, w, bias=None, *, gamma=None, beta=None, residual=None,
                 activation="none", out_dtype=jnp.float32, eps=1e-6,
                 bm=None, bn=_BN_DEFAULT):
    """y = [LN_{gamma,beta}](x) @ w + bias, optional GELU, optional + residual.

    x: (M, K); w: (K, N) (ideally pre-cast bf16).  K stays un-tiled so the LayerNorm
    fusion is exact; M (sublane) and N (lane) use exact-divisor tiles whenever possible
    so no padding / slicing HBM passes are emitted in the steady-state forward path.
    """
    M, K = x.shape
    K2, N = w.shape
    assert K == K2
    ln = gamma is not None
    if bm is None:
        bm = _BM_DEFAULT if K <= 2048 else min(_BM_DEFAULT, 512)

    # --- exact-divisor tile selection (padding only as a fallback) ---
    M_pad, tm = M, _pick_tile(M, bm, 8)
    if tm is None:
        M_pad = _round_up(M, 8)
        tm = _pick_tile(M_pad, bm, 8)
        if tm is None:
            M_pad = _round_up(M, bm); tm = bm
    N_pad, tn = N, _pick_tile(N, bn, 128)
    if tn is None:
        N_pad = _round_up(N, 128)
        tn = _pick_tile(N_pad, bn, 128)
        if tn is None:
            N_pad = _round_up(N, bn); tn = bn

    if M_pad != M:
        x = jnp.pad(x, ((0, M_pad - M), (0, 0)))
    if w.dtype != jnp.bfloat16:
        w = w.astype(jnp.bfloat16)
    if N_pad != N:
        w = jnp.pad(w, ((0, 0), (0, N_pad - N)))
    if bias is None:
        bias2 = jnp.zeros((1, N_pad), jnp.float32)
    else:
        bias2 = bias.reshape(1, N).astype(jnp.float32)
        if N_pad != N:
            bias2 = jnp.pad(bias2, ((0, 0), (0, N_pad - N)))

    operands = [x]
    in_specs = [pl.BlockSpec((tm, K), lambda i, j: (i, 0))]
    if ln:
        operands += [gamma.reshape(1, K).astype(jnp.float32),
                     beta.reshape(1, K).astype(jnp.float32)]
        in_specs += [pl.BlockSpec((1, K), lambda i, j: (0, 0)),
                     pl.BlockSpec((1, K), lambda i, j: (0, 0))]
    operands += [w, bias2]
    in_specs += [pl.BlockSpec((K, tn), lambda i, j: (0, j)),
                 pl.BlockSpec((1, tn), lambda i, j: (0, j))]
    if residual is not None:
        res = residual
        if M_pad != M or N_pad != N:
            res = jnp.pad(res, ((0, M_pad - M), (0, N_pad - N)))
        operands.append(res)
        in_specs.append(pl.BlockSpec((tm, tn), lambda i, j: (i, j)))

    kernel = functools.partial(_fused_matmul_kernel, ln=ln, activation=activation,
                               residual=residual is not None, eps=eps)
    out = pl.pallas_call(
        kernel,
        out_shape=jax.ShapeDtypeStruct((M_pad, N_pad), out_dtype),
        grid=(M_pad // tm, N_pad // tn),
        in_specs=in_specs,
        out_specs=pl.BlockSpec((tm, tn), lambda i, j: (i, j)),
        compiler_params=pltpu.CompilerParams(
            dimension_semantics=("parallel", "parallel"),
            vmem_limit_bytes=_VMEM_LIMIT),
    )(*operands)
    if M_pad != M or N_pad != N:
        out = out[:M, :N]
    return out


# ----------------------------------------------------------------------------
# Multi-head attention.
#   grid = (batch, head-pair): 128-lane-aligned q/k/v column blocks are carved
#   straight out of the raw (B, Np, 3D) qkv buffer by the BlockSpecs (no HBM
#   transposes).  Inside, an online-softmax over key chunks keeps only a
#   (Np, tkv) f32 score tile live; padded key tokens are masked out.
# ----------------------------------------------------------------------------
def _pick_kv_chunk(n_pad, cap=1024):
    if n_pad <= cap:
        return n_pad
    t = (cap // 8) * 8
    while t >= 8:
        if n_pad % t == 0:
            return t
        t -= 8
    return n_pad


def _attention_kernel(q_ref, k_ref, v_ref, o_ref, *, hpb, dh, scale, n_valid, n_pad, tkv):
    n_chunks = n_pad // tkv
    q = q_ref[0]                       # (Np, hpb*dh) bf16
    k = k_ref[0]
    v = v_ref[0]
    outs = []
    for h in range(hpb):
        qh = q[:, h * dh:(h + 1) * dh]
        m = jnp.full((n_pad, 1), -jnp.inf, jnp.float32)
        l = jnp.zeros((n_pad, 1), jnp.float32)
        acc = jnp.zeros((n_pad, dh), jnp.float32)
        for c in range(n_chunks):
            kh = k[c * tkv:(c + 1) * tkv, h * dh:(h + 1) * dh]
            vh = v[c * tkv:(c + 1) * tkv, h * dh:(h + 1) * dh]
            # scores = q @ k^T (contract on head_dim, no explicit transpose), f32 acc
            s = jax.lax.dot_general(qh, kh, (((1,), (1,)), ((), ())),
                                    preferred_element_type=jnp.float32) * scale
            if n_valid < (c + 1) * tkv:          # chunk contains padded key tokens
                col = jax.lax.broadcasted_iota(jnp.int32, s.shape, 1) + c * tkv
                s = jnp.where(col < n_valid, s, -jnp.inf)
            m_new = jnp.maximum(m, jnp.max(s, axis=-1, keepdims=True))
            alpha = jnp.exp(m - m_new)
            p = jnp.exp(s - m_new)
            l = alpha * l + jnp.sum(p, axis=-1, keepdims=True)
            acc = alpha * acc + jnp.dot(p.astype(jnp.bfloat16), vh,
                                        preferred_element_type=jnp.float32)
            m = m_new
        outs.append(acc * pl.reciprocal(l, approx=True))
    o = outs[0] if hpb == 1 else jnp.concatenate(outs, axis=-1)   # lane-dense (Np, hpb*dh)
    o_ref[0] = o.astype(o_ref.dtype)


def pallas_attention(qkv, heads, dh, scale, n_valid):
    B, Np, threeD = qkv.shape
    D = heads * dh
    assert threeD == 3 * D
    hpb = 2 if heads % 2 == 0 else 1          # heads per grid step
    hw = hpb * dh
    # TODO(synk): head widths that are not a multiple of 128 lanes would need a
    #             monolithic fallback; DINOv2 (dh=64, even #heads) satisfies this.
    assert hw % 128 == 0, "head-pair width must be 128-lane aligned"
    G = heads // hpb
    tkv = _pick_kv_chunk(Np)

    kernel = functools.partial(_attention_kernel, hpb=hpb, dh=dh, scale=scale,
                               n_valid=n_valid, n_pad=Np, tkv=tkv)
    return pl.pallas_call(
        kernel,
        out_shape=jax.ShapeDtypeStruct((B, Np, D), jnp.bfloat16),
        grid=(B, G),
        in_specs=[pl.BlockSpec((1, Np, hw), lambda b, g: (b, 0, g)),          # q cols
                  pl.BlockSpec((1, Np, hw), lambda b, g: (b, 0, G + g)),      # k cols
                  pl.BlockSpec((1, Np, hw), lambda b, g: (b, 0, 2 * G + g))], # v cols
        out_specs=pl.BlockSpec((1, Np, hw), lambda b, g: (b, 0, g)),
        compiler_params=pltpu.CompilerParams(
            dimension_semantics=("parallel", "parallel"),
            vmem_limit_bytes=_VMEM_LIMIT),
    )(qkv, qkv, qkv)


# ----------------------------------------------------------------------------
# Bilinear upsample (align_corners=False) fused as Wh @ X @ Ww^T per (batch*class)
# ----------------------------------------------------------------------------
def _bilinear_kernel(x_ref, wh_ref, ww_ref, o_ref):
    x = x_ref[0].astype(jnp.float32)                                   # (ph, pw)
    t = jnp.dot(wh_ref[...], x, preferred_element_type=jnp.float32)    # (H, pw)
    o = jax.lax.dot_general(t, ww_ref[...], (((1,), (1,)), ((), ())),
                            preferred_element_type=jnp.float32)        # (H, W)
    o_ref[0] = o.astype(o_ref.dtype)


def pallas_bilinear_upsample(x, wh, ww):
    # TODO(synk): restructure as two large lane-dense GEMMs (width pass then height pass)
    #             to drop the per-(b,class) grid overhead; negligible cost either way.
    BC, ph, pw = x.shape
    H = wh.shape[0]
    W = ww.shape[0]
    return pl.pallas_call(
        _bilinear_kernel,
        out_shape=jax.ShapeDtypeStruct((BC, H, W), jnp.float32),
        grid=(BC,),
        in_specs=[pl.BlockSpec((1, ph, pw), lambda i: (i, 0, 0)),
                  pl.BlockSpec((H, ph), lambda i: (0, 0)),
                  pl.BlockSpec((W, pw), lambda i: (0, 0))],
        out_specs=pl.BlockSpec((1, H, W), lambda i: (i, 0, 0)),
        compiler_params=pltpu.CompilerParams(
            dimension_semantics=("parallel",),
            vmem_limit_bytes=_VMEM_LIMIT),
    )(x, wh, ww)


def bilinear_matrix(out_size, in_size):
    """Row-interpolation matrix matching F.interpolate(mode='bilinear', align_corners=False)."""
    scale = in_size / out_size
    i = jnp.arange(out_size, dtype=jnp.float32)
    src = jnp.maximum((i + 0.5) * scale - 0.5, 0.0)
    i0 = jnp.minimum(jnp.floor(src).astype(jnp.int32), in_size - 1)
    i1 = jnp.minimum(i0 + 1, in_size - 1)
    lam = src - i0.astype(jnp.float32)
    W = jnp.zeros((out_size, in_size), jnp.float32)
    rows = jnp.arange(out_size)
    W = W.at[rows, i0].add(1.0 - lam)
    W = W.at[rows, i1].add(lam)
    return W


# ----------------------------------------------------------------------------
# Parameter init (deterministic, synthetic) + one-time weight preparation
# ----------------------------------------------------------------------------
def init_params(key, cfg):
    keys = iter(jax.random.split(key, 256))

    def nrm(shape, std=0.02):
        return jax.random.normal(next(keys), shape, jnp.float32) * std

    C, P, D = cfg["in_chans"], cfg["patch"], cfg["emb_dim"]
    hid, r, nc = cfg["mlp_hidden"], cfg["lora_r"], cfg["n_classes"]
    N = 1 + (cfg["img"][0] // P) * (cfg["img"][1] // P)

    params = {
        "w_pe": nrm((D, C * P * P)),            # Conv2d(3, D, P, stride=P) weight, flattened
        "b_pe": nrm((D,)),
        "cls_token": nrm((1, 1, D)),
        "pos_embed": nrm((1, N, D)),
        "norm_g": jnp.ones((D,), jnp.float32),
        "norm_b": jnp.zeros((D,), jnp.float32),
        "w_cls": nrm((nc, D)),                  # LinearClassifier 1x1 conv weight
        "b_cls": nrm((nc,)),
        "blocks": [],
    }
    for _ in range(cfg["depth"]):
        blk = {
            "ln1_g": jnp.ones((D,), jnp.float32), "ln1_b": jnp.zeros((D,), jnp.float32),
            "w_qkv": nrm((3 * D, D)), "b_qkv": nrm((3 * D,)),
            # LoRA adapters (module inits w_b to zero; small nonzero here to exercise the path)
            "w_a_q": nrm((r, D), std=1.0 / math.sqrt(D)), "w_b_q": nrm((D, r)),
            "w_a_v": nrm((r, D), std=1.0 / math.sqrt(D)), "w_b_v": nrm((D, r)),
            "w_proj": nrm((D, D)), "b_proj": nrm((D,)),
            "ln2_g": jnp.ones((D,), jnp.float32), "ln2_b": jnp.zeros((D,), jnp.float32),
            "w_fc1": nrm((hid, D)), "b_fc1": nrm((hid,)),
            "w_fc2": nrm((D, hid)), "b_fc2": nrm((D,)),
        }
        params["blocks"].append(blk)
    return params


def prepare_params(params, cfg):
    """One-time weight prep: merge rank-r LoRA into the frozen qkv weight, transpose all
    GEMM weights to (K, N) layout and cast to bf16, so the per-forward path does zero
    weight-layout work (no concat / .T / f32->bf16 HBM passes inside the block loop)."""
    D = cfg["emb_dim"]
    prep = {
        "w_pe_t": params["w_pe"].T.astype(jnp.bfloat16),     # (C*P*P, D)
        "b_pe": params["b_pe"],
        "cls_token": params["cls_token"],
        "pos_embed": params["pos_embed"],
        "norm_g": params["norm_g"], "norm_b": params["norm_b"],
        "w_cls_t": params["w_cls"].T.astype(jnp.bfloat16),   # (D, nc)
        "b_cls": params["b_cls"],
        "blocks": [],
    }
    for blk in params["blocks"]:
        # qkv(x) with q += B_q A_q x and v += B_v A_v x  ==  x @ (W_qkv + [B_q A_q; 0; B_v A_v])^T
        w_q_eff = blk["w_qkv"][:D] + blk["w_b_q"] @ blk["w_a_q"]
        w_v_eff = blk["w_qkv"][2 * D:] + blk["w_b_v"] @ blk["w_a_v"]
        w_qkv_eff = jnp.concatenate([w_q_eff, blk["w_qkv"][D:2 * D], w_v_eff], axis=0)
        prep["blocks"].append({
            "ln1_g": blk["ln1_g"], "ln1_b": blk["ln1_b"],
            "w_qkv_t": w_qkv_eff.T.astype(jnp.bfloat16),      # (D, 3D)
            "b_qkv": blk["b_qkv"],
            "w_proj_t": blk["w_proj"].T.astype(jnp.bfloat16), # (D, D)
            "b_proj": blk["b_proj"],
            "ln2_g": blk["ln2_g"], "ln2_b": blk["ln2_b"],
            "w_fc1_t": blk["w_fc1"].T.astype(jnp.bfloat16),   # (D, hid)
            "b_fc1": blk["b_fc1"],
            "w_fc2_t": blk["w_fc2"].T.astype(jnp.bfloat16),   # (hid, D)
            "b_fc2": blk["b_fc2"],
        })
    return prep


# ----------------------------------------------------------------------------
# Forward pass (DINOV2EncoderLoRA.forward, use_uper=False branch)
# ----------------------------------------------------------------------------
def dino_v2_encoder_lora_forward(prep, x, cfg):
    B, C, H, W = x.shape
    P = cfg["patch"]
    ph, pw = H // P, W // P
    D = cfg["emb_dim"]
    heads = cfg["heads"]
    dh = D // heads
    scale = dh ** -0.5
    nc = cfg["n_classes"]

    # ---- patch embedding: Conv2d(C, D, P, stride=P) lowered to matmul over patches ----
    patches = (x.reshape(B, C, ph, P, pw, P)
                 .transpose(0, 2, 4, 1, 3, 5)           # (B, ph, pw, C, P, P)
                 .reshape(B * ph * pw, C * P * P))
    tok = fused_matmul(patches, prep["w_pe_t"], prep["b_pe"]).reshape(B, ph * pw, D)

    cls = jnp.broadcast_to(prep["cls_token"], (B, 1, D))
    toks = jnp.concatenate([cls, tok], axis=1) + prep["pos_embed"]
    N = toks.shape[1]

    # ---- pad the token axis ONCE; padded residual stream carried through all blocks ----
    Np = _round_up(N, 8)
    if Np != N:
        toks = jnp.pad(toks, ((0, 0), (0, Np - N), (0, 0)))
    toks2d = toks.reshape(B * Np, D)                     # residual stream (f32)

    # ---- transformer blocks (frozen encoder, LoRA merged into qkv at prep time) ----
    for blk in prep["blocks"]:
        # LN1 -> fused qkv projection (bf16 activations)
        qkv = fused_matmul(toks2d, blk["w_qkv_t"], blk["b_qkv"],
                           gamma=blk["ln1_g"], beta=blk["ln1_b"],
                           out_dtype=jnp.bfloat16)
        attn = pallas_attention(qkv.reshape(B, Np, 3 * D), heads, dh, scale,
                                n_valid=N)               # (B, Np, D) bf16

        # attention output projection fused with residual add (residual stays f32)
        toks2d = fused_matmul(attn.reshape(B * Np, D), blk["w_proj_t"], blk["b_proj"],
                              residual=toks2d, out_dtype=jnp.float32)

        # LN2 -> fc1 + GELU (bf16 hidden), then fc2 fused with residual add
        hidden = fused_matmul(toks2d, blk["w_fc1_t"], blk["b_fc1"],
                              gamma=blk["ln2_g"], beta=blk["ln2_b"],
                              activation="gelu", out_dtype=jnp.bfloat16)
        toks2d = fused_matmul(hidden, blk["w_fc2_t"], blk["b_fc2"],
                              residual=toks2d, out_dtype=jnp.float32)

    # ---- final norm fused with LinearClassifier 1x1 conv (cls token + pad rows dropped) ----
    patch_toks = toks2d.reshape(B, Np, D)[:, 1:N, :].reshape(B * ph * pw, D)
    logits = fused_matmul(patch_toks, prep["w_cls_t"], prep["b_cls"],
                          gamma=prep["norm_g"], beta=prep["norm_b"])

    # ---- F.interpolate(mode='bilinear', align_corners=False): Wh @ X @ Ww^T per (b, class) ----
    logits = logits.reshape(B, ph, pw, nc).transpose(0, 3, 1, 2).reshape(B * nc, ph, pw)
    Wh = bilinear_matrix(H, ph)
    Ww = bilinear_matrix(W, pw)
    out = pallas_bilinear_upsample(logits, Wh, Ww).reshape(B, nc, H, W)
    return out
    # TODO(synk): use_uper=True UPerNet decoder path not implemented (default LinearClassifier path only).


# ----------------------------------------------------------------------------
if __name__ == "__main__":
    cfg = {
        "img": (16, 16),
        "patch": 4,
        "in_chans": 3,
        "emb_dim": 128,       # dh = 64 -> a head pair spans 128 lanes, like real DINOv2
        "heads": 2,
        "depth": 2,
        "mlp_hidden": 256,
        "lora_r": 4,
        "n_classes": 8,
    }
    key = jax.random.PRNGKey(0)
    k_param, k_x = jax.random.split(key)
    params = init_params(k_param, cfg)
    prep = prepare_params(params, cfg)    # one-time LoRA merge + weight layout/cast
    x = jax.random.normal(k_x, (2, cfg["in_chans"], cfg["img"][0], cfg["img"][1]), jnp.float32)

    fwd = jax.jit(functools.partial(dino_v2_encoder_lora_forward, cfg=cfg))
    out = jax.block_until_ready(fwd(prep, x))
    assert out.shape == (2, cfg["n_classes"], cfg["img"][0], cfg["img"][1]), out.shape
    assert bool(jnp.isfinite(out).all()), "non-finite output"
    print("KERNEL_OK")
</pallas_src>

<mosaic_0001>
module attributes {stable_mosaic.version = 11 : i64} {
  func.func private @main(%arg0: i32) attributes {dimension_semantics = [#tpu.dimension_semantics<core_parallel>], iteration_bounds = array<i64: 2>, tpu.core_type = #tpu.core_type<sc_scalar_subcore>, window_params = []} {
    return
  }
}

module attributes {stable_mosaic.version = 11 : i64} {
  func.func private @main(%arg0: i32) attributes {dimension_semantics = [#tpu.dimension_semantics<core_parallel>], iteration_bounds = array<i64: 2>, tpu.core_type = #tpu.core_type<sc_scalar_subcore>, window_params = []} {
    return
  }
}

module attributes {stable_mosaic.version = 11 : i64} {
  func.func @_fused_matmul_kernel(%arg0: i32, %arg1: i32, %arg2: memref<32x48xf32, #tpu.memory_space<vmem>>, %arg3: memref<48x128xbf16, #tpu.memory_space<vmem>>, %arg4: memref<1x128xf32, #tpu.memory_space<vmem>>, %arg5: memref<32x128xf32, #tpu.memory_space<vmem>>) attributes {dimension_semantics = [#tpu.dimension_semantics<parallel>, #tpu.dimension_semantics<parallel>], iteration_bounds = array<i64: 1, 1>, scalar_prefetch = 0 : i64, scratch_operands = 0 : i64, tpu.core_type = #tpu.core_type<tc>, window_params = [{transform_indices = @transform_0, window_bounds = array<i64: 32, 48>}, {transform_indices = @transform_1, window_bounds = array<i64: 48, 128>}, {transform_indices = @transform_2, window_bounds = array<i64: 1, 128>}, {transform_indices = @transform_3, window_bounds = array<i64: 32, 128>}]} {
    %c0 = arith.constant 0 : index
    %c0_0 = arith.constant 0 : index
    %0 = vector.load %arg2[%c0, %c0_0] : memref<32x48xf32, #tpu.memory_space<vmem>>, vector<32x48xf32>
    %1 = arith.truncf %0 : vector<32x48xf32> to vector<32x48xbf16>
    %c0_1 = arith.constant 0 : index
    %c0_2 = arith.constant 0 : index
    %2 = vector.load %arg3[%c0_1, %c0_2] : memref<48x128xbf16, #tpu.memory_space<vmem>>, vector<48x128xbf16>
    %cst = arith.constant dense<0.000000e+00> : vector<32x128xf32>
    %3 = tpu.matmul %1, %2, %cst {dimension_numbers = #tpu.dot_dimension_numbers<[1], [0], [0], [1], [0, 0, 1, 1], [], []>} : vector<32x48xbf16>, vector<48x128xbf16>, vector<32x128xf32> -> vector<32x128xf32>
    %c0_3 = arith.constant 0 : index
    %c0_4 = arith.constant 0 : index
    %4 = vector.load %arg4[%c0_3, %c0_4] : memref<1x128xf32, #tpu.memory_space<vmem>>, vector<1x128xf32>
    %5 = vector.broadcast %4 : vector<1x128xf32> to vector<32x128xf32>
    %6 = arith.addf %3, %5 : vector<32x128xf32>
    %c0_5 = arith.constant 0 : index
    %c0_6 = arith.constant 0 : index
    %7 = vector.load %arg5[%c0_5, %c0_6] : memref<32x128xf32, #tpu.memory_space<vmem>>, vector<32x128xf32>
    tpu.vector_store %arg5[%c0_5, %c0_6], %6 {strides = array<i32>} : memref<32x128xf32, #tpu.memory_space<vmem>>, vector<32x128xf32>,
    return
  }
  func.func @transform_0(%arg0: i32, %arg1: i32) -> (i32, i32) {
    %c0_i32 = arith.constant 0 : i32
    %c0_i32_0 = arith.constant 0 : i32
    return %arg0, %c0_i32 : i32, i32
  }
  func.func @transform_1(%arg0: i32, %arg1: i32) -> (i32, i32) {
    %c0_i32 = arith.constant 0 : i32
    %c0_i32_0 = arith.constant 0 : i32
    return %c0_i32, %arg1 : i32, i32
  }
  func.func @transform_2(%arg0: i32, %arg1: i32) -> (i32, i32) {
    %c0_i32 = arith.constant 0 : i32
    %c0_i32_0 = arith.constant 0 : i32
    return %c0_i32, %arg1 : i32, i32
  }
  func.func @transform_3(%arg0: i32, %arg1: i32) -> (i32, i32) {
    %c0_i32 = arith.constant 0 : i32
    return %arg0, %arg1 : i32, i32
  }
}

module attributes {stable_mosaic.version = 11 : i64} {
  func.func @_fused_matmul_kernel(%arg0: i32, %arg1: i32, %arg2: memref<48x128xbf16, #tpu.memory_space<vmem>>, %arg3: memref<128x128xbf16, #tpu.memory_space<vmem>>, %arg4: memref<1x128xf32, #tpu.memory_space<vmem>>, %arg5: memref<48x128xf32, #tpu.memory_space<vmem>>, %arg6: memref<48x128xf32, #tpu.memory_space<vmem>>) attributes {dimension_semantics = [#tpu.dimension_semantics<parallel>, #tpu.dimension_semantics<parallel>], iteration_bounds = array<i64: 1, 1>, scalar_prefetch = 0 : i64, scratch_operands = 0 : i64, tpu.core_type = #tpu.core_type<tc>, window_params = [{transform_indices = @transform_0, window_bounds = array<i64: 48, 128>}, {transform_indices = @transform_1, window_bounds = array<i64: 128, 128>}, {transform_indices = @transform_2, window_bounds = array<i64: 1, 128>}, {transform_indices = @transform_3, window_bounds = array<i64: 48, 128>}, {transform_indices = @transform_4, window_bounds = array<i64: 48, 128>}]} {
    %c0 = arith.constant 0 : index
    %c0_0 = arith.constant 0 : index
    %0 = vector.load %arg2[%c0, %c0_0] : memref<48x128xbf16, #tpu.memory_space<vmem>>, vector<48x128xbf16>
    %c0_1 = arith.constant 0 : index
    %c0_2 = arith.constant 0 : index
    %1 = vector.load %arg3[%c0_1, %c0_2] : memref<128x128xbf16, #tpu.memory_space<vmem>>, vector<128x128xbf16>
    %cst = arith.constant dense<0.000000e+00> : vector<48x128xf32>
    %2 = tpu.matmul %0, %1, %cst {dimension_numbers = #tpu.dot_dimension_numbers<[1], [0], [0], [1], [0, 0, 1, 1], [], []>} : vector<48x128xbf16>, vector<128x128xbf16>, vector<48x128xf32> -> vector<48x128xf32>
    %c0_3 = arith.constant 0 : index
    %c0_4 = arith.constant 0 : index
    %3 = vector.load %arg4[%c0_3, %c0_4] : memref<1x128xf32, #tpu.memory_space<vmem>>, vector<1x128xf32>
    %4 = vector.broadcast %3 : vector<1x128xf32> to vector<48x128xf32>
    %5 = arith.addf %2, %4 : vector<48x128xf32>
    %c0_5 = arith.constant 0 : index
    %c0_6 = arith.constant 0 : index
    %6 = vector.load %arg5[%c0_5, %c0_6] : memref<48x128xf32, #tpu.memory_space<vmem>>, vector<48x128xf32>
    %7 = arith.addf %5, %6 : vector<48x128xf32>
    %c0_7 = arith.constant 0 : index
    %c0_8 = arith.constant 0 : index
    %8 = vector.load %arg6[%c0_7, %c0_8] : memref<48x128xf32, #tpu.memory_space<vmem>>, vector<48x128xf32>
    tpu.vector_store %arg6[%c0_7, %c0_8], %7 {strides = array<i32>} : memref<48x128xf32, #tpu.memory_space<vmem>>, vector<48x128xf32>,
    return
  }
  func.func @transform_0(%arg0: i32, %arg1: i32) -> (i32, i32) {
    %c0_i32 = arith.constant 0 : i32
    %c0_i32_0 = arith.constant 0 : i32
    return %arg0, %c0_i32 : i32, i32
  }
  func.func @transform_1(%arg0: i32, %arg1: i32) -> (i32, i32) {
    %c0_i32 = arith.constant 0 : i32
    %c0_i32_0 = arith.constant 0 : i32
    return %c0_i32, %arg1 : i32, i32
  }
  func.func @transform_2(%arg0: i32, %arg1: i32) -> (i32, i32) {
    %c0_i32 = arith.constant 0 : i32
    %c0_i32_0 = arith.constant 0 : i32
    return %c0_i32, %arg1 : i32, i32
  }
  func.func @transform_3(%arg0: i32, %arg1: i32) -> (i32, i32) {
    %c0_i32 = arith.constant 0 : i32
    return %arg0, %arg1 : i32, i32
  }
  func.func @transform_4(%arg0: i32, %arg1: i32) -> (i32, i32) {
    %c0_i32 = arith.constant 0 : i32
    return %arg0, %arg1 : i32, i32
  }
}

module attributes {stable_mosaic.version = 11 : i64} {
  func.func @_attention_kernel(%arg0: i32, %arg1: i32, %arg2: memref<1x24x128xbf16, #tpu.memory_space<vmem>>, %arg3: memref<1x24x128xbf16, #tpu.memory_space<vmem>>, %arg4: memref<1x24x128xbf16, #tpu.memory_space<vmem>>, %arg5: memref<1x24x128xbf16, #tpu.memory_space<vmem>>) attributes {dimension_semantics = [#tpu.dimension_semantics<parallel>, #tpu.dimension_semantics<parallel>], iteration_bounds = array<i64: 2, 1>, scalar_prefetch = 0 : i64, scratch_operands = 0 : i64, tpu.core_type = #tpu.core_type<tc>, window_params = [{transform_indices = @transform_0, window_bounds = array<i64: 1, 24, 128>}, {transform_indices = @transform_1, window_bounds = array<i64: 1, 24, 128>}, {transform_indices = @transform_2, window_bounds = array<i64: 1, 24, 128>}, {transform_indices = @transform_3, window_bounds = array<i64: 1, 24, 128>}]} {
    %c0 = arith.constant 0 : index
    %c0_0 = arith.constant 0 : index
    %c0_1 = arith.constant 0 : index
    %0 = vector.load %arg2[%c0, %c0_0, %c0_1] : memref<1x24x128xbf16, #tpu.memory_space<vmem>>, vector<1x24x128xbf16>
    %1 = vector.shape_cast %0 : vector<1x24x128xbf16> to vector<24x128xbf16>
    %c0_2 = arith.constant 0 : index
    %c0_3 = arith.constant 0 : index
    %c0_4 = arith.constant 0 : index
    %2 = vector.load %arg3[%c0_2, %c0_3, %c0_4] : memref<1x24x128xbf16, #tpu.memory_space<vmem>>, vector<1x24x128xbf16>
    %3 = vector.shape_cast %2 : vector<1x24x128xbf16> to vector<24x128xbf16>
    %c0_5 = arith.constant 0 : index
    %c0_6 = arith.constant 0 : index
    %c0_7 = arith.constant 0 : index
    %4 = vector.load %arg4[%c0_5, %c0_6, %c0_7] : memref<1x24x128xbf16, #tpu.memory_space<vmem>>, vector<1x24x128xbf16>
    %5 = vector.shape_cast %4 : vector<1x24x128xbf16> to vector<24x128xbf16>
    %6 = vector.extract_strided_slice %1 {offsets = [0, 0], sizes = [24, 64], strides = [1, 1]} : vector<24x128xbf16> to vector<24x64xbf16>
    %cst = arith.constant 0xFF800000 : f32
    %7 = vector.broadcast %cst : f32 to vector<24x1xf32>
    %cst_8 = arith.constant 0.000000e+00 : f32
    %8 = vector.broadcast %cst_8 : f32 to vector<24x1xf32>
    %cst_9 = arith.constant 0.000000e+00 : f32
    %9 = vector.broadcast %cst_9 : f32 to vector<24x64xf32>
    %10 = vector.extract_strided_slice %3 {offsets = [0, 0], sizes = [24, 64], strides = [1, 1]} : vector<24x128xbf16> to vector<24x64xbf16>
    %11 = vector.extract_strided_slice %5 {offsets = [0, 0], sizes = [24, 64], strides = [1, 1]} : vector<24x128xbf16> to vector<24x64xbf16>
    %cst_10 = arith.constant dense<0.000000e+00> : vector<24x24xf32>
    %12 = tpu.matmul %6, %10, %cst_10 {dimension_numbers = #tpu.dot_dimension_numbers<[1], [1], [0], [0], [0, 0, 1, 0], [], []>} : vector<24x64xbf16>, vector<24x64xbf16>, vector<24x24xf32> -> vector<24x24xf32>
    %cst_11 = arith.constant 1.250000e-01 : f32
    %13 = vector.broadcast %cst_11 : f32 to vector<24x24xf32>
    %14 = arith.mulf %12, %13 : vector<24x24xf32>
    %15 = tpu.iota {dimensions = array<i32: 1>} : vector<24x24xi32>
    %c0_i32 = arith.constant 0 : i32
    %16 = vector.broadcast %c0_i32 : i32 to vector<24x24xi32>
    %17 = arith.addi %15, %16 : vector<24x24xi32>
    %c17_i32 = arith.constant 17 : i32
    %18 = vector.broadcast %c17_i32 : i32 to vector<24x24xi32>
    %19 = arith.cmpi slt, %17, %18 : vector<24x24xi32>
    %cst_12 = arith.constant 0xFF800000 : f32
    %20 = vector.broadcast %cst_12 : f32 to vector<24x24xf32>
    %21 = arith.select %19, %14, %20 : vector<24x24xi1>, vector<24x24xf32>
    %cst_13 = arith.constant dense<0xFF800000> : vector<24xf32>
    %22 = vector.multi_reduction <maximumf>, %21, %cst_13 [1] : vector<24x24xf32> to vector<24xf32>
    %23 = vector.shape_cast %22 : vector<24xf32> to vector<24x1xf32>
    %24 = arith.maximumf %7, %23 : vector<24x1xf32>
    %25 = arith.subf %7, %24 : vector<24x1xf32>
    %26 = math.exp %25 : vector<24x1xf32>
    %27 = vector.broadcast %24 : vector<24x1xf32> to vector<24x24xf32>
    %28 = arith.subf %21, %27 : vector<24x24xf32>
    %29 = math.exp %28 : vector<24x24xf32>
    %30 = arith.mulf %26, %8 : vector<24x1xf32>
    %cst_14 = arith.constant dense<0.000000e+00> : vector<24xf32>
    %31 = vector.multi_reduction <add>, %29, %cst_14 [1] : vector<24x24xf32> to vector<24xf32>
    %32 = vector.shape_cast %31 : vector<24xf32> to vector<24x1xf32>
    %33 = arith.addf %30, %32 : vector<24x1xf32>
    %34 = vector.broadcast %26 : vector<24x1xf32> to vector<24x64xf32>
    %35 = arith.mulf %34, %9 : vector<24x64xf32>
    %36 = arith.truncf %29 : vector<24x24xf32> to vector<24x24xbf16>
    %cst_15 = arith.constant dense<0.000000e+00> : vector<24x64xf32>
    %37 = tpu.matmul %36, %11, %cst_15 {dimension_numbers = #tpu.dot_dimension_numbers<[1], [0], [0], [1], [0, 0, 1, 1], [], []>} : vector<24x24xbf16>, vector<24x64xbf16>, vector<24x64xf32> -> vector<24x64xf32>
    %38 = arith.addf %35, %37 : vector<24x64xf32>
    %39 = tpu.reciprocal %33 {approx = true} : vector<24x1xf32> -> vector<24x1xf32>
    %40 = vector.broadcast %39 : vector<24x1xf32> to vector<24x64xf32>
    %41 = arith.mulf %38, %40 : vector<24x64xf32>
    %42 = vector.extract_strided_slice %1 {offsets = [0, 64], sizes = [24, 64], strides = [1, 1]} : vector<24x128xbf16> to vector<24x64xbf16>
    %cst_16 = arith.constant 0xFF800000 : f32
    %43 = vector.broadcast %cst_16 : f32 to vector<24x1xf32>
    %cst_17 = arith.constant 0.000000e+00 : f32
    %44 = vector.broadcast %cst_17 : f32 to vector<24x1xf32>
    %cst_18 = arith.constant 0.000000e+00 : f32
    %45 = vector.broadcast %cst_18 : f32 to vector<24x64xf32>
    %46 = vector.extract_strided_slice %3 {offsets = [0, 64], sizes = [24, 64], strides = [1, 1]} : vector<24x128xbf16> to vector<24x64xbf16>
    %47 = vector.extract_strided_slice %5 {offsets = [0, 64], sizes = [24, 64], strides = [1, 1]} : vector<24x128xbf16> to vector<24x64xbf16>
    %cst_19 = arith.constant dense<0.000000e+00> : vector<24x24xf32>
    %48 = tpu.matmul %42, %46, %cst_19 {dimension_numbers = #tpu.dot_dimension_numbers<[1], [1], [0], [0], [0, 0, 1, 0], [], []>} : vector<24x64xbf16>, vector<24x64xbf16>, vector<24x24xf32> -> vector<24x24xf32>
    %cst_20 = arith.constant 1.250000e-01 : f32
    %49 = vector.broadcast %cst_20 : f32 to vector<24x24xf32>
    %50 = arith.mulf %48, %49 : vector<24x24xf32>
    %51 = tpu.iota {dimensions = array<i32: 1>} : vector<24x24xi32>
    %c0_i32_21 = arith.constant 0 : i32
    %52 = vector.broadcast %c0_i32_21 : i32 to vector<24x24xi32>
    %53 = arith.addi %51, %52 : vector<24x24xi32>
    %c17_i32_22 = arith.constant 17 : i32
    %54 = vector.broadcast %c17_i32_22 : i32 to vector<24x24xi32>
    %55 = arith.cmpi slt, %53, %54 : vector<24x24xi32>
    %cst_23 = arith.constant 0xFF800000 : f32
    %56 = vector.broadcast %cst_23 : f32 to vector<24x24xf32>
    %57 = arith.select %55, %50, %56 : vector<24x24xi1>, vector<24x24xf32>
    %cst_24 = arith.constant dense<0xFF800000> : vector<24xf32>
    %58 = vector.multi_reduction <maximumf>, %57, %cst_24 [1] : vector<24x24xf32> to vector<24xf32>
    %59 = vector.shape_cast %58 : vector<24xf32> to vector<24x1xf32>
    %60 = arith.maximumf %43, %59 : vector<24x1xf32>
    %61 = arith.subf %43, %60 : vector<24x1xf32>
    %62 = math.exp %61 : vector<24x1xf32>
    %63 = vector.broadcast %60 : vector<24x1xf32> to vector<24x24xf32>
    %64 = arith.subf %57, %63 : vector<24x24xf32>
    %65 = math.exp %64 : vector<24x24xf32>
    %66 = arith.mulf %62, %44 : vector<24x1xf32>
    %cst_25 = arith.constant dense<0.000000e+00> : vector<24xf32>
    %67 = vector.multi_reduction <add>, %65, %cst_25 [1] : vector<24x24xf32> to vector<24xf32>
    %68 = vector.shape_cast %67 : vector<24xf32> to vector<24x1xf32>
    %69 = arith.addf %66, %68 : vector<24x1xf32>
    %70 = vector.broadcast %62 : vector<24x1xf32> to vector<24x64xf32>
    %71 = arith.mulf %70, %45 : vector<24x64xf32>
    %72 = arith.truncf %65 : vector<24x24xf32> to vector<24x24xbf16>
    %cst_26 = arith.constant dense<0.000000e+00> : vector<24x64xf32>
    %73 = tpu.matmul %72, %47, %cst_26 {dimension_numbers = #tpu.dot_dimension_numbers<[1], [0], [0], [1], [0, 0, 1, 1], [], []>} : vector<24x24xbf16>, vector<24x64xbf16>, vector<24x64xf32> -> vector<24x64xf32>
    %74 = arith.addf %71, %73 : vector<24x64xf32>
    %75 = tpu.reciprocal %69 {approx = true} : vector<24x1xf32> -> vector<24x1xf32>
    %76 = vector.broadcast %75 : vector<24x1xf32> to vector<24x64xf32>
    %77 = arith.mulf %74, %76 : vector<24x64xf32>
    %78 = tpu.concatenate %41, %77 in 1 : vector<24x64xf32>, vector<24x64xf32> -> vector<24x128xf32>
    %79 = arith.truncf %78 : vector<24x128xf32> to vector<24x128xbf16>
    %c0_27 = arith.constant 0 : index
    %c0_28 = arith.constant 0 : index
    %c0_29 = arith.constant 0 : index
    %80 = vector.load %arg5[%c0_27, %c0_28, %c0_29] : memref<1x24x128xbf16, #tpu.memory_space<vmem>>, vector<1x24x128xbf16>
    %81 = vector.shape_cast %80 : vector<1x24x128xbf16> to vector<24x128xbf16>
    %82 = vector.shape_cast %79 : vector<24x128xbf16> to vector<1x24x128xbf16>
    tpu.vector_store %arg5[%c0_27, %c0_28, %c0_29], %82 {strides = array<i32>} : memref<1x24x128xbf16, #tpu.memory_space<vmem>>, vector<1x24x128xbf16>,
    return
  }
  func.func @transform_0(%arg0: i32, %arg1: i32) -> (i32, i32, i32) {
    %c0_i32 = arith.constant 0 : i32
    %c0_i32_0 = arith.constant 0 : i32
    return %arg0, %c0_i32, %arg1 : i32, i32, i32
  }
  func.func @transform_1(%arg0: i32, %arg1: i32) -> (i32, i32, i32) {
    %c1_i32 = arith.constant 1 : i32
    %0 = arith.addi %c1_i32, %arg1 : i32
    %c0_i32 = arith.constant 0 : i32
    %c0_i32_0 = arith.constant 0 : i32
    return %arg0, %c0_i32, %0 : i32, i32, i32
  }
  func.func @transform_2(%arg0: i32, %arg1: i32) -> (i32, i32, i32) {
    %c2_i32 = arith.constant 2 : i32
    %0 = arith.addi %c2_i32, %arg1 : i32
    %c0_i32 = arith.constant 0 : i32
    %c0_i32_0 = arith.constant 0 : i32
    return %arg0, %c0_i32, %0 : i32, i32, i32
  }
  func.func @transform_3(%arg0: i32, %arg1: i32) -> (i32, i32, i32) {
    %c0_i32 = arith.constant 0 : i32
    %c0_i32_0 = arith.constant 0 : i32
    return %arg0, %c0_i32, %arg1 : i32, i32, i32
  }
}

module attributes {stable_mosaic.version = 11 : i64} {
  func.func @_fused_matmul_kernel(%arg0: i32, %arg1: i32, %arg2: memref<48x128xf32, #tpu.memory_space<vmem>>, %arg3: memref<1x128xf32, #tpu.memory_space<vmem>>, %arg4: memref<1x128xf32, #tpu.memory_space<vmem>>, %arg5: memref<128x384xbf16, #tpu.memory_space<vmem>>, %arg6: memref<1x384xf32, #tpu.memory_space<vmem>>, %arg7: memref<48x384xbf16, #tpu.memory_space<vmem>>) attributes {dimension_semantics = [#tpu.dimension_semantics<parallel>, #tpu.dimension_semantics<parallel>], iteration_bounds = array<i64: 1, 1>, scalar_prefetch = 0 : i64, scratch_operands = 0 : i64, tpu.core_type = #tpu.core_type<tc>, window_params = [{transform_indices = @transform_0, window_bounds = array<i64: 48, 128>}, {pipeline_mode = #tpu.pipeline_mode<synchronous>, transform_indices = @transform_1, window_bounds = array<i64: 1, 128>}, {pipeline_mode = #tpu.pipeline_mode<synchronous>, transform_indices = @transform_2, window_bounds = array<i64: 1, 128>}, {transform_indices = @transform_3, window_bounds = array<i64: 128, 384>}, {transform_indices = @transform_4, window_bounds = array<i64: 1, 384>}, {transform_indices = @transform_5, window_bounds = array<i64: 48, 384>}]} {
    %c0 = arith.constant 0 : index
    %c0_0 = arith.constant 0 : index
    %0 = vector.load %arg2[%c0, %c0_0] : memref<48x128xf32, #tpu.memory_space<vmem>>, vector<48x128xf32>
    %cst = arith.constant dense<0.000000e+00> : vector<48xf32>
    %1 = vector.multi_reduction <add>, %0, %cst [1] : vector<48x128xf32> to vector<48xf32>
    %2 = vector.shape_cast %1 : vector<48xf32> to vector<48x1xf32>
    %cst_1 = arith.constant 1.280000e+02 : f32
    %3 = vector.broadcast %cst_1 : f32 to vector<48x1xf32>
    %4 = arith.divf %2, %3 : vector<48x1xf32>
    %5 = vector.broadcast %4 : vector<48x1xf32> to vector<48x128xf32>
    %6 = arith.subf %0, %5 : vector<48x128xf32>
    %7 = arith.mulf %6, %6 : vector<48x128xf32>
    %cst_2 = arith.constant dense<0.000000e+00> : vector<48xf32>
    %8 = vector.multi_reduction <add>, %7, %cst_2 [1] : vector<48x128xf32> to vector<48xf32>
    %9 = vector.shape_cast %8 : vector<48xf32> to vector<48x1xf32>
    %cst_3 = arith.constant 1.280000e+02 : f32
    %10 = vector.broadcast %cst_3 : f32 to vector<48x1xf32>
    %11 = arith.divf %9, %10 : vector<48x1xf32>
    %12 = vector.broadcast %4 : vector<48x1xf32> to vector<48x128xf32>
    %13 = arith.subf %0, %12 : vector<48x128xf32>
    %cst_4 = arith.constant 9.99999997E-7 : f32
    %14 = vector.broadcast %cst_4 : f32 to vector<48x1xf32>
    %15 = arith.addf %11, %14 : vector<48x1xf32>
    %16 = math.rsqrt %15 : vector<48x1xf32>
    %17 = vector.broadcast %16 : vector<48x1xf32> to vector<48x128xf32>
    %18 = arith.mulf %13, %17 : vector<48x128xf32>
    %c0_5 = arith.constant 0 : index
    %c0_6 = arith.constant 0 : index
    %19 = vector.load %arg3[%c0_5, %c0_6] : memref<1x128xf32, #tpu.memory_space<vmem>>, vector<1x128xf32>
    %20 = vector.broadcast %19 : vector<1x128xf32> to vector<48x128xf32>
    %21 = arith.mulf %18, %20 : vector<48x128xf32>
    %c0_7 = arith.constant 0 : index
    %c0_8 = arith.constant 0 : index
    %22 = vector.load %arg4[%c0_7, %c0_8] : memref<1x128xf32, #tpu.memory_space<vmem>>, vector<1x128xf32>
    %23 = vector.broadcast %22 : vector<1x128xf32> to vector<48x128xf32>
    %24 = arith.addf %21, %23 : vector<48x128xf32>
    %25 = arith.truncf %24 : vector<48x128xf32> to vector<48x128xbf16>
    %c0_9 = arith.constant 0 : index
    %c0_10 = arith.constant 0 : index
    %26 = vector.load %arg5[%c0_9, %c0_10] : memref<128x384xbf16, #tpu.memory_space<vmem>>, vector<128x384xbf16>
    %cst_11 = arith.constant dense<0.000000e+00> : vector<48x384xf32>
    %27 = tpu.matmul %25, %26, %cst_11 {dimension_numbers = #tpu.dot_dimension_numbers<[1], [0], [0], [1], [0, 0, 1, 1], [], []>} : vector<48x128xbf16>, vector<128x384xbf16>, vector<48x384xf32> -> vector<48x384xf32>
    %c0_12 = arith.constant 0 : index
    %c0_13 = arith.constant 0 : index
    %28 = vector.load %arg6[%c0_12, %c0_13] : memref<1x384xf32, #tpu.memory_space<vmem>>, vector<1x384xf32>
    %29 = vector.broadcast %28 : vector<1x384xf32> to vector<48x384xf32>
    %30 = arith.addf %27, %29 : vector<48x384xf32>
    %31 = arith.truncf %30 : vector<48x384xf32> to vector<48x384xbf16>
    %c0_14 = arith.constant 0 : index
    %c0_15 = arith.constant 0 : index
    %32 = vector.load %arg7[%c0_14, %c0_15] : memref<48x384xbf16, #tpu.memory_space<vmem>>, vector<48x384xbf16>
    tpu.vector_store %arg7[%c0_14, %c0_15], %31 {strides = array<i32>} : memref<48x384xbf16, #tpu.memory_space<vmem>>, vector<48x384xbf16>,
    return
  }
  func.func @transform_0(%arg0: i32, %arg1: i32) -> (i32, i32) {
    %c0_i32 = arith.constant 0 : i32
    %c0_i32_0 = arith.constant 0 : i32
    return %arg0, %c0_i32 : i32, i32
  }
  func.func @transform_1(%arg0: i32, %arg1: i32) -> (i32, i32) {
    %c0_i32 = arith.constant 0 : i32
    %c0_i32_0 = arith.constant 0 : i32
    %c0_i32_1 = arith.constant 0 : i32
    return %c0_i32, %c0_i32_0 : i32, i32
  }
  func.func @transform_2(%arg0: i32, %arg1: i32) -> (i32, i32) {
    %c0_i32 = arith.constant 0 : i32
    %c0_i32_0 = arith.constant 0 : i32
    %c0_i32_1 = arith.constant 0 : i32
    return %c0_i32, %c0_i32_0 : i32, i32
  }
  func.func @transform_3(%arg0: i32, %arg1: i32) -> (i32, i32) {
    %c0_i32 = arith.constant 0 : i32
    %c0_i32_0 = arith.constant 0 : i32
    return %c0_i32, %arg1 : i32, i32
  }
  func.func @transform_4(%arg0: i32, %arg1: i32) -> (i32, i32) {
    %c0_i32 = arith.constant 0 : i32
    %c0_i32_0 = arith.constant 0 : i32
    return %c0_i32, %arg1 : i32, i32
  }
  func.func @transform_5(%arg0: i32, %arg1: i32) -> (i32, i32) {
    %c0_i32 = arith.constant 0 : i32
    return %arg0, %arg1 : i32, i32
  }
}

module attributes {stable_mosaic.version = 11 : i64} {
  func.func @_fused_matmul_kernel(%arg0: i32, %arg1: i32, %arg2: memref<48x128xf32, #tpu.memory_space<vmem>>, %arg3: memref<1x128xf32, #tpu.memory_space<vmem>>, %arg4: memref<1x128xf32, #tpu.memory_space<vmem>>, %arg5: memref<128x256xbf16, #tpu.memory_space<vmem>>, %arg6: memref<1x256xf32, #tpu.memory_space<vmem>>, %arg7: memref<48x256xbf16, #tpu.memory_space<vmem>>) attributes {dimension_semantics = [#tpu.dimension_semantics<parallel>, #tpu.dimension_semantics<parallel>], iteration_bounds = array<i64: 1, 1>, scalar_prefetch = 0 : i64, scratch_operands = 0 : i64, tpu.core_type = #tpu.core_type<tc>, window_params = [{transform_indices = @transform_0, window_bounds = array<i64: 48, 128>}, {pipeline_mode = #tpu.pipeline_mode<synchronous>, transform_indices = @transform_1, window_bounds = array<i64: 1, 128>}, {pipeline_mode = #tpu.pipeline_mode<synchronous>, transform_indices = @transform_2, window_bounds = array<i64: 1, 128>}, {transform_indices = @transform_3, window_bounds = array<i64: 128, 256>}, {transform_indices = @transform_4, window_bounds = array<i64: 1, 256>}, {transform_indices = @transform_5, window_bounds = array<i64: 48, 256>}]} {
    %c0 = arith.constant 0 : index
    %c0_0 = arith.constant 0 : index
    %0 = vector.load %arg2[%c0, %c0_0] : memref<48x128xf32, #tpu.memory_space<vmem>>, vector<48x128xf32>
    %cst = arith.constant dense<0.000000e+00> : vector<48xf32>
    %1 = vector.multi_reduction <add>, %0, %cst [1] : vector<48x128xf32> to vector<48xf32>
    %2 = vector.shape_cast %1 : vector<48xf32> to vector<48x1xf32>
    %cst_1 = arith.constant 1.280000e+02 : f32
    %3 = vector.broadcast %cst_1 : f32 to vector<48x1xf32>
    %4 = arith.divf %2, %3 : vector<48x1xf32>
    %5 = vector.broadcast %4 : vector<48x1xf32> to vector<48x128xf32>
    %6 = arith.subf %0, %5 : vector<48x128xf32>
    %7 = arith.mulf %6, %6 : vector<48x128xf32>
    %cst_2 = arith.constant dense<0.000000e+00> : vector<48xf32>
    %8 = vector.multi_reduction <add>, %7, %cst_2 [1] : vector<48x128xf32> to vector<48xf32>
    %9 = vector.shape_cast %8 : vector<48xf32> to vector<48x1xf32>
    %cst_3 = arith.constant 1.280000e+02 : f32
    %10 = vector.broadcast %cst_3 : f32 to vector<48x1xf32>
    %11 = arith.divf %9, %10 : vector<48x1xf32>
    %12 = vector.broadcast %4 : vector<48x1xf32> to vector<48x128xf32>
    %13 = arith.subf %0, %12 : vector<48x128xf32>
    %cst_4 = arith.constant 9.99999997E-7 : f32
    %14 = vector.broadcast %cst_4 : f32 to vector<48x1xf32>
    %15 = arith.addf %11, %14 : vector<48x1xf32>
    %16 = math.rsqrt %15 : vector<48x1xf32>
    %17 = vector.broadcast %16 : vector<48x1xf32> to vector<48x128xf32>
    %18 = arith.mulf %13, %17 : vector<48x128xf32>
    %c0_5 = arith.constant 0 : index
    %c0_6 = arith.constant 0 : index
    %19 = vector.load %arg3[%c0_5, %c0_6] : memref<1x128xf32, #tpu.memory_space<vmem>>, vector<1x128xf32>
    %20 = vector.broadcast %19 : vector<1x128xf32> to vector<48x128xf32>
    %21 = arith.mulf %18, %20 : vector<48x128xf32>
    %c0_7 = arith.constant 0 : index
    %c0_8 = arith.constant 0 : index
    %22 = vector.load %arg4[%c0_7, %c0_8] : memref<1x128xf32, #tpu.memory_space<vmem>>, vector<1x128xf32>
    %23 = vector.broadcast %22 : vector<1x128xf32> to vector<48x128xf32>
    %24 = arith.addf %21, %23 : vector<48x128xf32>
    %25 = arith.truncf %24 : vector<48x128xf32> to vector<48x128xbf16>
    %c0_9 = arith.constant 0 : index
    %c0_10 = arith.constant 0 : index
    %26 = vector.load %arg5[%c0_9, %c0_10] : memref<128x256xbf16, #tpu.memory_space<vmem>>, vector<128x256xbf16>
    %cst_11 = arith.constant dense<0.000000e+00> : vector<48x256xf32>
    %27 = tpu.matmul %25, %26, %cst_11 {dimension_numbers = #tpu.dot_dimension_numbers<[1], [0], [0], [1], [0, 0, 1, 1], [], []>} : vector<48x128xbf16>, vector<128x256xbf16>, vector<48x256xf32> -> vector<48x256xf32>
    %c0_12 = arith.constant 0 : index
    %c0_13 = arith.constant 0 : index
    %28 = vector.load %arg6[%c0_12, %c0_13] : memref<1x256xf32, #tpu.memory_space<vmem>>, vector<1x256xf32>
    %29 = vector.broadcast %28 : vector<1x256xf32> to vector<48x256xf32>
    %30 = arith.addf %27, %29 : vector<48x256xf32>
    %31 = arith.mulf %30, %30 : vector<48x256xf32>
    %32 = arith.mulf %30, %31 : vector<48x256xf32>
    %cst_14 = arith.constant 4.471500e-02 : f32
    %33 = vector.broadcast %cst_14 : f32 to vector<48x256xf32>
    %34 = arith.mulf %33, %32 : vector<48x256xf32>
    %35 = arith.addf %30, %34 : vector<48x256xf32>
    %cst_15 = arith.constant 0.797884583 : f32
    %36 = vector.broadcast %cst_15 : f32 to vector<48x256xf32>
    %37 = arith.mulf %36, %35 : vector<48x256xf32>
    %38 = math.tanh %37 : vector<48x256xf32>
    %cst_16 = arith.constant 1.000000e+00 : f32
    %39 = vector.broadcast %cst_16 : f32 to vector<48x256xf32>
    %40 = arith.addf %39, %38 : vector<48x256xf32>
    %cst_17 = arith.constant 5.000000e-01 : f32
    %41 = vector.broadcast %cst_17 : f32 to vector<48x256xf32>
    %42 = arith.mulf %41, %40 : vector<48x256xf32>
    %43 = arith.mulf %30, %42 : vector<48x256xf32>
    %44 = arith.truncf %43 : vector<48x256xf32> to vector<48x256xbf16>
    %c0_18 = arith.constant 0 : index
    %c0_19 = arith.constant 0 : index
    %45 = vector.load %arg7[%c0_18, %c0_19] : memref<48x256xbf16, #tpu.memory_space<vmem>>, vector<48x256xbf16>
    tpu.vector_store %arg7[%c0_18, %c0_19], %44 {strides = array<i32>} : memref<48x256xbf16, #tpu.memory_space<vmem>>, vector<48x256xbf16>,
    return
  }
  func.func @transform_0(%arg0: i32, %arg1: i32) -> (i32, i32) {
    %c0_i32 = arith.constant 0 : i32
    %c0_i32_0 = arith.constant 0 : i32
    return %arg0, %c0_i32 : i32, i32
  }
  func.func @transform_1(%arg0: i32, %arg1: i32) -> (i32, i32) {
    %c0_i32 = arith.constant 0 : i32
    %c0_i32_0 = arith.constant 0 : i32
    %c0_i32_1 = arith.constant 0 : i32
    return %c0_i32, %c0_i32_0 : i32, i32
  }
  func.func @transform_2(%arg0: i32, %arg1: i32) -> (i32, i32) {
    %c0_i32 = arith.constant 0 : i32
    %c0_i32_0 = arith.constant 0 : i32
    %c0_i32_1 = arith.constant 0 : i32
    return %c0_i32, %c0_i32_0 : i32, i32
  }
  func.func @transform_3(%arg0: i32, %arg1: i32) -> (i32, i32) {
    %c0_i32 = arith.constant 0 : i32
    %c0_i32_0 = arith.constant 0 : i32
    return %c0_i32, %arg1 : i32, i32
  }
  func.func @transform_4(%arg0: i32, %arg1: i32) -> (i32, i32) {
    %c0_i32 = arith.constant 0 : i32
    %c0_i32_0 = arith.constant 0 : i32
    return %c0_i32, %arg1 : i32, i32
  }
  func.func @transform_5(%arg0: i32, %arg1: i32) -> (i32, i32) {
    %c0_i32 = arith.constant 0 : i32
    return %arg0, %arg1 : i32, i32
  }
}

module attributes {stable_mosaic.version = 11 : i64} {
  func.func @_fused_matmul_kernel(%arg0: i32, %arg1: i32, %arg2: memref<48x256xbf16, #tpu.memory_space<vmem>>, %arg3: memref<256x128xbf16, #tpu.memory_space<vmem>>, %arg4: memref<1x128xf32, #tpu.memory_space<vmem>>, %arg5: memref<48x128xf32, #tpu.memory_space<vmem>>, %arg6: memref<48x128xf32, #tpu.memory_space<vmem>>) attributes {dimension_semantics = [#tpu.dimension_semantics<parallel>, #tpu.dimension_semantics<parallel>], iteration_bounds = array<i64: 1, 1>, scalar_prefetch = 0 : i64, scratch_operands = 0 : i64, tpu.core_type = #tpu.core_type<tc>, window_params = [{transform_indices = @transform_0, window_bounds = array<i64: 48, 256>}, {transform_indices = @transform_1, window_bounds = array<i64: 256, 128>}, {transform_indices = @transform_2, window_bounds = array<i64: 1, 128>}, {transform_indices = @transform_3, window_bounds = array<i64: 48, 128>}, {transform_indices = @transform_4, window_bounds = array<i64: 48, 128>}]} {
    %c0 = arith.constant 0 : index
    %c0_0 = arith.constant 0 : index
    %0 = vector.load %arg2[%c0, %c0_0] : memref<48x256xbf16, #tpu.memory_space<vmem>>, vector<48x256xbf16>
    %c0_1 = arith.constant 0 : index
    %c0_2 = arith.constant 0 : index
    %1 = vector.load %arg3[%c0_1, %c0_2] : memref<256x128xbf16, #tpu.memory_space<vmem>>, vector<256x128xbf16>
    %cst = arith.constant dense<0.000000e+00> : vector<48x128xf32>
    %2 = tpu.matmul %0, %1, %cst {dimension_numbers = #tpu.dot_dimension_numbers<[1], [0], [0], [1], [0, 0, 1, 1], [], []>} : vector<48x256xbf16>, vector<256x128xbf16>, vector<48x128xf32> -> vector<48x128xf32>
    %c0_3 = arith.constant 0 : index
    %c0_4 = arith.constant 0 : index
    %3 = vector.load %arg4[%c0_3, %c0_4] : memref<1x128xf32, #tpu.memory_space<vmem>>, vector<1x128xf32>
    %4 = vector.broadcast %3 : vector<1x128xf32> to vector<48x128xf32>
    %5 = arith.addf %2, %4 : vector<48x128xf32>
    %c0_5 = arith.constant 0 : index
    %c0_6 = arith.constant 0 : index
    %6 = vector.load %arg5[%c0_5, %c0_6] : memref<48x128xf32, #tpu.memory_space<vmem>>, vector<48x128xf32>
    %7 = arith.addf %5, %6 : vector<48x128xf32>
    %c0_7 = arith.constant 0 : index
    %c0_8 = arith.constant 0 : index
    %8 = vector.load %arg6[%c0_7, %c0_8] : memref<48x128xf32, #tpu.memory_space<vmem>>, vector<48x128xf32>
    tpu.vector_store %arg6[%c0_7, %c0_8], %7 {strides = array<i32>} : memref<48x128xf32, #tpu.memory_space<vmem>>, vector<48x128xf32>,
    return
  }
  func.func @transform_0(%arg0: i32, %arg1: i32) -> (i32, i32) {
    %c0_i32 = arith.constant 0 : i32
    %c0_i32_0 = arith.constant 0 : i32
    return %arg0, %c0_i32 : i32, i32
  }
  func.func @transform_1(%arg0: i32, %arg1: i32) -> (i32, i32) {
    %c0_i32 = arith.constant 0 : i32
    %c0_i32_0 = arith.constant 0 : i32
    return %c0_i32, %arg1 : i32, i32
  }
  func.func @transform_2(%arg0: i32, %arg1: i32) -> (i32, i32) {
    %c0_i32 = arith.constant 0 : i32
    %c0_i32_0 = arith.constant 0 : i32
    return %c0_i32, %arg1 : i32, i32
  }
  func.func @transform_3(%arg0: i32, %arg1: i32) -> (i32, i32) {
    %c0_i32 = arith.constant 0 : i32
    return %arg0, %arg1 : i32, i32
  }
  func.func @transform_4(%arg0: i32, %arg1: i32) -> (i32, i32) {
    %c0_i32 = arith.constant 0 : i32
    return %arg0, %arg1 : i32, i32
  }
}

module attributes {stable_mosaic.version = 11 : i64} {
  func.func @_fused_matmul_kernel(%arg0: i32, %arg1: i32, %arg2: memref<32x128xf32, #tpu.memory_space<vmem>>, %arg3: memref<1x128xf32, #tpu.memory_space<vmem>>, %arg4: memref<1x128xf32, #tpu.memory_space<vmem>>, %arg5: memref<128x8xbf16, #tpu.memory_space<vmem>>, %arg6: memref<1x8xf32, #tpu.memory_space<vmem>>, %arg7: memref<32x8xf32, #tpu.memory_space<vmem>>) attributes {dimension_semantics = [#tpu.dimension_semantics<parallel>, #tpu.dimension_semantics<parallel>], iteration_bounds = array<i64: 1, 1>, scalar_prefetch = 0 : i64, scratch_operands = 0 : i64, tpu.core_type = #tpu.core_type<tc>, window_params = [{transform_indices = @transform_0, window_bounds = array<i64: 32, 128>}, {pipeline_mode = #tpu.pipeline_mode<synchronous>, transform_indices = @transform_1, window_bounds = array<i64: 1, 128>}, {pipeline_mode = #tpu.pipeline_mode<synchronous>, transform_indices = @transform_2, window_bounds = array<i64: 1, 128>}, {transform_indices = @transform_3, window_bounds = array<i64: 128, 8>}, {transform_indices = @transform_4, window_bounds = array<i64: 1, 8>}, {transform_indices = @transform_5, window_bounds = array<i64: 32, 8>}]} {
    %c0 = arith.constant 0 : index
    %c0_0 = arith.constant 0 : index
    %0 = vector.load %arg2[%c0, %c0_0] : memref<32x128xf32, #tpu.memory_space<vmem>>, vector<32x128xf32>
    %cst = arith.constant dense<0.000000e+00> : vector<32xf32>
    %1 = vector.multi_reduction <add>, %0, %cst [1] : vector<32x128xf32> to vector<32xf32>
    %2 = vector.shape_cast %1 : vector<32xf32> to vector<32x1xf32>
    %cst_1 = arith.constant 1.280000e+02 : f32
    %3 = vector.broadcast %cst_1 : f32 to vector<32x1xf32>
    %4 = arith.divf %2, %3 : vector<32x1xf32>
    %5 = vector.broadcast %4 : vector<32x1xf32> to vector<32x128xf32>
    %6 = arith.subf %0, %5 : vector<32x128xf32>
    %7 = arith.mulf %6, %6 : vector<32x128xf32>
    %cst_2 = arith.constant dense<0.000000e+00> : vector<32xf32>
    %8 = vector.multi_reduction <add>, %7, %cst_2 [1] : vector<32x128xf32> to vector<32xf32>
    %9 = vector.shape_cast %8 : vector<32xf32> to vector<32x1xf32>
    %cst_3 = arith.constant 1.280000e+02 : f32
    %10 = vector.broadcast %cst_3 : f32 to vector<32x1xf32>
    %11 = arith.divf %9, %10 : vector<32x1xf32>
    %12 = vector.broadcast %4 : vector<32x1xf32> to vector<32x128xf32>
    %13 = arith.subf %0, %12 : vector<32x128xf32>
    %cst_4 = arith.constant 9.99999997E-7 : f32
    %14 = vector.broadcast %cst_4 : f32 to vector<32x1xf32>
    %15 = arith.addf %11, %14 : vector<32x1xf32>
    %16 = math.rsqrt %15 : vector<32x1xf32>
    %17 = vector.broadcast %16 : vector<32x1xf32> to vector<32x128xf32>
    %18 = arith.mulf %13, %17 : vector<32x128xf32>
    %c0_5 = arith.constant 0 : index
    %c0_6 = arith.constant 0 : index
    %19 = vector.load %arg3[%c0_5, %c0_6] : memref<1x128xf32, #tpu.memory_space<vmem>>, vector<1x128xf32>
    %20 = vector.broadcast %19 : vector<1x128xf32> to vector<32x128xf32>
    %21 = arith.mulf %18, %20 : vector<32x128xf32>
    %c0_7 = arith.constant 0 : index
    %c0_8 = arith.constant 0 : index
    %22 = vector.load %arg4[%c0_7, %c0_8] : memref<1x128xf32, #tpu.memory_space<vmem>>, vector<1x128xf32>
    %23 = vector.broadcast %22 : vector<1x128xf32> to vector<32x128xf32>
    %24 = arith.addf %21, %23 : vector<32x128xf32>
    %25 = arith.truncf %24 : vector<32x128xf32> to vector<32x128xbf16>
    %c0_9 = arith.constant 0 : index
    %c0_10 = arith.constant 0 : index
    %26 = vector.load %arg5[%c0_9, %c0_10] : memref<128x8xbf16, #tpu.memory_space<vmem>>, vector<128x8xbf16>
    %cst_11 = arith.constant dense<0.000000e+00> : vector<32x8xf32>
    %27 = tpu.matmul %25, %26, %cst_11 {dimension_numbers = #tpu.dot_dimension_numbers<[1], [0], [0], [1], [0, 0, 1, 1], [], []>} : vector<32x128xbf16>, vector<128x8xbf16>, vector<32x8xf32> -> vector<32x8xf32>
    %c0_12 = arith.constant 0 : index
    %c0_13 = arith.constant 0 : index
    %28 = vector.load %arg6[%c0_12, %c0_13] : memref<1x8xf32, #tpu.memory_space<vmem>>, vector<1x8xf32>
    %29 = vector.broadcast %28 : vector<1x8xf32> to vector<32x8xf32>
    %30 = arith.addf %27, %29 : vector<32x8xf32>
    %c0_14 = arith.constant 0 : index
    %c0_15 = arith.constant 0 : index
    %31 = vector.load %arg7[%c0_14, %c0_15] : memref<32x8xf32, #tpu.memory_space<vmem>>, vector<32x8xf32>
    tpu.vector_store %arg7[%c0_14, %c0_15], %30 {strides = array<i32>} : memref<32x8xf32, #tpu.memory_space<vmem>>, vector<32x8xf32>,
    return
  }
  func.func @transform_0(%arg0: i32, %arg1: i32) -> (i32, i32) {
    %c0_i32 = arith.constant 0 : i32
    %c0_i32_0 = arith.constant 0 : i32
    return %arg0, %c0_i32 : i32, i32
  }
  func.func @transform_1(%arg0: i32, %arg1: i32) -> (i32, i32) {
    %c0_i32 = arith.constant 0 : i32
    %c0_i32_0 = arith.constant 0 : i32
    %c0_i32_1 = arith.constant 0 : i32
    return %c0_i32, %c0_i32_0 : i32, i32
  }
  func.func @transform_2(%arg0: i32, %arg1: i32) -> (i32, i32) {
    %c0_i32 = arith.constant 0 : i32
    %c0_i32_0 = arith.constant 0 : i32
    %c0_i32_1 = arith.constant 0 : i32
    return %c0_i32, %c0_i32_0 : i32, i32
  }
  func.func @transform_3(%arg0: i32, %arg1: i32) -> (i32, i32) {
    %c0_i32 = arith.constant 0 : i32
    %c0_i32_0 = arith.constant 0 : i32
    return %c0_i32, %arg1 : i32, i32
  }
  func.func @transform_4(%arg0: i32, %arg1: i32) -> (i32, i32) {
    %c0_i32 = arith.constant 0 : i32
    %c0_i32_0 = arith.constant 0 : i32
    return %c0_i32, %arg1 : i32, i32
  }
  func.func @transform_5(%arg0: i32, %arg1: i32) -> (i32, i32) {
    %c0_i32 = arith.constant 0 : i32
    return %arg0, %arg1 : i32, i32
  }
}

module attributes {stable_mosaic.version = 11 : i64} {
  func.func @_bilinear_kernel(%arg0: i32, %arg1: memref<1x4x4xf32, #tpu.memory_space<vmem>>, %arg2: memref<16x4xf32, #tpu.memory_space<vmem>>, %arg3: memref<16x4xf32, #tpu.memory_space<vmem>>, %arg4: memref<1x16x16xf32, #tpu.memory_space<vmem>>) attributes {dimension_semantics = [#tpu.dimension_semantics<parallel>], iteration_bounds = array<i64: 16>, scalar_prefetch = 0 : i64, scratch_operands = 0 : i64, tpu.core_type = #tpu.core_type<tc>, window_params = [{transform_indices = @transform_0, window_bounds = array<i64: 1, 4, 4>}, {pipeline_mode = #tpu.pipeline_mode<synchronous>, transform_indices = @transform_1, window_bounds = array<i64: 16, 4>}, {pipeline_mode = #tpu.pipeline_mode<synchronous>, transform_indices = @transform_2, window_bounds = array<i64: 16, 4>}, {transform_indices = @transform_3, window_bounds = array<i64: 1, 16, 16>}]} {
    %c0 = arith.constant 0 : index
    %c0_0 = arith.constant 0 : index
    %c0_1 = arith.constant 0 : index
    %0 = vector.load %arg1[%c0, %c0_0, %c0_1] : memref<1x4x4xf32, #tpu.memory_space<vmem>>, vector<1x4x4xf32>
    %1 = vector.shape_cast %0 : vector<1x4x4xf32> to vector<4x4xf32>
    %c0_2 = arith.constant 0 : index
    %c0_3 = arith.constant 0 : index
    %2 = vector.load %arg2[%c0_2, %c0_3] : memref<16x4xf32, #tpu.memory_space<vmem>>, vector<16x4xf32>
    %cst = arith.constant dense<0.000000e+00> : vector<16x4xf32>
    %3 = tpu.matmul %2, %1, %cst {dimension_numbers = #tpu.dot_dimension_numbers<[1], [0], [0], [1], [0, 0, 1, 1], [], []>} : vector<16x4xf32>, vector<4x4xf32>, vector<16x4xf32> -> vector<16x4xf32>
    %c0_4 = arith.constant 0 : index
    %c0_5 = arith.constant 0 : index
    %4 = vector.load %arg3[%c0_4, %c0_5] : memref<16x4xf32, #tpu.memory_space<vmem>>, vector<16x4xf32>
    %cst_6 = arith.constant dense<0.000000e+00> : vector<16x16xf32>
    %5 = tpu.matmul %3, %4, %cst_6 {dimension_numbers = #tpu.dot_dimension_numbers<[1], [1], [0], [0], [0, 0, 1, 0], [], []>} : vector<16x4xf32>, vector<16x4xf32>, vector<16x16xf32> -> vector<16x16xf32>
    %c0_7 = arith.constant 0 : index
    %c0_8 = arith.constant 0 : index
    %c0_9 = arith.constant 0 : index
    %6 = vector.load %arg4[%c0_7, %c0_8, %c0_9] : memref<1x16x16xf32, #tpu.memory_space<vmem>>, vector<1x16x16xf32>
    %7 = vector.shape_cast %6 : vector<1x16x16xf32> to vector<16x16xf32>
    %8 = vector.shape_cast %5 : vector<16x16xf32> to vector<1x16x16xf32>
    tpu.vector_store %arg4[%c0_7, %c0_8, %c0_9], %8 {strides = array<i32>} : memref<1x16x16xf32, #tpu.memory_space<vmem>>, vector<1x16x16xf32>,
    return
  }
  func.func @transform_0(%arg0: i32) -> (i32, i32, i32) {
    %c0_i32 = arith.constant 0 : i32
    %c0_i32_0 = arith.constant 0 : i32
    %c0_i32_1 = arith.constant 0 : i32
    return %arg0, %c0_i32, %c0_i32_0 : i32, i32, i32
  }
  func.func @transform_1(%arg0: i32) -> (i32, i32) {
    %c0_i32 = arith.constant 0 : i32
    %c0_i32_0 = arith.constant 0 : i32
    %c0_i32_1 = arith.constant 0 : i32
    return %c0_i32, %c0_i32_0 : i32, i32
  }
  func.func @transform_2(%arg0: i32) -> (i32, i32) {
    %c0_i32 = arith.constant 0 : i32
    %c0_i32_0 = arith.constant 0 : i32
    %c0_i32_1 = arith.constant 0 : i32
    return %c0_i32, %c0_i32_0 : i32, i32
  }
  func.func @transform_3(%arg0: i32) -> (i32, i32, i32) {
    %c0_i32 = arith.constant 0 : i32
    %c0_i32_0 = arith.constant 0 : i32
    %c0_i32_1 = arith.constant 0 : i32
    return %arg0, %c0_i32, %c0_i32_0 : i32, i32, i32
  }
}

</mosaic_0001>

<llo_original>
// kernel: dino_v2_encoder_lora_forward.13
$region0: #{dino_v2_encoder_lora_forward.13}
  #allocation0 [shape = 'u32[]', space=smem, size = 0x4, offset = 0x4, fixed_abs, tag = 'smem constant byte address 0x4 - core index']
  #allocation1 [shape = 'u32[144,128]{1,0:T(1,128)}', space=vmem, size = 0x12000, scoped, tag = 'internal scratch']
  %s0 = inlined_call_operand.vmem [shape: f32[32,48], index: 0, kind: input, shape index: {}]
  %s1 = inlined_call_operand.vmem [shape: bf16[48,128], index: 1, kind: input, shape index: {}]
  %s2 = inlined_call_operand.vmem [shape: f32[1,128], index: 2, kind: input, shape index: {}]
  %s3 = inlined_call_operand.vmem [shape: f32[32,128], index: 3, kind: output, shape index: {}]
  %s4 = sld [smem:[#allocation0]]
  $region22: #{dino_v2_encoder_lora_forward.13} parent=0
    _
  %s6 = ssub.s32 1, %s4
  %s7 = scalar_select 0, %s6, %s4
  // Predicated region
  $region2: #{dino_v2_encoder_lora_forward.13} parent=0 // pred_check
    _
  $region3: #{dino_v2_encoder_lora_forward.13} parent=0 // pred_check_branch
    %9 = sbr.rel (0) target = $region5
  $region4: #{dino_v2_encoder_lora_forward.13} parent=0 // pred_region
    _
  $region5: #{dino_v2_encoder_lora_forward.13} parent=0 // pred_fallthru
    _
  // Predicated region
  $region6: #{dino_v2_encoder_lora_forward.13} parent=0 // pred_check
    _
  $region7: #{dino_v2_encoder_lora_forward.13} parent=0 // pred_check_branch
    %11 = sbr.rel (0) target = $region9
  $region8: #{dino_v2_encoder_lora_forward.13} parent=0 // pred_region
    _
  $region9: #{dino_v2_encoder_lora_forward.13} parent=0 // pred_fallthru
    _
  // Predicated region
  $region10: #{dino_v2_encoder_lora_forward.13} parent=0 // pred_check
    _
  $region11: #{dino_v2_encoder_lora_forward.13} parent=0 // pred_check_branch
    %13 = sbr.rel (0) target = $region13
  $region12: #{dino_v2_encoder_lora_forward.13} parent=0 // pred_region
    _
  $region13: #{dino_v2_encoder_lora_forward.13} parent=0 // pred_fallthru
    _
  %v15 = vld [vmem:[%s0] sm:$0xff]
  %v16 = vld [vmem:[%s0 + $0x8] sm:$0xff]
  %v17 = vld [vmem:[%s0 + $0x10] sm:$0xff]
  %v18 = vld [vmem:[%s0 + $0x18] sm:$0xff]
  %v19 = vpack.c.bf16 %v16, %v15
  %v20 = vpack.c.bf16 %v18, %v17
  %v21 = vld [vmem:[%s1] sm:$0xf]
  %v22 = vld [vmem:[%s1 + $0x4] sm:$0xf]
  %v23 = vld [vmem:[%s1 + $0x8] sm:$0xf]
  %v24 = vld [vmem:[%s1 + $0xc] sm:$0xf]
  %v25 = vld [vmem:[%s1 + $0x10] sm:$0xf]
  %v26 = vld [vmem:[%s1 + $0x14] sm:$0xf]
  %v27 = vld [vmem:[%s2] sm:$0x1]
  %v29 = vlaneseq
  %v30 = vshrl.u32 %v29, 7
  %v31 = vsub.s32 0, %v30
  %v32 = vrot.slane %v27, %v31
  %v40 = vunpack.c.l.b16 %v21
  %v41 = vunpack.c.l.b16 %v22
  %v42 = vunpack.c.l.b16 %v23
  %v43 = vunpack.c.l.b16 %v24
  %v44 = vunpack.c.l.b16 %v25
  %v45 = vunpack.c.l.b16 %v26
  %v46 = vpack.c.b16 %v41, %v40
  %v47 = vpack.c.b16 %v43, %v42
  %v48 = vpack.c.b16 %v45, %v44
  %vm52 = vcmask 392192
  %v54 = vsel %vm52, %v19, 0
  %v57 = vsel %vm52, %v20, 0
  %59 = vmatprep.subr.bf16.mxu0 0
  %60 = vmatpush1.bf16.msra.mxu0 %v46
  %61 = vmatprep.subr.bf16.mxu0 0
  %62 = vmatpush1.bf16.msra.mxu0 %v47
  %63 = vmatprep.subr.bf16.mxu0 0
  %64 = vmatpush1.bf16.msra.mxu0 %v48
  %65 = vmatprep.subr.bf16.mxu0 0
  %66 = vmatpush1.bf16.msra.mxu0 0
  %67 = vmatprep.subr.bf16.mxu0 0
  %68 = vmatpush1.bf16.msra.mxu0 0
  %69 = vmatprep.subr.bf16.mxu0 0
  %70 = vmatpush1.bf16.msra.mxu0 0
  %71 = vmatprep.subr.bf16.mxu0 0
  %72 = vmatpush1.bf16.msra.mxu0 0
  %73 = vmatprep.subr.bf16.mxu0 0
  %74 = vmatpush1.bf16.msra.mxu0 0
  %75 = vmatprep.subr.bf16.mxu0 0
  %76 = vmatpush1.bf16.msra.mxu0 0
  %77 = vmatprep.subr.bf16.mxu0 0
  %78 = vmatpush1.bf16.msra.mxu0 0
  %79 = vmatprep.subr.bf16.mxu0 0
  %80 = vmatpush1.bf16.msra.mxu0 0
  %81 = vmatprep.subr.bf16.mxu0 0
  %82 = vmatpush1.bf16.msra.mxu0 0
  %83 = vmatprep.subr.bf16.mxu0 0
  %84 = vmatpush1.bf16.msra.mxu0 0
  %85 = vmatprep.subr.bf16.mxu0 0
  %86 = vmatpush1.bf16.msra.mxu0 0
  %87 = vmatprep.subr.bf16.mxu0 0
  %88 = vmatpush1.bf16.msra.mxu0 0
  %89 = vmatprep.subr.bf16.mxu0 0
  %90 = vmatpush1.bf16.msra.mxu0 0
  %91 = vmatprep.mubr.bf16.mxu0 0
  %92 = vmatmul.mubr.bf16.gmra.mrb[0].mxu0 %v54
  %v93 = vpop.f32.mrb[0].mxu0
  %v94 = vadd.f32 %v32, %v93
  %v95 = vpop.f32.mrb[0].mxu0
  %v96 = vpop.f32.mrb[0].mxu0
  %v97 = vadd.f32 %v32, %v96
  %v98 = vpop.f32.mrb[0].mxu0
  %99 = vmatprep.mubr.bf16.mxu0 0
  %100 = vmatmul.mubr.bf16.gmra.mrb[0].mxu0 %v57
  %v101 = vpop.f32.mrb[0].mxu0
  %v102 = vadd.f32 %v32, %v101
  %v103 = vpop.f32.mrb[0].mxu0
  %v104 = vpop.f32.mrb[0].mxu0
  %v105 = vadd.f32 %v32, %v104
  %v106 = vpop.f32.mrb[0].mxu0
  %107 = vdwg.mxu0
  %108 = vst [vmem:[%s3] sm:$0xff] %v94
  %109 = vst [vmem:[%s3 + $0x8] sm:$0xff] %v97
  %110 = vst [vmem:[%s3 + $0x10] sm:$0xff] %v102
  %111 = vst [vmem:[%s3 + $0x18] sm:$0xff] %v105
  // Predicated region
  $region14: #{dino_v2_encoder_lora_forward.13} parent=0 // pred_check
    _
  $region15: #{dino_v2_encoder_lora_forward.13} parent=0 // pred_check_branch
    %113 = sbr.rel (0) target = $region17
  $region16: #{dino_v2_encoder_lora_forward.13} parent=0 // pred_region
    _
  $region17: #{dino_v2_encoder_lora_forward.13} parent=0 // pred_fallthru
    _
  // Predicated region
  $region18: #{dino_v2_encoder_lora_forward.13} parent=0 // pred_check
    _
  $region19: #{dino_v2_encoder_lora_forward.13} parent=0 // pred_check_branch
    %115 = sbr.rel (0) target = $region21
  $region20: #{dino_v2_encoder_lora_forward.13} parent=0 // pred_region
    _
  $region21: #{dino_v2_encoder_lora_forward.13} parent=0 // pred_fallthru
    _

// kernel: dino_v2_encoder_lora_forward.16
$region0: #{dino_v2_encoder_lora_forward.16}
  #allocation0 [shape = 'u32[]', space=smem, size = 0x4, offset = 0x4, fixed_abs, tag = 'smem constant byte address 0x4 - core index']
  #allocation1 [shape = 'u32[144,128]{1,0:T(1,128)}', space=vmem, size = 0x12000, scoped, tag = 'internal scratch']
  %s0 = inlined_call_operand.vmem [shape: bf16[48,128], index: 0, kind: input, shape index: {}]
  %s1 = inlined_call_operand.vmem [shape: bf16[128,128], index: 1, kind: input, shape index: {}]
  %s2 = inlined_call_operand.vmem [shape: f32[1,128], index: 2, kind: input, shape index: {}]
  %s3 = inlined_call_operand.vmem [shape: f32[48,128], index: 3, kind: input, shape index: {}]
  %s4 = inlined_call_operand.vmem [shape: f32[48,128], index: 4, kind: output, shape index: {}]
  %s5 = sld [smem:[#allocation0]]
  $region26: #{dino_v2_encoder_lora_forward.16} parent=0
    _
  %s7 = ssub.s32 1, %s5
  %s8 = scalar_select 0, %s7, %s5
  // Predicated region
  $region2: #{dino_v2_encoder_lora_forward.16} parent=0 // pred_check
    _
  $region3: #{dino_v2_encoder_lora_forward.16} parent=0 // pred_check_branch
    %10 = sbr.rel (0) target = $region5
  $region4: #{dino_v2_encoder_lora_forward.16} parent=0 // pred_region
    _
  $region5: #{dino_v2_encoder_lora_forward.16} parent=0 // pred_fallthru
    _
  // Predicated region
  $region6: #{dino_v2_encoder_lora_forward.16} parent=0 // pred_check
    _
  $region7: #{dino_v2_encoder_lora_forward.16} parent=0 // pred_check_branch
    %12 = sbr.rel (0) target = $region9
  $region8: #{dino_v2_encoder_lora_forward.16} parent=0 // pred_region
    _
  $region9: #{dino_v2_encoder_lora_forward.16} parent=0 // pred_fallthru
    _
  // Predicated region
  $region10: #{dino_v2_encoder_lora_forward.16} parent=0 // pred_check
    _
  $region11: #{dino_v2_encoder_lora_forward.16} parent=0 // pred_check_branch
    %14 = sbr.rel (0) target = $region13
  $region12: #{dino_v2_encoder_lora_forward.16} parent=0 // pred_region
    _
  $region13: #{dino_v2_encoder_lora_forward.16} parent=0 // pred_fallthru
    _
  // Predicated region
  $region14: #{dino_v2_encoder_lora_forward.16} parent=0 // pred_check
    _
  $region15: #{dino_v2_encoder_lora_forward.16} parent=0 // pred_check_branch
    %16 = sbr.rel (0) target = $region17
  $region16: #{dino_v2_encoder_lora_forward.16} parent=0 // pred_region
    _
  $region17: #{dino_v2_encoder_lora_forward.16} parent=0 // pred_fallthru
    _
  %v18 = vld [vmem:[%s0] sm:$0xf]
  %v19 = vld [vmem:[%s0 + $0x4] sm:$0xf]
  %v20 = vld [vmem:[%s0 + $0x8] sm:$0xf]
  %v21 = vld [vmem:[%s0 + $0xc] sm:$0xf]
  %v22 = vld [vmem:[%s0 + $0x10] sm:$0xf]
  %v23 = vld [vmem:[%s0 + $0x14] sm:$0xf]
  %v24 = vld [vmem:[%s1] sm:$0xf]
  %v25 = vld [vmem:[%s1 + $0x4] sm:$0xf]
  %v26 = vld [vmem:[%s1 + $0x8] sm:$0xf]
  %v27 = vld [vmem:[%s1 + $0xc] sm:$0xf]
  %v28 = vld [vmem:[%s1 + $0x10] sm:$0xf]
  %v29 = vld [vmem:[%s1 + $0x14] sm:$0xf]
  %v30 = vld [vmem:[%s1 + $0x18] sm:$0xf]
  %v31 = vld [vmem:[%s1 + $0x1c] sm:$0xf]
  %v32 = vld [vmem:[%s1 + $0x20] sm:$0xf]
  %v33 = vld [vmem:[%s1 + $0x24] sm:$0xf]
  %v34 = vld [vmem:[%s1 + $0x28] sm:$0xf]
  %v35 = vld [vmem:[%s1 + $0x2c] sm:$0xf]
  %v36 = vld [vmem:[%s1 + $0x30] sm:$0xf]
  %v37 = vld [vmem:[%s1 + $0x34] sm:$0xf]
  %v38 = vld [vmem:[%s1 + $0x38] sm:$0xf]
  %v39 = vld [vmem:[%s1 + $0x3c] sm:$0xf]
  %v40 = vld [vmem:[%s2] sm:$0x1]
  %v42 = vlaneseq
  %v43 = vshrl.u32 %v42, 7
  %v44 = vsub.s32 0, %v43
  %v45 = vrot.slane %v40, %v44
  %v53 = vunpack.c.l.b16 %v18
  %v54 = vunpack.c.l.b16 %v19
  %v55 = vunpack.c.l.b16 %v20
  %v56 = vunpack.c.l.b16 %v21
  %v57 = vunpack.c.l.b16 %v22
  %v58 = vunpack.c.l.b16 %v23
  %v59 = vpack.c.b16 %v54, %v53
  %v60 = vpack.c.b16 %v56, %v55
  %v61 = vpack.c.b16 %v58, %v57
  %v81 = vunpack.c.l.b16 %v24
  %v82 = vunpack.c.l.b16 %v25
  %v83 = vunpack.c.l.b16 %v26
  %v84 = vunpack.c.l.b16 %v27
  %v85 = vunpack.c.l.b16 %v28
  %v86 = vunpack.c.l.b16 %v29
  %v87 = vunpack.c.l.b16 %v30
  %v88 = vunpack.c.l.b16 %v31
  %v89 = vunpack.c.l.b16 %v32
  %v90 = vunpack.c.l.b16 %v33
  %v91 = vunpack.c.l.b16 %v34
  %v92 = vunpack.c.l.b16 %v35
  %v93 = vunpack.c.l.b16 %v36
  %v94 = vunpack.c.l.b16 %v37
  %v95 = vunpack.c.l.b16 %v38
  %v96 = vunpack.c.l.b16 %v39
  %v97 = vpack.c.b16 %v82, %v81
  %v98 = vpack.c.b16 %v84, %v83
  %v99 = vpack.c.b16 %v86, %v85
  %v100 = vpack.c.b16 %v88, %v87
  %v101 = vpack.c.b16 %v90, %v89
  %v102 = vpack.c.b16 %v92, %v91
  %v103 = vpack.c.b16 %v94, %v93
  %v104 = vpack.c.b16 %v96, %v95
  %113 = vmatprep.subr.bf16.mxu0 0
  %114 = vmatpush1.bf16.msra.mxu0 %v97
  %115 = vmatprep.subr.bf16.mxu0 0
  %116 = vmatpush1.bf16.msra.mxu0 %v98
  %117 = vmatprep.subr.bf16.mxu0 0
  %118 = vmatpush1.bf16.msra.mxu0 %v99
  %119 = vmatprep.subr.bf16.mxu0 0
  %120 = vmatpush1.bf16.msra.mxu0 %v100
  %121 = vmatprep.subr.bf16.mxu0 0
  %122 = vmatpush1.bf16.msra.mxu0 %v101
  %123 = vmatprep.subr.bf16.mxu0 0
  %124 = vmatpush1.bf16.msra.mxu0 %v102
  %125 = vmatprep.subr.bf16.mxu0 0
  %126 = vmatpush1.bf16.msra.mxu0 %v103
  %127 = vmatprep.subr.bf16.mxu0 0
  %128 = vmatpush1.bf16.msra.mxu0 %v104
  %129 = vmatprep.subr.bf16.mxu0 0
  %130 = vmatpush1.bf16.msra.mxu0 0
  %131 = vmatprep.subr.bf16.mxu0 0
  %132 = vmatpush1.bf16.msra.mxu0 0
  %133 = vmatprep.subr.bf16.mxu0 0
  %134 = vmatpush1.bf16.msra.mxu0 0
  %135 = vmatprep.subr.bf16.mxu0 0
  %136 = vmatpush1.bf16.msra.mxu0 0
  %137 = vmatprep.subr.bf16.mxu0 0
  %138 = vmatpush1.bf16.msra.mxu0 0
  %139 = vmatprep.subr.bf16.mxu0 0
  %140 = vmatpush1.bf16.msra.mxu0 0
  %141 = vmatprep.subr.bf16.mxu0 0
  %142 = vmatpush1.bf16.msra.mxu0 0
  %143 = vmatprep.subr.bf16.mxu0 0
  %144 = vmatpush1.bf16.msra.mxu0 0
  %145 = vmatprep.mubr.bf16.mxu0 0
  %146 = vmatmul.mubr.bf16.gmra.mrb[0].mxu0 %v59
  %v147 = vpop.f32.mrb[0].mxu0
  %v148 = vadd.f32 %v45, %v147
  %v149 = vpop.f32.mrb[0].mxu0
  %v150 = vpop.f32.mrb[0].mxu0
  %v151 = vadd.f32 %v45, %v150
  %v152 = vpop.f32.mrb[0].mxu0
  %153 = vmatprep.mubr.bf16.mxu0 0
  %154 = vmatmul.mubr.bf16.gmra.mrb[0].mxu0 %v60
  %v155 = vpop.f32.mrb[0].mxu0
  %v156 = vadd.f32 %v45, %v155
  %v157 = vpop.f32.mrb[0].mxu0
  %v158 = vpop.f32.mrb[0].mxu0
  %v159 = vadd.f32 %v45, %v158
  %v160 = vpop.f32.mrb[0].mxu0
  %161 = vmatprep.mubr.bf16.mxu0 0
  %162 = vmatmul.mubr.bf16.gmra.mrb[0].mxu0 %v61
  %v163 = vpop.f32.mrb[0].mxu0
  %v164 = vadd.f32 %v45, %v163
  %v165 = vpop.f32.mrb[0].mxu0
  %v166 = vpop.f32.mrb[0].mxu0
  %v167 = vadd.f32 %v45, %v166
  %v168 = vpop.f32.mrb[0].mxu0
  %169 = vdwg.mxu0
  %v170 = vld [vmem:[%s3] sm:$0xff]
  %v171 = vld [vmem:[%s3 + $0x8] sm:$0xff]
  %v172 = vld [vmem:[%s3 + $0x10] sm:$0xff]
  %v173 = vld [vmem:[%s3 + $0x18] sm:$0xff]
  %v174 = vld [vmem:[%s3 + $0x20] sm:$0xff]
  %v175 = vld [vmem:[%s3 + $0x28] sm:$0xff]
  %v176 = vadd.f32 %v148, %v170
  %v177 = vadd.f32 %v151, %v171
  %v178 = vadd.f32 %v156, %v172
  %v179 = vadd.f32 %v159, %v173
  %v180 = vadd.f32 %v164, %v174
  %v181 = vadd.f32 %v167, %v175
  %182 = vst [vmem:[%s4] sm:$0xff] %v176
  %183 = vst [vmem:[%s4 + $0x8] sm:$0xff] %v177
  %184 = vst [vmem:[%s4 + $0x10] sm:$0xff] %v178
  %185 = vst [vmem:[%s4 + $0x18] sm:$0xff] %v179
  %186 = vst [vmem:[%s4 + $0x20] sm:$0xff] %v180
  %187 = vst [vmem:[%s4 + $0x28] sm:$0xff] %v181
  // Predicated region
  $region18: #{dino_v2_encoder_lora_forward.16} parent=0 // pred_check
    _
  $region19: #{dino_v2_encoder_lora_forward.16} parent=0 // pred_check_branch
    %189 = sbr.rel (0) target = $region21
  $region20: #{dino_v2_encoder_lora_forward.16} parent=0 // pred_region
    _
  $region21: #{dino_v2_encoder_lora_forward.16} parent=0 // pred_fallthru
    _
  // Predicated region
  $region22: #{dino_v2_encoder_lora_forward.16} parent=0 // pred_check
    _
  $region23: #{dino_v2_encoder_lora_forward.16} parent=0 // pred_check_branch
    %191 = sbr.rel (0) target = $region25
  $region24: #{dino_v2_encoder_lora_forward.16} parent=0 // pred_region
    _
  $region25: #{dino_v2_encoder_lora_forward.16} parent=0 // pred_fallthru
    _

// kernel: dino_v2_encoder_lora_forward.15
$region0: #{dino_v2_encoder_lora_forward.15}
  #allocation0 [shape = 'u32[]', space=smem, size = 0x4, offset = 0x4, fixed_abs, tag = 'smem constant byte address 0x4 - core index']
  #allocation1 [shape = 'u32[144,128]{1,0:T(1,128)}', space=vmem, size = 0x12000, scoped, tag = 'internal scratch']
  %s0 = inlined_call_operand.vmem [shape: bf16[2,24,384], index: 0, kind: input, shape index: {}, may-alias: {0,1,2}]
  %s1 = inlined_call_operand.vmem [shape: bf16[2,24,384], index: 1, kind: input, shape index: {}, may-alias: {0,1,2}]
  %s2 = inlined_call_operand.vmem [shape: bf16[2,24,384], index: 2, kind: input, shape index: {}, may-alias: {0,1,2}]
  %s3 = inlined_call_operand.vmem [shape: bf16[2,24,128], index: 3, kind: output, shape index: {}]
  %s4 = sld [smem:[#allocation0]]
  $region168: #{dino_v2_encoder_lora_forward.15} parent=0
    _
  %s6 = ssub.s32 1, %s4
  %s7 = scalar_select 0, %s6, %s4
  $region1: #{dino_v2_encoder_lora_forward.15} parent=0
    #allocation2 [shape = 'u8[12288]{0}', space=vmem, size = 0x3000, scoped, tag = 'input window, operand 0']
    #allocation3 [shape = 'u8[12288]{0}', space=vmem, size = 0x3000, scoped, tag = 'input window, operand 1']
    #allocation4 [shape = 'u8[12288]{0}', space=vmem, size = 0x3000, scoped, tag = 'input window, operand 2']
    loop: start=0, step=1, limit=4
    $region2: #{dino_v2_encoder_lora_forward.15} parent=1 // loop_pre_header
      _
    $region3: #{dino_v2_encoder_lora_forward.15} parent=1 // loop_header
      %s9 = sphi 0, %s13
      %p10 = scmp.ge.s32.totalorder %s9, 4
      %s16 = sphi 0, %s28
      %s17 = sphi 0, %s24
      %s18 = sphi 0, %s16
      %s19 = sphi 0, %s17
      %s20 = sphi 0, %s18
      %s21 = sphi 0, %s19
      %s33 = sphi 0, %s35
      %s36 = sphi 0, %s33
      %s37 = sphi 0, %s36
      %s53 = sphi 0, %s37
      %s63 = sphi 0, %s65
      %s66 = sphi 0, %s63
      %s67 = sphi 0, %s66
      %s83 = sphi 0, %s67
      %s93 = sphi 0, %s95
      %s96 = sphi 0, %s93
      %s97 = sphi 0, %s96
      %s113 = sphi 0, %s97
      %s121 = sphi 0, %s123
      %s124 = sphi 0, %s121
      %s125 = sphi 0, %s124
      %s141 = sphi 0, %s125
    $region4: #{dino_v2_encoder_lora_forward.15} parent=1 // loop_header_branch
      %12 = sbr.rel (%p10) target = $region8
    $region5: #{dino_v2_encoder_lora_forward.15} parent=1 // loop_body
      %s14 = ssub.s32 %s9, 1
      %s15 = ssub.s32 %s9, 2
      %s22 = sadd.s32 1, %s17
      %p23 = scmp.ge.s32.totalorder %s22, 1
      %s24 = scalar_select %p23, 0, %s22
      %s25 = sadd.s32 1, %s16
      %s26 = scalar_select %p23, %s25, %s16
      %p27 = scmp.ge.s32.totalorder %s26, 2
      %s28 = scalar_select %p27, 0, %s26
      %s29 = ssub.s32 %s16, %s28
      %s30 = ssub.s32 %s17, %s24
      %s31 = sor.u32 %s29, %s30
      %p32 = scmp.eq.s32.totalorder %s31, 0
      %s34 = sadd.s32 %s33, 1
      %s35 = scalar_select %p32, %s33, %s34
      %p38 = pneg %p32
      %p39 = scmp.eq.s32.totalorder %s9, 1
      %p40 = por %p38, %p39
      %p41 = scmp.ne.s32.totalorder %s33, %s36
      %p42 = scmp.eq.s32.totalorder %s9, 0
      %p43 = por %p41, %p42
      %p44 = scmp.ne.s32.totalorder %s33, %s36
      %p45 = scmp.eq.s32.totalorder %s14, 1
      %p46 = por %p44, %p45
      %p47 = scmp.ne.s32.totalorder %s36, %s37
      %p48 = scmp.eq.s32.totalorder %s14, 0
      %p49 = por %p47, %p48
      %p50 = scmp.ne.s32.totalorder %s36, %s37
      %p51 = scmp.eq.s32.totalorder %s15, 1
      %p52 = por %p50, %p51
      %p54 = scmp.ne.s32.totalorder %s37, %s53
      %p55 = scmp.eq.s32.totalorder %s15, 0
      %p56 = por %p54, %p55
      %s57 = sadd.s32 %s17, 1
      %s58 = sadd.s32 %s24, 1
      %s59 = ssub.s32 %s16, %s28
      %s60 = ssub.s32 %s57, %s58
      %s61 = sor.u32 %s59, %s60
      %p62 = scmp.eq.s32.totalorder %s61, 0
      %s64 = sadd.s32 %s63, 1
      %s65 = scalar_select %p62, %s63, %s64
      %p68 = pneg %p62
      %p69 = scmp.eq.s32.totalorder %s9, 1
      %p70 = por %p68, %p69
      %p71 = scmp.ne.s32.totalorder %s63, %s66
      %p72 = scmp.eq.s32.totalorder %s9, 0
      %p73 = por %p71, %p72
      %p74 = scmp.ne.s32.totalorder %s63, %s66
      %p75 = scmp.eq.s32.totalorder %s14, 1
      %p76 = por %p74, %p75
      %p77 = scmp.ne.s32.totalorder %s66, %s67
      %p78 = scmp.eq.s32.totalorder %s14, 0
      %p79 = por %p77, %p78
      %p80 = scmp.ne.s32.totalorder %s66, %s67
      %p81 = scmp.eq.s32.totalorder %s15, 1
      %p82 = por %p80, %p81
      %p84 = scmp.ne.s32.totalorder %s67, %s83
      %p85 = scmp.eq.s32.totalorder %s15, 0
      %p86 = por %p84, %p85
      %s87 = sadd.s32 %s17, 2
      %s88 = sadd.s32 %s24, 2
      %s89 = ssub.s32 %s16, %s28
      %s90 = ssub.s32 %s87, %s88
      %s91 = sor.u32 %s89, %s90
      %p92 = scmp.eq.s32.totalorder %s91, 0
      %s94 = sadd.s32 %s93, 1
      %s95 = scalar_select %p92, %s93, %s94
      %p98 = pneg %p92
      %p99 = scmp.eq.s32.totalorder %s9, 1
      %p100 = por %p98, %p99
      %p101 = scmp.ne.s32.totalorder %s93, %s96
      %p102 = scmp.eq.s32.totalorder %s9, 0
      %p103 = por %p101, %p102
      %p104 = scmp.ne.s32.totalorder %s93, %s96
      %p105 = scmp.eq.s32.totalorder %s14, 1
      %p106 = por %p104, %p105
      %p107 = scmp.ne.s32.totalorder %s96, %s97
      %p108 = scmp.eq.s32.totalorder %s14, 0
      %p109 = por %p107, %p108
      %p110 = scmp.ne.s32.totalorder %s96, %s97
      %p111 = scmp.eq.s32.totalorder %s15, 1
      %p112 = por %p110, %p111
      %p114 = scmp.ne.s32.totalorder %s97, %s113
      %p115 = scmp.eq.s32.totalorder %s15, 0
      %p116 = por %p114, %p115
      %s117 = ssub.s32 %s16, %s28
      %s118 = ssub.s32 %s17, %s24
      %s119 = sor.u32 %s117, %s118
      %p120 = scmp.eq.s32.totalorder %s119, 0
      %s122 = sadd.s32 %s121, 1
      %s123 = scalar_select %p120, %s121, %s122
      %p126 = pneg %p120
      %p127 = scmp.eq.s32.totalorder %s9, 1
      %p128 = por %p126, %p127
      %p129 = scmp.ne.s32.totalorder %s121, %s124
      %p130 = scmp.eq.s32.totalorder %s9, 0
      %p131 = por %p129, %p130
      %p132 = scmp.ne.s32.totalorder %s121, %s124
      %p133 = scmp.eq.s32.totalorder %s14, 1
      %p134 = por %p132, %p133
      %p135 = scmp.ne.s32.totalorder %s124, %s125
      %p136 = scmp.eq.s32.totalorder %s14, 0
      %p137 = por %p135, %p136
      %p138 = scmp.ne.s32.totalorder %s124, %s125
      %p139 = scmp.eq.s32.totalorder %s15, 1
      %p140 = por %p138, %p139
      %p142 = scmp.ne.s32.totalorder %s125, %s141
      %p143 = scmp.eq.s32.totalorder %s15, 0
      %p144 = por %p142, %p143
      %p145 = scmp.le.s32.totalorder 1, %s9
      %p146 = scmp.lt.s32.totalorder %s9, 3
      %p147 = pnand %p145, %p146
      %p148 = pneg %p147
      // Predicated region
      $region9: #{dino_v2_encoder_lora_forward.15} parent=5 // pred_check
        _
      $region10: #{dino_v2_encoder_lora_forward.15} parent=5 // pred_check_branch
        %150 = sbr.rel (%p147) target = $region12
      $region11: #{dino_v2_encoder_lora_forward.15} parent=5 // pred_region
        %s151 = ssub.s32 %s9, 1
      $region12: #{dino_v2_encoder_lora_forward.15} parent=5 // pred_fallthru
        _
      %p152 = scmp.lt.s32.totalorder %s9, 2
      // Predicated region
      $region13: #{dino_v2_encoder_lora_forward.15} parent=5 // pred_check
        %p153 = pneg %p152
      $region14: #{dino_v2_encoder_lora_forward.15} parent=5 // pred_check_branch
        %155 = sbr.rel (%p153) target = $region16
      $region15: #{dino_v2_encoder_lora_forward.15} parent=5 // pred_region
        // Predicated region
        $region17: #{dino_v2_encoder_lora_forward.15} parent=15 // pred_check
          %p156 = pneg %p43
        $region18: #{dino_v2_encoder_lora_forward.15} parent=15 // pred_check_branch
          %158 = sbr.rel (%p156) target = $region20
        $region19: #{dino_v2_encoder_lora_forward.15} parent=15 // pred_region
          %s159 = sand.u32 %s33, 1
          %s160 = sand.u32 %s33, 1
          %s161 = smul.addr %s160, 12
          %s162 = scalar_lea.vmem [#allocation2], %s161
          %s163 = smul.addr %s16, 9
          %s164 = sadd.s32 %s17, %s163
          %s165 = smul.addr %s164, 4
          %s166 = scalar_lea.vmem %s0, %s165
          // Predicated region
          $region21: #{dino_v2_encoder_lora_forward.15} parent=19 // pred_check
            _
          $region22: #{dino_v2_encoder_lora_forward.15} parent=19 // pred_check_branch
            %168 = sbr.rel (0) target = $region24
          $region23: #{dino_v2_encoder_lora_forward.15} parent=19 // pred_region
            // Predicated region
            $region25: #{dino_v2_encoder_lora_forward.15} parent=23 // pred_check
              _
            $region26: #{dino_v2_encoder_lora_forward.15} parent=23 // pred_check_branch
              %170 = sbr.rel target = $region28
            $region27: #{dino_v2_encoder_lora_forward.15} parent=23 // pred_region
              // Predicated region
              $region40: #{dino_v2_encoder_lora_forward.15} parent=27 // pred_check
                _
              $region41: #{dino_v2_encoder_lora_forward.15} parent=27 // pred_check_branch
                %189 = sbr.rel (0) target = $region43
              $region42: #{dino_v2_encoder_lora_forward.15} parent=27 // pred_region
                loop: start=0, step=1, limit=1
                $region44: #{dino_v2_encoder_lora_forward.15} parent=42 // loop_pre_header
                  _
                $region45: #{dino_v2_encoder_lora_forward.15} parent=42 // loop_header
                  %s191 = sphi 0, %s195
                  %p192 = scmp.ge.s32.totalorder %s191, 1
                  %s196 = sphi %s166, %s166
                  %s197 = sphi %s162, %s162
                $region46: #{dino_v2_encoder_lora_forward.15} parent=42 // loop_header_branch
                  %194 = sbr.rel (%p192) target = $region50
                $region47: #{dino_v2_encoder_lora_forward.15} parent=42 // loop_body
                  _
                $region48: #{dino_v2_encoder_lora_forward.15} parent=42 // loop_footer
                  %s195 = sadd.s32 1, %s191
                $region49: #{dino_v2_encoder_lora_forward.15} parent=42 // loop_footer_branch
                  %190 = sbr.rel target = $region45
                $region50: #{dino_v2_encoder_lora_forward.15} parent=42 // loop_exit
                  _
                loop: start=0, step=1, limit=1
                $region51: #{dino_v2_encoder_lora_forward.15} parent=42 // loop_pre_header
                  _
                $region52: #{dino_v2_encoder_lora_forward.15} parent=42 // loop_header
                  %s200 = sphi 0, %s204
                  %p201 = scmp.ge.s32.totalorder %s200, 1
                  %s205 = sphi %s166, %s166
                  %s206 = sphi %s162, %s162
                $region53: #{dino_v2_encoder_lora_forward.15} parent=42 // loop_header_branch
                  %203 = sbr.rel (%p201) target = $region57
                $region54: #{dino_v2_encoder_lora_forward.15} parent=42 // loop_body
                  %v207 = vld [vmem:[%s205] sm:$0xf]
                  %208 = vst [vmem:[%s206] sm:$0xf] %v207
                  %v209 = vld [vmem:[%s205 + $0xc] sm:$0xf]
                  %210 = vst [vmem:[%s206 + $0x4] sm:$0xf] %v209
                  %v211 = vld [vmem:[%s205 + $0x18] sm:$0xf]
                  %212 = vst [vmem:[%s206 + $0x8] sm:$0xf] %v211
                $region55: #{dino_v2_encoder_lora_forward.15} parent=42 // loop_footer
                  %s204 = sadd.s32 1, %s200
                $region56: #{dino_v2_encoder_lora_forward.15} parent=42 // loop_footer_branch
                  %199 = sbr.rel target = $region52
                $region57: #{dino_v2_encoder_lora_forward.15} parent=42 // loop_exit
                  _
              $region43: #{dino_v2_encoder_lora_forward.15} parent=27 // pred_fallthru
                _
            $region28: #{dino_v2_encoder_lora_forward.15} parent=23 // pred_fallthru
              _
            // Predicated region
            $region29: #{dino_v2_encoder_lora_forward.15} parent=23 // pred_check
              _
            $region30: #{dino_v2_encoder_lora_forward.15} parent=23 // pred_check_branch
              %172 = sbr.rel (0) target = $region32
            $region31: #{dino_v2_encoder_lora_forward.15} parent=23 // pred_region
              loop: start=0, step=1, limit=1
              $region33: #{dino_v2_encoder_lora_forward.15} parent=31 // loop_pre_header
                _
              $region34: #{dino_v2_encoder_lora_forward.15} parent=31 // loop_header
                %s175 = sphi 0, %s179
                %p176 = scmp.ge.s32.totalorder %s175, 1
                %s180 = sphi %s166, %s166
                %s181 = sphi %s162, %s162
              $region35: #{dino_v2_encoder_lora_forward.15} parent=31 // loop_header_branch
                %178 = sbr.rel (%p176) target = $region39
              $region36: #{dino_v2_encoder_lora_forward.15} parent=31 // loop_body
                %v182 = vld [vmem:[%s180] sm:$0xf]
                %183 = vst [vmem:[%s181] sm:$0xf] %v182
                %v184 = vld [vmem:[%s180 + $0xc] sm:$0xf]
                %185 = vst [vmem:[%s181 + $0x4] sm:$0xf] %v184
                %v186 = vld [vmem:[%s180 + $0x18] sm:$0xf]
                %187 = vst [vmem:[%s181 + $0x8] sm:$0xf] %v186
              $region37: #{dino_v2_encoder_lora_forward.15} parent=31 // loop_footer
                %s179 = sadd.s32 1, %s175
              $region38: #{dino_v2_encoder_lora_forward.15} parent=31 // loop_footer_branch
                %174 = sbr.rel target = $region34
              $region39: #{dino_v2_encoder_lora_forward.15} parent=31 // loop_exit
                _
            $region32: #{dino_v2_encoder_lora_forward.15} parent=23 // pred_fallthru
              _
          $region24: #{dino_v2_encoder_lora_forward.15} parent=19 // pred_fallthru
            _
          %213 = vnop
        $region20: #{dino_v2_encoder_lora_forward.15} parent=15 // pred_fallthru
          _
        // Predicated region
        $region58: #{dino_v2_encoder_lora_forward.15} parent=15 // pred_check
          %p214 = pneg %p73
        $region59: #{dino_v2_encoder_lora_forward.15} parent=15 // pred_check_branch
          %216 = sbr.rel (%p214) target = $region61
        $region60: #{dino_v2_encoder_lora_forward.15} parent=15 // pred_region
          %s217 = sand.u32 %s63, 1
          %s218 = sand.u32 %s63, 1
          %s219 = smul.addr %s218, 12
          %s220 = scalar_lea.vmem [#allocation3], %s219
          %s221 = sadd.s32 %s17, 1
          %s222 = smul.addr %s16, 9
          %s223 = sadd.s32 %s221, %s222
          %s224 = smul.addr %s223, 4
          %s225 = scalar_lea.vmem %s1, %s224
          // Predicated region
          $region62: #{dino_v2_encoder_lora_forward.15} parent=60 // pred_check
            _
          $region63: #{dino_v2_encoder_lora_forward.15} parent=60 // pred_check_branch
            %227 = sbr.rel (0) target = $region65
          $region64: #{dino_v2_encoder_lora_forward.15} parent=60 // pred_region
            // Predicated region
            $region66: #{dino_v2_encoder_lora_forward.15} parent=64 // pred_check
              _
            $region67: #{dino_v2_encoder_lora_forward.15} parent=64 // pred_check_branch
              %229 = sbr.rel target = $region69
            $region68: #{dino_v2_encoder_lora_forward.15} parent=64 // pred_region
              // Predicated region
              $region81: #{dino_v2_encoder_lora_forward.15} parent=68 // pred_check
                _
              $region82: #{dino_v2_encoder_lora_forward.15} parent=68 // pred_check_branch
                %248 = sbr.rel (0) target = $region84
              $region83: #{dino_v2_encoder_lora_forward.15} parent=68 // pred_region
                loop: start=0, step=1, limit=1
                $region85: #{dino_v2_encoder_lora_forward.15} parent=83 // loop_pre_header
                  _
                $region86: #{dino_v2_encoder_lora_forward.15} parent=83 // loop_header
                  %s250 = sphi 0, %s254
                  %p251 = scmp.ge.s32.totalorder %s250, 1
                  %s255 = sphi %s225, %s225
                  %s256 = sphi %s220, %s220
                $region87: #{dino_v2_encoder_lora_forward.15} parent=83 // loop_header_branch
                  %253 = sbr.rel (%p251) target = $region91
                $region88: #{dino_v2_encoder_lora_forward.15} parent=83 // loop_body
                  _
                $region89: #{dino_v2_encoder_lora_forward.15} parent=83 // loop_footer
                  %s254 = sadd.s32 1, %s250
                $region90: #{dino_v2_encoder_lora_forward.15} parent=83 // loop_footer_branch
                  %249 = sbr.rel target = $region86
                $region91: #{dino_v2_encoder_lora_forward.15} parent=83 // loop_exit
                  _
                loop: start=0, step=1, limit=1
                $region92: #{dino_v2_encoder_lora_forward.15} parent=83 // loop_pre_header
                  _
                $region93: #{dino_v2_encoder_lora_forward.15} parent=83 // loop_header
                  %s259 = sphi 0, %s263
                  %p260 = scmp.ge.s32.totalorder %s259, 1
                  %s264 = sphi %s225, %s225
                  %s265 = sphi %s220, %s220
                $region94: #{dino_v2_encoder_lora_forward.15} parent=83 // loop_header_branch
                  %262 = sbr.rel (%p260) target = $region98
                $region95: #{dino_v2_encoder_lora_forward.15} parent=83 // loop_body
                  %v266 = vld [vmem:[%s264] sm:$0xf]
                  %267 = vst [vmem:[%s265] sm:$0xf] %v266
                  %v268 = vld [vmem:[%s264 + $0xc] sm:$0xf]
                  %269 = vst [vmem:[%s265 + $0x4] sm:$0xf] %v268
                  %v270 = vld [vmem:[%s264 + $0x18] sm:$0xf]
                  %271 = vst [vmem:[%s265 + $0x8] sm:$0xf] %v270
                $region96: #{dino_v2_encoder_lora_forward.15} parent=83 // loop_footer
                  %s263 = sadd.s32 1, %s259
                $region97: #{dino_v2_encoder_lora_forward.15} parent=83 // loop_footer_branch
                  %258 = sbr.rel target = $region93
                $region98: #{dino_v2_encoder_lora_forward.15} parent=83 // loop_exit
                  _
              $region84: #{dino_v2_encoder_lora_forward.15} parent=68 // pred_fallthru
                _
            $region69: #{dino_v2_encoder_lora_forward.15} parent=64 // pred_fallthru
              _
            // Predicated region
            $region70: #{dino_v2_encoder_lora_forward.15} parent=64 // pred_check
              _
            $region71: #{dino_v2_encoder_lora_forward.15} parent=64 // pred_check_branch
              %231 = sbr.rel (0) target = $region73
            $region72: #{dino_v2_encoder_lora_forward.15} parent=64 // pred_region
              loop: start=0, step=1, limit=1
              $region74: #{dino_v2_encoder_lora_forward.15} parent=72 // loop_pre_header
                _
              $region75: #{dino_v2_encoder_lora_forward.15} parent=72 // loop_header
                %s234 = sphi 0, %s238
                %p235 = scmp.ge.s32.totalorder %s234, 1
                %s239 = sphi %s225, %s225
                %s240 = sphi %s220, %s220
              $region76: #{dino_v2_encoder_lora_forward.15} parent=72 // loop_header_branch
                %237 = sbr.rel (%p235) target = $region80
              $region77: #{dino_v2_encoder_lora_forward.15} parent=72 // loop_body
                %v241 = vld [vmem:[%s239] sm:$0xf]
                %242 = vst [vmem:[%s240] sm:$0xf] %v241
                %v243 = vld [vmem:[%s239 + $0xc] sm:$0xf]
                %244 = vst [vmem:[%s240 + $0x4] sm:$0xf] %v243
                %v245 = vld [vmem:[%s239 + $0x18] sm:$0xf]
                %246 = vst [vmem:[%s240 + $0x8] sm:$0xf] %v245
              $region78: #{dino_v2_encoder_lora_forward.15} parent=72 // loop_footer
                %s238 = sadd.s32 1, %s234
              $region79: #{dino_v2_encoder_lora_forward.15} parent=72 // loop_footer_branch
                %233 = sbr.rel target = $region75
              $region80: #{dino_v2_encoder_lora_forward.15} parent=72 // loop_exit
                _
            $region73: #{dino_v2_encoder_lora_forward.15} parent=64 // pred_fallthru
              _
          $region65: #{dino_v2_encoder_lora_forward.15} parent=60 // pred_fallthru
            _
          %272 = vnop
        $region61: #{dino_v2_encoder_lora_forward.15} parent=15 // pred_fallthru
          _
        // Predicated region
        $region99: #{dino_v2_encoder_lora_forward.15} parent=15 // pred_check
          %p273 = pneg %p103
        $region100: #{dino_v2_encoder_lora_forward.15} parent=15 // pred_check_branch
          %275 = sbr.rel (%p273) target = $region102
        $region101: #{dino_v2_encoder_lora_forward.15} parent=15 // pred_region
          %s276 = sand.u32 %s93, 1
          %s277 = sand.u32 %s93, 1
          %s278 = smul.addr %s277, 12
          %s279 = scalar_lea.vmem [#allocation4], %s278
          %s280 = sadd.s32 %s17, 2
          %s281 = smul.addr %s16, 9
          %s282 = sadd.s32 %s280, %s281
          %s283 = smul.addr %s282, 4
          %s284 = scalar_lea.vmem %s2, %s283
          // Predicated region
          $region103: #{dino_v2_encoder_lora_forward.15} parent=101 // pred_check
            _
          $region104: #{dino_v2_encoder_lora_forward.15} parent=101 // pred_check_branch
            %286 = sbr.rel (0) target = $region106
          $region105: #{dino_v2_encoder_lora_forward.15} parent=101 // pred_region
            // Predicated region
            $region107: #{dino_v2_encoder_lora_forward.15} parent=105 // pred_check
              _
            $region108: #{dino_v2_encoder_lora_forward.15} parent=105 // pred_check_branch
              %288 = sbr.rel target = $region110
            $region109: #{dino_v2_encoder_lora_forward.15} parent=105 // pred_region
              // Predicated region
              $region122: #{dino_v2_encoder_lora_forward.15} parent=109 // pred_check
                _
              $region123: #{dino_v2_encoder_lora_forward.15} parent=109 // pred_check_branch
                %307 = sbr.rel (0) target = $region125
              $region124: #{dino_v2_encoder_lora_forward.15} parent=109 // pred_region
                loop: start=0, step=1, limit=1
                $region126: #{dino_v2_encoder_lora_forward.15} parent=124 // loop_pre_header
                  _
                $region127: #{dino_v2_encoder_lora_forward.15} parent=124 // loop_header
                  %s309 = sphi 0, %s313
                  %p310 = scmp.ge.s32.totalorder %s309, 1
                  %s314 = sphi %s284, %s284
                  %s315 = sphi %s279, %s279
                $region128: #{dino_v2_encoder_lora_forward.15} parent=124 // loop_header_branch
                  %312 = sbr.rel (%p310) target = $region132
                $region129: #{dino_v2_encoder_lora_forward.15} parent=124 // loop_body
                  _
                $region130: #{dino_v2_encoder_lora_forward.15} parent=124 // loop_footer
                  %s313 = sadd.s32 1, %s309
                $region131: #{dino_v2_encoder_lora_forward.15} parent=124 // loop_footer_branch
                  %308 = sbr.rel target = $region127
                $region132: #{dino_v2_encoder_lora_forward.15} parent=124 // loop_exit
                  _
                loop: start=0, step=1, limit=1
                $region133: #{dino_v2_encoder_lora_forward.15} parent=124 // loop_pre_header
                  _
                $region134: #{dino_v2_encoder_lora_forward.15} parent=124 // loop_header
                  %s318 = sphi 0, %s322
                  %p319 = scmp.ge.s32.totalorder %s318, 1
                  %s323 = sphi %s284, %s284
                  %s324 = sphi %s279, %s279
                $region135: #{dino_v2_encoder_lora_forward.15} parent=124 // loop_header_branch
                  %321 = sbr.rel (%p319) target = $region139
                $region136: #{dino_v2_encoder_lora_forward.15} parent=124 // loop_body
                  %v325 = vld [vmem:[%s323] sm:$0xf]
                  %326 = vst [vmem:[%s324] sm:$0xf] %v325
                  %v327 = vld [vmem:[%s323 + $0xc] sm:$0xf]
                  %328 = vst [vmem:[%s324 + $0x4] sm:$0xf] %v327
                  %v329 = vld [vmem:[%s323 + $0x18] sm:$0xf]
                  %330 = vst [vmem:[%s324 + $0x8] sm:$0xf] %v329
                $region137: #{dino_v2_encoder_lora_forward.15} parent=124 // loop_footer
                  %s322 = sadd.s32 1, %s318
                $region138: #{dino_v2_encoder_lora_forward.15} parent=124 // loop_footer_branch
                  %317 = sbr.rel target = $region134
                $region139: #{dino_v2_encoder_lora_forward.15} parent=124 // loop_exit
                  _
              $region125: #{dino_v2_encoder_lora_forward.15} parent=109 // pred_fallthru
                _
            $region110: #{dino_v2_encoder_lora_forward.15} parent=105 // pred_fallthru
              _
            // Predicated region
            $region111: #{dino_v2_encoder_lora_forward.15} parent=105 // pred_check
              _
            $region112: #{dino_v2_encoder_lora_forward.15} parent=105 // pred_check_branch
              %290 = sbr.rel (0) target = $region114
            $region113: #{dino_v2_encoder_lora_forward.15} parent=105 // pred_region
              loop: start=0, step=1, limit=1
              $region115: #{dino_v2_encoder_lora_forward.15} parent=113 // loop_pre_header
                _
              $region116: #{dino_v2_encoder_lora_forward.15} parent=113 // loop_header
                %s293 = sphi 0, %s297
                %p294 = scmp.ge.s32.totalorder %s293, 1
                %s298 = sphi %s284, %s284
                %s299 = sphi %s279, %s279
              $region117: #{dino_v2_encoder_lora_forward.15} parent=113 // loop_header_branch
                %296 = sbr.rel (%p294) target = $region121
              $region118: #{dino_v2_encoder_lora_forward.15} parent=113 // loop_body
                %v300 = vld [vmem:[%s298] sm:$0xf]
                %301 = vst [vmem:[%s299] sm:$0xf] %v300
                %v302 = vld [vmem:[%s298 + $0xc] sm:$0xf]
                %303 = vst [vmem:[%s299 + $0x4] sm:$0xf] %v302
                %v304 = vld [vmem:[%s298 + $0x18] sm:$0xf]
                %305 = vst [vmem:[%s299 + $0x8] sm:$0xf] %v304
              $region119: #{dino_v2_encoder_lora_forward.15} parent=113 // loop_footer
                %s297 = sadd.s32 1, %s293
              $region120: #{dino_v2_encoder_lora_forward.15} parent=113 // loop_footer_branch
                %292 = sbr.rel target = $region116
              $region121: #{dino_v2_encoder_lora_forward.15} parent=113 // loop_exit
                _
            $region114: #{dino_v2_encoder_lora_forward.15} parent=105 // pred_fallthru
              _
          $region106: #{dino_v2_encoder_lora_forward.15} parent=101 // pred_fallthru
            _
          %331 = vnop
        $region102: #{dino_v2_encoder_lora_forward.15} parent=15 // pred_fallthru
          _
      $region16: #{dino_v2_encoder_lora_forward.15} parent=5 // pred_fallthru
        _
      %p332 = scmp.le.s32.totalorder 1, %s9
      %p333 = scmp.lt.s32.totalorder %s9, 3
      %p334 = pnand %p332, %p333
      %p335 = pneg %p334
      // Predicated region
      $region140: #{dino_v2_encoder_lora_forward.15} parent=5 // pred_check
        _
      $region141: #{dino_v2_encoder_lora_forward.15} parent=5 // pred_check_branch
        %337 = sbr.rel (%p334) target = $region143
      $region142: #{dino_v2_encoder_lora_forward.15} parent=5 // pred_region
        %s338 = ssub.s32 %s9, 1
        %s339 = sand.u32 %s36, 1
        %s340 = sand.u32 %s36, 1
        %s341 = smul.addr %s340, 12
        %s342 = scalar_lea.vmem [#allocation2], %s341
        // Predicated region
        $region144: #{dino_v2_encoder_lora_forward.15} parent=142 // pred_check
          %p343 = pneg %p49
        $region145: #{dino_v2_encoder_lora_forward.15} parent=142 // pred_check_branch
          %345 = sbr.rel (%p343) target = $region147
        $region146: #{dino_v2_encoder_lora_forward.15} parent=142 // pred_region
          _
        $region147: #{dino_v2_encoder_lora_forward.15} parent=142 // pred_fallthru
          _
        %s346 = sand.u32 %s66, 1
        %s347 = sand.u32 %s66, 1
        %s348 = smul.addr %s347, 12
        %s349 = scalar_lea.vmem [#allocation3], %s348
        // Predicated region
        $region148: #{dino_v2_encoder_lora_forward.15} parent=142 // pred_check
          %p350 = pneg %p79
        $region149: #{dino_v2_encoder_lora_forward.15} parent=142 // pred_check_branch
          %352 = sbr.rel (%p350) target = $region151
        $region150: #{dino_v2_encoder_lora_forward.15} parent=142 // pred_region
          _
        $region151: #{dino_v2_encoder_lora_forward.15} parent=142 // pred_fallthru
          _
        %s353 = sand.u32 %s96, 1
        %s354 = sand.u32 %s96, 1
        %s355 = smul.addr %s354, 12
        %s356 = scalar_lea.vmem [#allocation4], %s355
        // Predicated region
        $region152: #{dino_v2_encoder_lora_forward.15} parent=142 // pred_check
          %p357 = pneg %p109
        $region153: #{dino_v2_encoder_lora_forward.15} parent=142 // pred_check_branch
          %359 = sbr.rel (%p357) target = $region155
        $region154: #{dino_v2_encoder_lora_forward.15} parent=142 // pred_region
          _
        $region155: #{dino_v2_encoder_lora_forward.15} parent=142 // pred_fallthru
          _
        %s360 = sand.u32 %s36, 1
        %s361 = sand.u32 %s36, 1
        %s362 = smul.addr %s361, 12
        %s363 = scalar_lea.vmem [#allocation2], %s362
        %p364 = pneg %p49
        %p365 = pneg %p46
        %s366 = sand.u32 %s66, 1
        %s367 = sand.u32 %s66, 1
        %s368 = smul.addr %s367, 12
        %s369 = scalar_lea.vmem [#allocation3], %s368
        %p370 = pneg %p79
        %p371 = pneg %p76
        %s372 = sand.u32 %s96, 1
        %s373 = sand.u32 %s96, 1
        %s374 = smul.addr %s373, 12
        %s375 = scalar_lea.vmem [#allocation4], %s374
        %p376 = pneg %p109
        %p377 = pneg %p106
        %p378 = pneg %p137
        %p379 = pneg %p134
        %p380 = scmp.lt.s32.totalorder %s18, 1
        %s381 = scalar_select %p380, %s18, 1
        %p382 = scmp.lt.s32.totalorder %s19, 0
        %s383 = scalar_select %p382, %s19, 0
        %s384 = smul.addr %s381, 3
        %s385 = sadd.s32 %s383, %s384
        %s386 = smul.addr %s385, 4
        %s387 = scalar_lea.vmem %s3, %s386
        %s388 = sadd.s32 %s19, 1
        %s389 = sadd.s32 %s19, 2
        %p390 = scmp.lt.s32.totalorder %s18, 1
        %s391 = scalar_select %p390, %s18, 1
        %p392 = scmp.lt.s32.totalorder %s19, 0
        %s393 = scalar_select %p392, %s19, 0
        %s394 = smul.addr %s391, 3
        %s395 = sadd.s32 %s393, %s394
        %s396 = smul.addr %s395, 4
        %s397 = scalar_lea.vmem %s3, %s396
        %v399 = vld [vmem:[%s342] sm:$0xf]
        %v400 = vld [vmem:[%s342 + $0x4] sm:$0xf]
        %v401 = vld [vmem:[%s342 + $0x8] sm:$0xf]
        %v402 = vld [vmem:[%s349] sm:$0xf]
        %v403 = vld [vmem:[%s349 + $0x4] sm:$0xf]
        %v404 = vld [vmem:[%s349 + $0x8] sm:$0xf]
        %v405 = vld [vmem:[%s356] sm:$0xf]
        %v406 = vld [vmem:[%s356 + $0x4] sm:$0xf]
        %v407 = vld [vmem:[%s356 + $0x8] sm:$0xf]
        %v411 = vunpack.c.l.b16 %v399
        %v412 = vunpack.c.l.b16 %v400
        %v413 = vunpack.c.l.b16 %v401
        %v414 = vpack.c.b16 %v412, %v411
        %v415 = vpack.c.b16 %v413, %v413
        %v419 = vunpack.c.l.b16 %v402
        %v420 = vunpack.c.l.b16 %v403
        %v421 = vunpack.c.l.b16 %v404
        %v422 = vpack.c.b16 %v420, %v419
        %v423 = vpack.c.b16 %v421, %v421
        %vm424 = vcmask 523264
        %v426 = vsel %vm424, %v414, 0
        %v429 = vsel %vm424, %v415, 0
        %v432 = vsel %vm424, %v422, 0
        %v435 = vsel %vm424, %v423, 0
        %437 = vmatprep.subr.bf16.mxu0 0
        %438 = vmatpush1.bf16.xpose.msra.mxu0 %v432
        %439 = vmatprep.subr.bf16.mxu0 0
        %440 = vmatpush1.bf16.xpose.msra.mxu0 %v435
        %441 = vmatprep.subr.bf16.mxu0 0
        %442 = vmatpush1.bf16.xpose.msra.mxu0 0
        %443 = vmatprep.subr.bf16.mxu0 0
        %444 = vmatpush1.bf16.xpose.msra.mxu0 0
        %445 = vmatprep.subr.bf16.mxu0 0
        %446 = vmatpush1.bf16.xpose.msra.mxu0 0
        %447 = vmatprep.subr.bf16.mxu0 0
        %448 = vmatpush1.bf16.xpose.msra.mxu0 0
        %449 = vmatprep.subr.bf16.mxu0 0
        %450 = vmatpush1.bf16.xpose.msra.mxu0 0
        %451 = vmatprep.subr.bf16.mxu0 0
        %452 = vmatpush1.bf16.xpose.msra.mxu0 0
        %453 = vmatprep.subr.bf16.mxu0 0
        %454 = vmatpush1.bf16.xpose.msra.mxu0 0
        %455 = vmatprep.subr.bf16.mxu0 0
        %456 = vmatpush1.bf16.xpose.msra.mxu0 0
        %457 = vmatprep.subr.bf16.mxu0 0
        %458 = vmatpush1.bf16.xpose.msra.mxu0 0
        %459 = vmatprep.subr.bf16.mxu0 0
        %460 = vmatpush1.bf16.xpose.msra.mxu0 0
        %461 = vmatprep.subr.bf16.mxu0 0
        %462 = vmatpush1.bf16.xpose.msra.mxu0 0
        %463 = vmatprep.subr.bf16.mxu0 0
        %464 = vmatpush1.bf16.xpose.msra.mxu0 0
        %465 = vmatprep.subr.bf16.mxu0 0
        %466 = vmatpush1.bf16.xpose.msra.mxu0 0
        %467 = vmatprep.subr.bf16.mxu0 0
        %468 = vmatpush1.bf16.xpose.msra.mxu0 0
        %469 = vmatprep.mubr.bf16.mxu0 0
        %470 = vmatmul.mubr.bf16.gmra.mrb[0].mxu0 %v426
        %v471 = vpop.f32.mrb[0].mxu0
        %v472 = vadd.f32 0.0, %v471
        %v473 = vpop.f32.mrb[0].mxu0
        %v474 = vpop.f32.mrb[0].mxu0
        %v475 = vadd.f32 0.0, %v474
        %v476 = vpop.f32.mrb[0].mxu0
        %477 = vmatprep.mubr.bf16.mxu0 0
        %478 = vmatmul.mubr.bf16.gmra.mrb[0].mxu0 %v429
        %v479 = vpop.f32.mrb[0].mxu0
        %v480 = vadd.f32 0.0, %v479
        %v481 = vpop.f32.mrb[0].mxu0
        %v482 = vpop.f32.mrb[0].mxu0
        %v483 = vpop.f32.mrb[0].mxu0
        %484 = vdwg.mxu0
        %v485 = vmul.f32 %v472, 0.125
        %v486 = vmul.f32 %v475, 0.125
        %v487 = vmul.f32 %v480, 0.125
        %v488 = vlaneseq
        %v489 = vand.u32 %v488, 127
        %vm490 = vcmp.lt.s32.totalorder %v489, 17
        %v491 = vsel %vm490, %v485, -inf
        %v492 = vsel %vm490, %v486, -inf
        %v493 = vsel %vm490, %v487, -inf
        %vm494 = vcmask 195584
        %v495 = vsel %vm494, %v491, -inf
        %496 = vmax.xlane.f32.xlu0 %v495
        %v497 = vpop.xlane.xlu0 %496
        %v498 = vsel %vm494, %v492, -inf
        %499 = vmax.xlane.f32.xlu0 %v498
        %v500 = vpop.xlane.xlu0 %499
        %v501 = vsel %vm494, %v493, -inf
        %502 = vmax.xlane.f32.xlu0 %v501
        %v503 = vpop.xlane.xlu0 %502
        %v504 = vsub.f32 -inf, %v497
        %v505 = vsub.f32 -inf, %v500
        %v506 = vsub.f32 -inf, %v503
        %v507 = vmul.f32 %v504, 1.442695
        %v508 = vpow.pop %v507
        %v509 = vmul.f32 %v505, 1.442695
        %v510 = vpow.pop %v509
        %v511 = vmul.f32 %v506, 1.442695
        %v512 = vpow.pop %v511
        %v513 = vsub.f32 %v491, %v497
        %v514 = vsub.f32 %v492, %v500
        %v515 = vsub.f32 %v493, %v503
        %v516 = vmul.f32 %v513, 1.442695
        %v517 = vpow.pop %v516
        %v518 = vmul.f32 %v514, 1.442695
        %v519 = vpow.pop %v518
        %v520 = vmul.f32 %v515, 1.442695
        %v521 = vpow.pop %v520
        %v522 = vmul.f32 %v508, 0.0
        %v523 = vmul.f32 %v510, 0.0
        %v524 = vmul.f32 %v512, 0.0
        %v525 = vsel %vm494, %v517, 0.0
        %526 = vadd.xlane.f32.xlu0 %v525
        %v527 = vpop.xlane.xlu0 %526
        %v528 = vsel %vm494, %v519, 0.0
        %529 = vadd.xlane.f32.xlu0 %v528
        %v530 = vpop.xlane.xlu0 %529
        %v531 = vsel %vm494, %v521, 0.0
        %532 = vadd.xlane.f32.xlu0 %v531
        %v533 = vpop.xlane.xlu0 %532
        %v534 = vadd.f32 %v522, %v527
        %v535 = vadd.f32 %v523, %v530
        %v536 = vadd.f32 %v524, %v533
        %v537 = vpack.c.bf16 %v519, %v517
        %v538 = vpack.c.bf16 %v521, %v521
        %v542 = vunpack.c.l.b16 %v405
        %v543 = vunpack.c.l.b16 %v406
        %v544 = vunpack.c.l.b16 %v407
        %v545 = vpack.c.b16 %v543, %v542
        %v546 = vpack.c.b16 %v544, %v544
        %v549 = vsel %vm494, %v537, 0
        %v552 = vsel %vm494, %v538, 0
        %vm554 = vcmask 1043456
        %v556 = vsel %vm554, %v546, 0
        %558 = vmatprep.subr.bf16.mxu0 0
        %559 = vmatpush1.bf16.msra.mxu0 %v545
        %560 = vmatprep.subr.bf16.mxu0 0
        %561 = vmatpush1.bf16.msra.mxu0 %v556
        %562 = vmatprep.subr.bf16.mxu0 0
        %563 = vmatpush1.bf16.msra.mxu0 0
        %564 = vmatprep.subr.bf16.mxu0 0
        %565 = vmatpush1.bf16.msra.mxu0 0
        %566 = vmatprep.subr.bf16.mxu0 0
        %567 = vmatpush1.bf16.msra.mxu0 0
        %568 = vmatprep.subr.bf16.mxu0 0
        %569 = vmatpush1.bf16.msra.mxu0 0
        %570 = vmatprep.subr.bf16.mxu0 0
        %571 = vmatpush1.bf16.msra.mxu0 0
        %572 = vmatprep.subr.bf16.mxu0 0
        %573 = vmatpush1.bf16.msra.mxu0 0
        %574 = vmatprep.subr.bf16.mxu0 0
        %575 = vmatpush1.bf16.msra.mxu0 0
        %576 = vmatprep.subr.bf16.mxu0 0
        %577 = vmatpush1.bf16.msra.mxu0 0
        %578 = vmatprep.subr.bf16.mxu0 0
        %579 = vmatpush1.bf16.msra.mxu0 0
        %580 = vmatprep.subr.bf16.mxu0 0
        %581 = vmatpush1.bf16.msra.mxu0 0
        %582 = vmatprep.subr.bf16.mxu0 0
        %583 = vmatpush1.bf16.msra.mxu0 0
        %584 = vmatprep.subr.bf16.mxu0 0
        %585 = vmatpush1.bf16.msra.mxu0 0
        %586 = vmatprep.subr.bf16.mxu0 0
        %587 = vmatpush1.bf16.msra.mxu0 0
        %588 = vmatprep.subr.bf16.mxu0 0
        %589 = vmatpush1.bf16.msra.mxu0 0
        %590 = vmatprep.mubr.bf16.mxu0 0
        %591 = vmatmul.mubr.bf16.gmra.mrb[0].mxu0 %v549
        %v592 = vpop.f32.mrb[0].mxu0
        %v593 = vadd.f32 0.0, %v592
        %v594 = vpop.f32.mrb[0].mxu0
        %v595 = vpop.f32.mrb[0].mxu0
        %v596 = vadd.f32 0.0, %v595
        %v597 = vpop.f32.mrb[0].mxu0
        %598 = vmatprep.mubr.bf16.mxu0 0
        %599 = vmatmul.mubr.bf16.gmra.mrb[0].mxu0 %v552
        %v600 = vpop.f32.mrb[0].mxu0
        %v601 = vadd.f32 0.0, %v600
        %v602 = vpop.f32.mrb[0].mxu0
        %v603 = vpop.f32.mrb[0].mxu0
        %v604 = vpop.f32.mrb[0].mxu0
        %605 = vdwg.mxu0
        %v606 = vadd.f32 %v522, %v593
        %v607 = vadd.f32 %v523, %v596
        %v608 = vadd.f32 %v524, %v601
        %v609 = vrcp.pop %v534
        %v610 = vrcp.pop %v535
        %v611 = vrcp.pop %v536
        %v612 = vmul.f32 %v606, %v609
        %v613 = vmul.f32 %v607, %v610
        %v614 = vmul.f32 %v608, %v611
        %615 = vrot.lane.b32.xlu0 %v414, 64
        %v616 = vpop.permute.xlu0 %615
        %617 = vrot.lane.b32.xlu0 %v415, 64
        %v618 = vpop.permute.xlu0 %617
        %619 = vrot.lane.b32.xlu0 %v422, 64
        %v620 = vpop.permute.xlu0 %619
        %621 = vrot.lane.b32.xlu0 %v423, 64
        %v622 = vpop.permute.xlu0 %621
        %v624 = vsel %vm424, %v616, 0
        %v627 = vsel %vm424, %v618, 0
        %v630 = vsel %vm424, %v620, 0
        %v633 = vsel %vm424, %v622, 0
        %635 = vmatprep.subr.bf16.mxu0 0
        %636 = vmatpush1.bf16.xpose.msra.mxu0 %v630
        %637 = vmatprep.subr.bf16.mxu0 0
        %638 = vmatpush1.bf16.xpose.msra.mxu0 %v633
        %639 = vmatprep.subr.bf16.mxu0 0
        %640 = vmatpush1.bf16.xpose.msra.mxu0 0
        %641 = vmatprep.subr.bf16.mxu0 0
        %642 = vmatpush1.bf16.xpose.msra.mxu0 0
        %643 = vmatprep.subr.bf16.mxu0 0
        %644 = vmatpush1.bf16.xpose.msra.mxu0 0
        %645 = vmatprep.subr.bf16.mxu0 0
        %646 = vmatpush1.bf16.xpose.msra.mxu0 0
        %647 = vmatprep.subr.bf16.mxu0 0
        %648 = vmatpush1.bf16.xpose.msra.mxu0 0
        %649 = vmatprep.subr.bf16.mxu0 0
        %650 = vmatpush1.bf16.xpose.msra.mxu0 0
        %651 = vmatprep.subr.bf16.mxu0 0
        %652 = vmatpush1.bf16.xpose.msra.mxu0 0
        %653 = vmatprep.subr.bf16.mxu0 0
        %654 = vmatpush1.bf16.xpose.msra.mxu0 0
        %655 = vmatprep.subr.bf16.mxu0 0
        %656 = vmatpush1.bf16.xpose.msra.mxu0 0
        %657 = vmatprep.subr.bf16.mxu0 0
        %658 = vmatpush1.bf16.xpose.msra.mxu0 0
        %659 = vmatprep.subr.bf16.mxu0 0
        %660 = vmatpush1.bf16.xpose.msra.mxu0 0
        %661 = vmatprep.subr.bf16.mxu0 0
        %662 = vmatpush1.bf16.xpose.msra.mxu0 0
        %663 = vmatprep.subr.bf16.mxu0 0
        %664 = vmatpush1.bf16.xpose.msra.mxu0 0
        %665 = vmatprep.subr.bf16.mxu0 0
        %666 = vmatpush1.bf16.xpose.msra.mxu0 0
        %667 = vmatprep.mubr.bf16.mxu0 0
        %668 = vmatmul.mubr.bf16.gmra.mrb[0].mxu0 %v624
        %v669 = vpop.f32.mrb[0].mxu0
        %v670 = vadd.f32 0.0, %v669
        %v671 = vpop.f32.mrb[0].mxu0
        %v672 = vpop.f32.mrb[0].mxu0
        %v673 = vadd.f32 0.0, %v672
        %v674 = vpop.f32.mrb[0].mxu0
        %675 = vmatprep.mubr.bf16.mxu0 0
        %676 = vmatmul.mubr.bf16.gmra.mrb[0].mxu0 %v627
        %v677 = vpop.f32.mrb[0].mxu0
        %v678 = vadd.f32 0.0, %v677
        %v679 = vpop.f32.mrb[0].mxu0
        %v680 = vpop.f32.mrb[0].mxu0
        %v681 = vpop.f32.mrb[0].mxu0
        %682 = vdwg.mxu0
        %v683 = vmul.f32 %v670, 0.125
        %v684 = vmul.f32 %v673, 0.125
        %v685 = vmul.f32 %v678, 0.125
        %v686 = vsel %vm490, %v683, -inf
        %v687 = vsel %vm490, %v684, -inf
        %v688 = vsel %vm490, %v685, -inf
        %v689 = vsel %vm494, %v686, -inf
        %690 = vmax.xlane.f32.xlu0 %v689
        %v691 = vpop.xlane.xlu0 %690
        %v692 = vsel %vm494, %v687, -inf
        %693 = vmax.xlane.f32.xlu0 %v692
        %v694 = vpop.xlane.xlu0 %693
        %v695 = vsel %vm494, %v688, -inf
        %696 = vmax.xlane.f32.xlu0 %v695
        %v697 = vpop.xlane.xlu0 %696
        %v698 = vsub.f32 -inf, %v691
        %v699 = vsub.f32 -inf, %v694
        %v700 = vsub.f32 -inf, %v697
        %v701 = vmul.f32 %v698, 1.442695
        %v702 = vpow.pop %v701
        %v703 = vmul.f32 %v699, 1.442695
        %v704 = vpow.pop %v703
        %v705 = vmul.f32 %v700, 1.442695
        %v706 = vpow.pop %v705
        %v707 = vsub.f32 %v686, %v691
        %v708 = vsub.f32 %v687, %v694
        %v709 = vsub.f32 %v688, %v697
        %v710 = vmul.f32 %v707, 1.442695
        %v711 = vpow.pop %v710
        %v712 = vmul.f32 %v708, 1.442695
        %v713 = vpow.pop %v712
        %v714 = vmul.f32 %v709, 1.442695
        %v715 = vpow.pop %v714
        %v716 = vmul.f32 %v702, 0.0
        %v717 = vmul.f32 %v704, 0.0
        %v718 = vmul.f32 %v706, 0.0
        %v719 = vsel %vm494, %v711, 0.0
        %720 = vadd.xlane.f32.xlu0 %v719
        %v721 = vpop.xlane.xlu0 %720
        %v722 = vsel %vm494, %v713, 0.0
        %723 = vadd.xlane.f32.xlu0 %v722
        %v724 = vpop.xlane.xlu0 %723
        %v725 = vsel %vm494, %v715, 0.0
        %726 = vadd.xlane.f32.xlu0 %v725
        %v727 = vpop.xlane.xlu0 %726
        %v728 = vadd.f32 %v716, %v721
        %v729 = vadd.f32 %v717, %v724
        %v730 = vadd.f32 %v718, %v727
        %v731 = vpack.c.bf16 %v713, %v711
        %v732 = vpack.c.bf16 %v715, %v715
        %733 = vrot.lane.b32.xlu0 %v545, 64
        %v734 = vpop.permute.xlu0 %733
        %735 = vrot.lane.b32.xlu0 %v546, 64
        %v736 = vpop.permute.xlu0 %735
        %v739 = vsel %vm494, %v731, 0
        %v742 = vsel %vm494, %v732, 0
        %v745 = vsel %vm554, %v736, 0
        %747 = vmatprep.subr.bf16.mxu0 0
        %748 = vmatpush1.bf16.msra.mxu0 %v734
        %749 = vmatprep.subr.bf16.mxu0 0
        %750 = vmatpush1.bf16.msra.mxu0 %v745
        %751 = vmatprep.subr.bf16.mxu0 0
        %752 = vmatpush1.bf16.msra.mxu0 0
        %753 = vmatprep.subr.bf16.mxu0 0
        %754 = vmatpush1.bf16.msra.mxu0 0
        %755 = vmatprep.subr.bf16.mxu0 0
        %756 = vmatpush1.bf16.msra.mxu0 0
        %757 = vmatprep.subr.bf16.mxu0 0
        %758 = vmatpush1.bf16.msra.mxu0 0
        %759 = vmatprep.subr.bf16.mxu0 0
        %760 = vmatpush1.bf16.msra.mxu0 0
        %761 = vmatprep.subr.bf16.mxu0 0
        %762 = vmatpush1.bf16.msra.mxu0 0
        %763 = vmatprep.subr.bf16.mxu0 0
        %764 = vmatpush1.bf16.msra.mxu0 0
        %765 = vmatprep.subr.bf16.mxu0 0
        %766 = vmatpush1.bf16.msra.mxu0 0
        %767 = vmatprep.subr.bf16.mxu0 0
        %768 = vmatpush1.bf16.msra.mxu0 0
        %769 = vmatprep.subr.bf16.mxu0 0
        %770 = vmatpush1.bf16.msra.mxu0 0
        %771 = vmatprep.subr.bf16.mxu0 0
        %772 = vmatpush1.bf16.msra.mxu0 0
        %773 = vmatprep.subr.bf16.mxu0 0
        %774 = vmatpush1.bf16.msra.mxu0 0
        %775 = vmatprep.subr.bf16.mxu0 0
        %776 = vmatpush1.bf16.msra.mxu0 0
        %777 = vmatprep.subr.bf16.mxu0 0
        %778 = vmatpush1.bf16.msra.mxu0 0
        %779 = vmatprep.mubr.bf16.mxu0 0
        %780 = vmatmul.mubr.bf16.gmra.mrb[0].mxu0 %v739
        %v781 = vpop.f32.mrb[0].mxu0
        %v782 = vadd.f32 0.0, %v781
        %v783 = vpop.f32.mrb[0].mxu0
        %v784 = vpop.f32.mrb[0].mxu0
        %v785 = vadd.f32 0.0, %v784
        %v786 = vpop.f32.mrb[0].mxu0
        %787 = vmatprep.mubr.bf16.mxu0 0
        %788 = vmatmul.mubr.bf16.gmra.mrb[0].mxu0 %v742
        %v789 = vpop.f32.mrb[0].mxu0
        %v790 = vadd.f32 0.0, %v789
        %v791 = vpop.f32.mrb[0].mxu0
        %v792 = vpop.f32.mrb[0].mxu0
        %v793 = vpop.f32.mrb[0].mxu0
        %794 = vdwg.mxu0
        %v795 = vadd.f32 %v716, %v782
        %v796 = vadd.f32 %v717, %v785
        %v797 = vadd.f32 %v718, %v790
        %v798 = vrcp.pop %v728
        %v799 = vrcp.pop %v729
        %v800 = vrcp.pop %v730
        %v801 = vmul.f32 %v795, %v798
        %v802 = vmul.f32 %v796, %v799
        %v803 = vmul.f32 %v797, %v800
        %807 = vrot.lane.b32.xlu0 %v801, 64
        %v808 = vpop.permute.xlu0 %807
        %809 = vrot.lane.b32.xlu0 %v802, 64
        %v810 = vpop.permute.xlu0 %809
        %811 = vrot.lane.b32.xlu0 %v803, 64
        %v812 = vpop.permute.xlu0 %811
        %v816 = vsel %vm424, %v612, %v808
        %v817 = vsel %vm424, %v613, %v810
        %v818 = vsel %vm424, %v614, %v812
        %v819 = vpack.c.bf16 %v817, %v816
        %v820 = vpack.c.bf16 %v818, %v818
        %v823 = vunpack.c.l.b16 %v819
        %v824 = vunpack.c.h.b16 %v819
        %v825 = vunpack.c.l.b16 %v820
        %v826 = vpack.c.b16 %v823, %v823
        %v827 = vpack.c.b16 %v824, %v824
        %v828 = vpack.c.b16 %v825, %v825
        %832 = vst [vmem:[%s397] sm:$0xf] %v826
        %833 = vst [vmem:[%s397 + $0x4] sm:$0xf] %v827
        %834 = vst [vmem:[%s397 + $0x8] sm:$0xf] %v828
        %p835 = scmp.lt.s32.totalorder %s18, 1
        %s836 = scalar_select %p835, %s18, 1
        %p837 = scmp.lt.s32.totalorder %s19, 0
        %s838 = scalar_select %p837, %s19, 0
        %s839 = smul.addr %s836, 3
        %s840 = sadd.s32 %s838, %s839
        %s841 = smul.addr %s840, 4
        %s842 = scalar_lea.vmem %s3, %s841
        // Predicated region
        $region156: #{dino_v2_encoder_lora_forward.15} parent=142 // pred_check
          %p843 = pneg %p134
        $region157: #{dino_v2_encoder_lora_forward.15} parent=142 // pred_check_branch
          %845 = sbr.rel (%p843) target = $region159
        $region158: #{dino_v2_encoder_lora_forward.15} parent=142 // pred_region
          _
        $region159: #{dino_v2_encoder_lora_forward.15} parent=142 // pred_fallthru
          _
      $region143: #{dino_v2_encoder_lora_forward.15} parent=5 // pred_fallthru
        _
      %p846 = scmp.le.s32.totalorder 2, %s9
      // Predicated region
      $region160: #{dino_v2_encoder_lora_forward.15} parent=5 // pred_check
        %p847 = pneg %p846
      $region161: #{dino_v2_encoder_lora_forward.15} parent=5 // pred_check_branch
        %849 = sbr.rel (%p847) target = $region163
      $region162: #{dino_v2_encoder_lora_forward.15} parent=5 // pred_region
        %s850 = ssub.s32 %s9, 2
        // Predicated region
        $region164: #{dino_v2_encoder_lora_forward.15} parent=162 // pred_check
          %p851 = pneg %p140
        $region165: #{dino_v2_encoder_lora_forward.15} parent=162 // pred_check_branch
          %853 = sbr.rel (%p851) target = $region167
        $region166: #{dino_v2_encoder_lora_forward.15} parent=162 // pred_region
          %p854 = scmp.lt.s32.totalorder %s20, 1
          %s855 = scalar_select %p854, %s20, 1
          %p856 = scmp.lt.s32.totalorder %s21, 0
          %s857 = scalar_select %p856, %s21, 0
          %s858 = smul.addr %s855, 3
          %s859 = sadd.s32 %s857, %s858
          %s860 = smul.addr %s859, 4
          %s861 = scalar_lea.vmem %s3, %s860
        $region167: #{dino_v2_encoder_lora_forward.15} parent=162 // pred_fallthru
          _
      $region163: #{dino_v2_encoder_lora_forward.15} parent=5 // pred_fallthru
        _
    $region6: #{dino_v2_encoder_lora_forward.15} parent=1 // loop_footer
      %s13 = sadd.s32 1, %s9
    $region7: #{dino_v2_encoder_lora_forward.15} parent=1 // loop_footer_branch
      %8 = sbr.rel target = $region3
    $region8: #{dino_v2_encoder_lora_forward.15} parent=1 // loop_exit
      _

// kernel: dino_v2_encoder_lora_forward.14
$region0: #{dino_v2_encoder_lora_forward.14}
  #allocation0 [shape = 'u32[]', space=smem, size = 0x4, offset = 0x4, fixed_abs, tag = 'smem constant byte address 0x4 - core index']
  #allocation1 [shape = 'u32[144,128]{1,0:T(1,128)}', space=vmem, size = 0x12000, scoped, tag = 'internal scratch']
  %s0 = inlined_call_operand.vmem [shape: f32[48,128], index: 0, kind: input, shape index: {}]
  %s1 = inlined_call_operand.vmem [shape: f32[1,128], index: 1, kind: input, shape index: {}]
  %s2 = inlined_call_operand.vmem [shape: f32[1,128], index: 2, kind: input, shape index: {}]
  %s3 = inlined_call_operand.vmem [shape: bf16[128,384], index: 3, kind: input, shape index: {}]
  %s4 = inlined_call_operand.vmem [shape: f32[1,384], index: 4, kind: input, shape index: {}]
  %s5 = inlined_call_operand.vmem [shape: bf16[48,384], index: 5, kind: output, shape index: {}]
  %s6 = sld [smem:[#allocation0]]
  $region30: #{dino_v2_encoder_lora_forward.14} parent=0
    _
  %s8 = ssub.s32 1, %s6
  %s9 = scalar_select 0, %s8, %s6
  // Predicated region
  $region2: #{dino_v2_encoder_lora_forward.14} parent=0 // pred_check
    _
  $region3: #{dino_v2_encoder_lora_forward.14} parent=0 // pred_check_branch
    %11 = sbr.rel (0) target = $region5
  $region4: #{dino_v2_encoder_lora_forward.14} parent=0 // pred_region
    _
  $region5: #{dino_v2_encoder_lora_forward.14} parent=0 // pred_fallthru
    _
  // Predicated region
  $region6: #{dino_v2_encoder_lora_forward.14} parent=0 // pred_check
    _
  $region7: #{dino_v2_encoder_lora_forward.14} parent=0 // pred_check_branch
    %13 = sbr.rel (0) target = $region9
  $region8: #{dino_v2_encoder_lora_forward.14} parent=0 // pred_region
    _
  $region9: #{dino_v2_encoder_lora_forward.14} parent=0 // pred_fallthru
    _
  // Predicated region
  $region10: #{dino_v2_encoder_lora_forward.14} parent=0 // pred_check
    _
  $region11: #{dino_v2_encoder_lora_forward.14} parent=0 // pred_check_branch
    %15 = sbr.rel (0) target = $region13
  $region12: #{dino_v2_encoder_lora_forward.14} parent=0 // pred_region
    _
  $region13: #{dino_v2_encoder_lora_forward.14} parent=0 // pred_fallthru
    _
  // Predicated region
  $region14: #{dino_v2_encoder_lora_forward.14} parent=0 // pred_check
    _
  $region15: #{dino_v2_encoder_lora_forward.14} parent=0 // pred_check_branch
    %17 = sbr.rel (0) target = $region17
  $region16: #{dino_v2_encoder_lora_forward.14} parent=0 // pred_region
    _
  $region17: #{dino_v2_encoder_lora_forward.14} parent=0 // pred_fallthru
    _
  // Predicated region
  $region18: #{dino_v2_encoder_lora_forward.14} parent=0 // pred_check
    _
  $region19: #{dino_v2_encoder_lora_forward.14} parent=0 // pred_check_branch
    %19 = sbr.rel (0) target = $region21
  $region20: #{dino_v2_encoder_lora_forward.14} parent=0 // pred_region
    _
  $region21: #{dino_v2_encoder_lora_forward.14} parent=0 // pred_fallthru
    _
  %v21 = vld [vmem:[%s0] sm:$0xff]
  %v22 = vld [vmem:[%s0 + $0x8] sm:$0xff]
  %v23 = vld [vmem:[%s0 + $0x10] sm:$0xff]
  %v24 = vld [vmem:[%s0 + $0x18] sm:$0xff]
  %v25 = vld [vmem:[%s0 + $0x20] sm:$0xff]
  %v26 = vld [vmem:[%s0 + $0x28] sm:$0xff]
  %27 = vadd.xlane.f32.xlu0 %v21
  %v28 = vpop.xlane.xlu0 %27
  %29 = vadd.xlane.f32.xlu0 %v22
  %v30 = vpop.xlane.xlu0 %29
  %31 = vadd.xlane.f32.xlu0 %v23
  %v32 = vpop.xlane.xlu0 %31
  %33 = vadd.xlane.f32.xlu0 %v24
  %v34 = vpop.xlane.xlu0 %33
  %35 = vadd.xlane.f32.xlu0 %v25
  %v36 = vpop.xlane.xlu0 %35
  %37 = vadd.xlane.f32.xlu0 %v26
  %v38 = vpop.xlane.xlu0 %37
  %v39 = vrcp.pop 128.0
  %v40 = vmul.f32 %v28, %v39
  %v41 = vmul.f32 %v30, %v39
  %v42 = vmul.f32 %v32, %v39
  %v43 = vmul.f32 %v34, %v39
  %v44 = vmul.f32 %v36, %v39
  %v45 = vmul.f32 %v38, %v39
  %v46 = vsub.f32 %v21, %v40
  %v47 = vsub.f32 %v22, %v41
  %v48 = vsub.f32 %v23, %v42
  %v49 = vsub.f32 %v24, %v43
  %v50 = vsub.f32 %v25, %v44
  %v51 = vsub.f32 %v26, %v45
  %v52 = vmul.f32 %v46, %v46
  %v53 = vmul.f32 %v47, %v47
  %v54 = vmul.f32 %v48, %v48
  %v55 = vmul.f32 %v49, %v49
  %v56 = vmul.f32 %v50, %v50
  %v57 = vmul.f32 %v51, %v51
  %58 = vadd.xlane.f32.xlu0 %v52
  %v59 = vpop.xlane.xlu0 %58
  %60 = vadd.xlane.f32.xlu0 %v53
  %v61 = vpop.xlane.xlu0 %60
  %62 = vadd.xlane.f32.xlu0 %v54
  %v63 = vpop.xlane.xlu0 %62
  %64 = vadd.xlane.f32.xlu0 %v55
  %v65 = vpop.xlane.xlu0 %64
  %66 = vadd.xlane.f32.xlu0 %v56
  %v67 = vpop.xlane.xlu0 %66
  %68 = vadd.xlane.f32.xlu0 %v57
  %v69 = vpop.xlane.xlu0 %68
  %v70 = vmul.f32 %v59, %v39
  %v71 = vmul.f32 %v61, %v39
  %v72 = vmul.f32 %v63, %v39
  %v73 = vmul.f32 %v65, %v39
  %v74 = vmul.f32 %v67, %v39
  %v75 = vmul.f32 %v69, %v39
  %v76 = vadd.f32 %v70, 1e-06
  %v77 = vadd.f32 %v71, 1e-06
  %v78 = vadd.f32 %v72, 1e-06
  %v79 = vadd.f32 %v73, 1e-06
  %v80 = vadd.f32 %v74, 1e-06
  %v81 = vadd.f32 %v75, 1e-06
  %v82 = vrsqrt.pop %v76
  %v83 = vrsqrt.pop %v77
  %v84 = vrsqrt.pop %v78
  %v85 = vrsqrt.pop %v79
  %v86 = vrsqrt.pop %v80
  %v87 = vrsqrt.pop %v81
  %v88 = vmul.f32 %v46, %v82
  %v89 = vmul.f32 %v47, %v83
  %v90 = vmul.f32 %v48, %v84
  %v91 = vmul.f32 %v49, %v85
  %v92 = vmul.f32 %v50, %v86
  %v93 = vmul.f32 %v51, %v87
  %v94 = vld [vmem:[%s1] sm:$0x1]
  %v96 = vlaneseq
  %v97 = vshrl.u32 %v96, 7
  %v98 = vsub.s32 0, %v97
  %v99 = vrot.slane %v94, %v98
  %v101 = vmul.f32 %v88, %v99
  %v102 = vmul.f32 %v89, %v99
  %v103 = vmul.f32 %v90, %v99
  %v104 = vmul.f32 %v91, %v99
  %v105 = vmul.f32 %v92, %v99
  %v106 = vmul.f32 %v93, %v99
  %v107 = vld [vmem:[%s2] sm:$0x1]
  %v109 = vlaneseq
  %v110 = vshrl.u32 %v109, 7
  %v111 = vsub.s32 0, %v110
  %v112 = vrot.slane %v107, %v111
  %v114 = vadd.f32 %v101, %v112
  %v115 = vadd.f32 %v102, %v112
  %v116 = vadd.f32 %v103, %v112
  %v117 = vadd.f32 %v104, %v112
  %v118 = vadd.f32 %v105, %v112
  %v119 = vadd.f32 %v106, %v112
  %v120 = vpack.c.bf16 %v115, %v114
  %v121 = vpack.c.bf16 %v117, %v116
  %v122 = vpack.c.bf16 %v119, %v118
  %v123 = vld [vmem:[%s3] sm:$0xff]
  %v124 = vld [vmem:[%s3 + $0x8] sm:$0xf]
  %v125 = vld [vmem:[%s3 + $0xc] sm:$0xff]
  %v126 = vld [vmem:[%s3 + $0x14] sm:$0xf]
  %v127 = vld [vmem:[%s3 + $0x18] sm:$0xff]
  %v128 = vld [vmem:[%s3 + $0x20] sm:$0xf]
  %v129 = vld [vmem:[%s3 + $0x24] sm:$0xff]
  %v130 = vld [vmem:[%s3 + $0x2c] sm:$0xf]
  %v131 = vld [vmem:[%s3 + $0x30] sm:$0xff]
  %v132 = vld [vmem:[%s3 + $0x38] sm:$0xf]
  %v133 = vld [vmem:[%s3 + $0x3c] sm:$0xff]
  %v134 = vld [vmem:[%s3 + $0x44] sm:$0xf]
  %v135 = vld [vmem:[%s3 + $0x48] sm:$0xff]
  %v136 = vld [vmem:[%s3 + $0x50] sm:$0xf]
  %v137 = vld [vmem:[%s3 + $0x54] sm:$0xff]
  %v138 = vld [vmem:[%s3 + $0x5c] sm:$0xf]
  %v139 = vld [vmem:[%s3 + $0x60] sm:$0xff]
  %v140 = vld [vmem:[%s3 + $0x68] sm:$0xf]
  %v141 = vld [vmem:[%s3 + $0x6c] sm:$0xff]
  %v142 = vld [vmem:[%s3 + $0x74] sm:$0xf]
  %v143 = vld [vmem:[%s3 + $0x78] sm:$0xff]
  %v144 = vld [vmem:[%s3 + $0x80] sm:$0xf]
  %v145 = vld [vmem:[%s3 + $0x84] sm:$0xff]
  %v146 = vld [vmem:[%s3 + $0x8c] sm:$0xf]
  %v147 = vld [vmem:[%s3 + $0x90] sm:$0xff]
  %v148 = vld [vmem:[%s3 + $0x98] sm:$0xf]
  %v149 = vld [vmem:[%s3 + $0x9c] sm:$0xff]
  %v150 = vld [vmem:[%s3 + $0xa4] sm:$0xf]
  %v151 = vld [vmem:[%s3 + $0xa8] sm:$0xff]
  %v152 = vld [vmem:[%s3 + $0xb0] sm:$0xf]
  %v153 = vld [vmem:[%s3 + $0xb4] sm:$0xff]
  %v154 = vld [vmem:[%s3 + $0xbc] sm:$0xf]
  %v155 = vld [vmem:[%s4] sm:$0x7]
  %v157 = vlaneseq
  %v158 = vshrl.u32 %v157, 7
  %v159 = vsub.s32 0, %v158
  %v160 = vrot.slane %v155, %v159
  %v161 = vlaneseq
  %v162 = vshrl.u32 %v161, 7
  %v163 = vsub.s32 1, %v162
  %v164 = vrot.slane %v155, %v163
  %v165 = vlaneseq
  %v166 = vshrl.u32 %v165, 7
  %v167 = vsub.s32 2, %v166
  %v168 = vrot.slane %v155, %v167
  %v204 = vunpack.c.l.b16 %v123
  %v205 = vunpack.c.h.b16 %v123
  %v206 = vunpack.c.l.b16 %v124
  %v207 = vunpack.c.l.b16 %v125
  %v208 = vunpack.c.h.b16 %v125
  %v209 = vunpack.c.l.b16 %v126
  %v210 = vunpack.c.l.b16 %v127
  %v211 = vunpack.c.h.b16 %v127
  %v212 = vunpack.c.l.b16 %v128
  %v213 = vunpack.c.l.b16 %v129
  %v214 = vunpack.c.h.b16 %v129
  %v215 = vunpack.c.l.b16 %v130
  %v216 = vunpack.c.l.b16 %v131
  %v217 = vunpack.c.h.b16 %v131
  %v218 = vunpack.c.l.b16 %v132
  %v219 = vunpack.c.l.b16 %v133
  %v220 = vunpack.c.h.b16 %v133
  %v221 = vunpack.c.l.b16 %v134
  %v222 = vunpack.c.l.b16 %v135
  %v223 = vunpack.c.h.b16 %v135
  %v224 = vunpack.c.l.b16 %v136
  %v225 = vunpack.c.l.b16 %v137
  %v226 = vunpack.c.h.b16 %v137
  %v227 = vunpack.c.l.b16 %v138
  %v228 = vunpack.c.l.b16 %v139
  %v229 = vunpack.c.h.b16 %v139
  %v230 = vunpack.c.l.b16 %v140
  %v231 = vunpack.c.l.b16 %v141
  %v232 = vunpack.c.h.b16 %v141
  %v233 = vunpack.c.l.b16 %v142
  %v234 = vunpack.c.l.b16 %v143
  %v235 = vunpack.c.h.b16 %v143
  %v236 = vunpack.c.l.b16 %v144
  %v237 = vunpack.c.l.b16 %v145
  %v238 = vunpack.c.h.b16 %v145
  %v239 = vunpack.c.l.b16 %v146
  %v240 = vunpack.c.l.b16 %v147
  %v241 = vunpack.c.h.b16 %v147
  %v242 = vunpack.c.l.b16 %v148
  %v243 = vunpack.c.l.b16 %v149
  %v244 = vunpack.c.h.b16 %v149
  %v245 = vunpack.c.l.b16 %v150
  %v246 = vunpack.c.l.b16 %v151
  %v247 = vunpack.c.h.b16 %v151
  %v248 = vunpack.c.l.b16 %v152
  %v249 = vunpack.c.l.b16 %v153
  %v250 = vunpack.c.h.b16 %v153
  %v251 = vunpack.c.l.b16 %v154
  %v252 = vpack.c.b16 %v207, %v204
  %v253 = vpack.c.b16 %v208, %v205
  %v254 = vpack.c.b16 %v209, %v206
  %v255 = vpack.c.b16 %v213, %v210
  %v256 = vpack.c.b16 %v214, %v211
  %v257 = vpack.c.b16 %v215, %v212
  %v258 = vpack.c.b16 %v219, %v216
  %v259 = vpack.c.b16 %v220, %v217
  %v260 = vpack.c.b16 %v221, %v218
  %v261 = vpack.c.b16 %v225, %v222
  %v262 = vpack.c.b16 %v226, %v223
  %v263 = vpack.c.b16 %v227, %v224
  %v264 = vpack.c.b16 %v231, %v228
  %v265 = vpack.c.b16 %v232, %v229
  %v266 = vpack.c.b16 %v233, %v230
  %v267 = vpack.c.b16 %v237, %v234
  %v268 = vpack.c.b16 %v238, %v235
  %v269 = vpack.c.b16 %v239, %v236
  %v270 = vpack.c.b16 %v243, %v240
  %v271 = vpack.c.b16 %v244, %v241
  %v272 = vpack.c.b16 %v245, %v242
  %v273 = vpack.c.b16 %v249, %v246
  %v274 = vpack.c.b16 %v250, %v247
  %v275 = vpack.c.b16 %v251, %v248
  %300 = vmatprep.subr.bf16.mxu0 %v253
  %301 = vmatpush1.bf16.msra.mxu0 %v252
  %302 = vmatprep.subr.bf16.mxu0 %v256
  %303 = vmatpush1.bf16.msra.mxu0 %v255
  %304 = vmatprep.subr.bf16.mxu0 %v259
  %305 = vmatpush1.bf16.msra.mxu0 %v258
  %306 = vmatprep.subr.bf16.mxu0 %v262
  %307 = vmatpush1.bf16.msra.mxu0 %v261
  %308 = vmatprep.subr.bf16.mxu0 %v265
  %309 = vmatpush1.bf16.msra.mxu0 %v264
  %310 = vmatprep.subr.bf16.mxu0 %v268
  %311 = vmatpush1.bf16.msra.mxu0 %v267
  %312 = vmatprep.subr.bf16.mxu0 %v271
  %313 = vmatpush1.bf16.msra.mxu0 %v270
  %314 = vmatprep.subr.bf16.mxu0 %v274
  %315 = vmatpush1.bf16.msra.mxu0 %v273
  %316 = vmatprep.subr.bf16.mxu0 0
  %317 = vmatpush1.bf16.msra.mxu0 0
  %318 = vmatprep.subr.bf16.mxu0 0
  %319 = vmatpush1.bf16.msra.mxu0 0
  %320 = vmatprep.subr.bf16.mxu0 0
  %321 = vmatpush1.bf16.msra.mxu0 0
  %322 = vmatprep.subr.bf16.mxu0 0
  %323 = vmatpush1.bf16.msra.mxu0 0
  %324 = vmatprep.subr.bf16.mxu0 0
  %325 = vmatpush1.bf16.msra.mxu0 0
  %326 = vmatprep.subr.bf16.mxu0 0
  %327 = vmatpush1.bf16.msra.mxu0 0
  %328 = vmatprep.subr.bf16.mxu0 0
  %329 = vmatpush1.bf16.msra.mxu0 0
  %330 = vmatprep.subr.bf16.mxu0 0
  %331 = vmatpush1.bf16.msra.mxu0 0
  %332 = vmatprep.mubr.bf16.mxu0 0
  %333 = vmatmul.mubr.bf16.gmra.mrb[0].mxu0 %v120
  %v334 = vpop.f32.mrb[0].mxu0
  %v335 = vadd.f32 %v160, %v334
  %v336 = vpop.f32.mrb[0].mxu0
  %v337 = vadd.f32 %v164, %v336
  %v338 = vpop.f32.mrb[0].mxu0
  %v339 = vadd.f32 %v160, %v338
  %v340 = vpop.f32.mrb[0].mxu0
  %v341 = vadd.f32 %v164, %v340
  %342 = vmatprep.mubr.bf16.mxu0 0
  %343 = vmatmul.mubr.bf16.gmra.mrb[0].mxu0 %v121
  %v344 = vpop.f32.mrb[0].mxu0
  %v345 = vadd.f32 %v160, %v344
  %v346 = vpop.f32.mrb[0].mxu0
  %v347 = vadd.f32 %v164, %v346
  %v348 = vpop.f32.mrb[0].mxu0
  %v349 = vadd.f32 %v160, %v348
  %v350 = vpop.f32.mrb[0].mxu0
  %v351 = vadd.f32 %v164, %v350
  %352 = vmatprep.mubr.bf16.mxu0 0
  %353 = vmatmul.mubr.bf16.gmra.mrb[0].mxu0 %v122
  %v354 = vpop.f32.mrb[0].mxu0
  %v355 = vadd.f32 %v160, %v354
  %v356 = vpop.f32.mrb[0].mxu0
  %v357 = vadd.f32 %v164, %v356
  %v358 = vpop.f32.mrb[0].mxu0
  %v359 = vadd.f32 %v160, %v358
  %v360 = vpop.f32.mrb[0].mxu0
  %v361 = vadd.f32 %v164, %v360
  %362 = vdwg.mxu0
  %363 = vmatprep.subr.bf16.mxu0 0
  %364 = vmatpush1.bf16.msra.mxu0 %v254
  %365 = vmatprep.subr.bf16.mxu0 0
  %366 = vmatpush1.bf16.msra.mxu0 %v257
  %367 = vmatprep.subr.bf16.mxu0 0
  %368 = vmatpush1.bf16.msra.mxu0 %v260
  %369 = vmatprep.subr.bf16.mxu0 0
  %370 = vmatpush1.bf16.msra.mxu0 %v263
  %371 = vmatprep.subr.bf16.mxu0 0
  %372 = vmatpush1.bf16.msra.mxu0 %v266
  %373 = vmatprep.subr.bf16.mxu0 0
  %374 = vmatpush1.bf16.msra.mxu0 %v269
  %375 = vmatprep.subr.bf16.mxu0 0
  %376 = vmatpush1.bf16.msra.mxu0 %v272
  %377 = vmatprep.subr.bf16.mxu0 0
  %378 = vmatpush1.bf16.msra.mxu0 %v275
  %379 = vmatprep.subr.bf16.mxu0 0
  %380 = vmatpush1.bf16.msra.mxu0 0
  %381 = vmatprep.subr.bf16.mxu0 0
  %382 = vmatpush1.bf16.msra.mxu0 0
  %383 = vmatprep.subr.bf16.mxu0 0
  %384 = vmatpush1.bf16.msra.mxu0 0
  %385 = vmatprep.subr.bf16.mxu0 0
  %386 = vmatpush1.bf16.msra.mxu0 0
  %387 = vmatprep.subr.bf16.mxu0 0
  %388 = vmatpush1.bf16.msra.mxu0 0
  %389 = vmatprep.subr.bf16.mxu0 0
  %390 = vmatpush1.bf16.msra.mxu0 0
  %391 = vmatprep.subr.bf16.mxu0 0
  %392 = vmatpush1.bf16.msra.mxu0 0
  %393 = vmatprep.subr.bf16.mxu0 0
  %394 = vmatpush1.bf16.msra.mxu0 0
  %395 = vmatprep.mubr.bf16.mxu0 0
  %396 = vmatmul.mubr.bf16.gmra.mrb[0].mxu0 %v120
  %v397 = vpop.f32.mrb[0].mxu0
  %v398 = vadd.f32 %v168, %v397
  %v399 = vpop.f32.mrb[0].mxu0
  %v400 = vpop.f32.mrb[0].mxu0
  %v401 = vadd.f32 %v168, %v400
  %v402 = vpop.f32.mrb[0].mxu0
  %403 = vmatprep.mubr.bf16.mxu0 0
  %404 = vmatmul.mubr.bf16.gmra.mrb[0].mxu0 %v121
  %v405 = vpop.f32.mrb[0].mxu0
  %v406 = vadd.f32 %v168, %v405
  %v407 = vpop.f32.mrb[0].mxu0
  %v408 = vpop.f32.mrb[0].mxu0
  %v409 = vadd.f32 %v168, %v408
  %v410 = vpop.f32.mrb[0].mxu0
  %411 = vmatprep.mubr.bf16.mxu0 0
  %412 = vmatmul.mubr.bf16.gmra.mrb[0].mxu0 %v122
  %v413 = vpop.f32.mrb[0].mxu0
  %v414 = vadd.f32 %v168, %v413
  %v415 = vpop.f32.mrb[0].mxu0
  %v416 = vpop.f32.mrb[0].mxu0
  %v417 = vadd.f32 %v168, %v416
  %v418 = vpop.f32.mrb[0].mxu0
  %419 = vdwg.mxu0
  %v420 = vpack.c.bf16 %v339, %v335
  %v421 = vpack.c.bf16 %v341, %v337
  %v422 = vpack.c.bf16 %v401, %v398
  %v423 = vpack.c.bf16 %v349, %v345
  %v424 = vpack.c.bf16 %v351, %v347
  %v425 = vpack.c.bf16 %v409, %v406
  %v426 = vpack.c.bf16 %v359, %v355
  %v427 = vpack.c.bf16 %v361, %v357
  %v428 = vpack.c.bf16 %v417, %v414
  %v438 = vunpack.c.l.b16 %v420
  %v439 = vunpack.c.l.b16 %v421
  %v440 = vunpack.c.l.b16 %v422
  %v441 = vunpack.c.h.b16 %v420
  %v442 = vunpack.c.h.b16 %v421
  %v443 = vunpack.c.h.b16 %v422
  %v444 = vunpack.c.l.b16 %v423
  %v445 = vunpack.c.l.b16 %v424
  %v446 = vunpack.c.l.b16 %v425
  %v447 = vunpack.c.h.b16 %v423
  %v448 = vunpack.c.h.b16 %v424
  %v449 = vunpack.c.h.b16 %v425
  %v450 = vunpack.c.l.b16 %v426
  %v451 = vunpack.c.l.b16 %v427
  %v452 = vunpack.c.l.b16 %v428
  %v453 = vunpack.c.h.b16 %v426
  %v454 = vunpack.c.h.b16 %v427
  %v455 = vunpack.c.h.b16 %v428
  %v456 = vpack.c.b16 %v439, %v438
  %v457 = vpack.c.b16 %v440, %v440
  %v458 = vpack.c.b16 %v442, %v441
  %v459 = vpack.c.b16 %v443, %v443
  %v460 = vpack.c.b16 %v445, %v444
  %v461 = vpack.c.b16 %v446, %v446
  %v462 = vpack.c.b16 %v448, %v447
  %v463 = vpack.c.b16 %v449, %v449
  %v464 = vpack.c.b16 %v451, %v450
  %v465 = vpack.c.b16 %v452, %v452
  %v466 = vpack.c.b16 %v454, %v453
  %v467 = vpack.c.b16 %v455, %v455
  %480 = vst [vmem:[%s5] sm:$0xff] %v456
  %481 = vst [vmem:[%s5 + $0x8] sm:$0xf] %v457
  %482 = vst [vmem:[%s5 + $0xc] sm:$0xff] %v458
  %483 = vst [vmem:[%s5 + $0x14] sm:$0xf] %v459
  %484 = vst [vmem:[%s5 + $0x18] sm:$0xff] %v460
  %485 = vst [vmem:[%s5 + $0x20] sm:$0xf] %v461
  %486 = vst [vmem:[%s5 + $0x24] sm:$0xff] %v462
  %487 = vst [vmem:[%s5 + $0x2c] sm:$0xf] %v463
  %488 = vst [vmem:[%s5 + $0x30] sm:$0xff] %v464
  %489 = vst [vmem:[%s5 + $0x38] sm:$0xf] %v465
  %490 = vst [vmem:[%s5 + $0x3c] sm:$0xff] %v466
  %491 = vst [vmem:[%s5 + $0x44] sm:$0xf] %v467
  // Predicated region
  $region22: #{dino_v2_encoder_lora_forward.14} parent=0 // pred_check
    _
  $region23: #{dino_v2_encoder_lora_forward.14} parent=0 // pred_check_branch
    %493 = sbr.rel (0) target = $region25
  $region24: #{dino_v2_encoder_lora_forward.14} parent=0 // pred_region
    _
  $region25: #{dino_v2_encoder_lora_forward.14} parent=0 // pred_fallthru
    _
  // Predicated region
  $region26: #{dino_v2_encoder_lora_forward.14} parent=0 // pred_check
    _
  $region27: #{dino_v2_encoder_lora_forward.14} parent=0 // pred_check_branch
    %495 = sbr.rel (0) target = $region29
  $region28: #{dino_v2_encoder_lora_forward.14} parent=0 // pred_region
    _
  $region29: #{dino_v2_encoder_lora_forward.14} parent=0 // pred_fallthru
    _

// kernel: dino_v2_encoder_lora_forward.17
$region0: #{dino_v2_encoder_lora_forward.17}
  #allocation0 [shape = 'u32[]', space=smem, size = 0x4, offset = 0x4, fixed_abs, tag = 'smem constant byte address 0x4 - core index']
  #allocation1 [shape = 'u32[144,128]{1,0:T(1,128)}', space=vmem, size = 0x12000, scoped, tag = 'internal scratch']
  %s0 = inlined_call_operand.vmem [shape: f32[48,128], index: 0, kind: input, shape index: {}]
  %s1 = inlined_call_operand.vmem [shape: f32[1,128], index: 1, kind: input, shape index: {}]
  %s2 = inlined_call_operand.vmem [shape: f32[1,128], index: 2, kind: input, shape index: {}]
  %s3 = inlined_call_operand.vmem [shape: bf16[128,256], index: 3, kind: input, shape index: {}]
  %s4 = inlined_call_operand.vmem [shape: f32[1,256], index: 4, kind: input, shape index: {}]
  %s5 = inlined_call_operand.vmem [shape: bf16[48,256], index: 5, kind: output, shape index: {}]
  %s6 = sld [smem:[#allocation0]]
  $region30: #{dino_v2_encoder_lora_forward.17} parent=0
    _
  %s8 = ssub.s32 1, %s6
  %s9 = scalar_select 0, %s8, %s6
  // Predicated region
  $region2: #{dino_v2_encoder_lora_forward.17} parent=0 // pred_check
    _
  $region3: #{dino_v2_encoder_lora_forward.17} parent=0 // pred_check_branch
    %11 = sbr.rel (0) target = $region5
  $region4: #{dino_v2_encoder_lora_forward.17} parent=0 // pred_region
    _
  $region5: #{dino_v2_encoder_lora_forward.17} parent=0 // pred_fallthru
    _
  // Predicated region
  $region6: #{dino_v2_encoder_lora_forward.17} parent=0 // pred_check
    _
  $region7: #{dino_v2_encoder_lora_forward.17} parent=0 // pred_check_branch
    %13 = sbr.rel (0) target = $region9
  $region8: #{dino_v2_encoder_lora_forward.17} parent=0 // pred_region
    _
  $region9: #{dino_v2_encoder_lora_forward.17} parent=0 // pred_fallthru
    _
  // Predicated region
  $region10: #{dino_v2_encoder_lora_forward.17} parent=0 // pred_check
    _
  $region11: #{dino_v2_encoder_lora_forward.17} parent=0 // pred_check_branch
    %15 = sbr.rel (0) target = $region13
  $region12: #{dino_v2_encoder_lora_forward.17} parent=0 // pred_region
    _
  $region13: #{dino_v2_encoder_lora_forward.17} parent=0 // pred_fallthru
    _
  // Predicated region
  $region14: #{dino_v2_encoder_lora_forward.17} parent=0 // pred_check
    _
  $region15: #{dino_v2_encoder_lora_forward.17} parent=0 // pred_check_branch
    %17 = sbr.rel (0) target = $region17
  $region16: #{dino_v2_encoder_lora_forward.17} parent=0 // pred_region
    _
  $region17: #{dino_v2_encoder_lora_forward.17} parent=0 // pred_fallthru
    _
  // Predicated region
  $region18: #{dino_v2_encoder_lora_forward.17} parent=0 // pred_check
    _
  $region19: #{dino_v2_encoder_lora_forward.17} parent=0 // pred_check_branch
    %19 = sbr.rel (0) target = $region21
  $region20: #{dino_v2_encoder_lora_forward.17} parent=0 // pred_region
    _
  $region21: #{dino_v2_encoder_lora_forward.17} parent=0 // pred_fallthru
    _
  %v21 = vld [vmem:[%s0] sm:$0xff]
  %v22 = vld [vmem:[%s0 + $0x8] sm:$0xff]
  %v23 = vld [vmem:[%s0 + $0x10] sm:$0xff]
  %v24 = vld [vmem:[%s0 + $0x18] sm:$0xff]
  %v25 = vld [vmem:[%s0 + $0x20] sm:$0xff]
  %v26 = vld [vmem:[%s0 + $0x28] sm:$0xff]
  %27 = vadd.xlane.f32.xlu0 %v21
  %v28 = vpop.xlane.xlu0 %27
  %29 = vadd.xlane.f32.xlu0 %v22
  %v30 = vpop.xlane.xlu0 %29
  %31 = vadd.xlane.f32.xlu0 %v23
  %v32 = vpop.xlane.xlu0 %31
  %33 = vadd.xlane.f32.xlu0 %v24
  %v34 = vpop.xlane.xlu0 %33
  %35 = vadd.xlane.f32.xlu0 %v25
  %v36 = vpop.xlane.xlu0 %35
  %37 = vadd.xlane.f32.xlu0 %v26
  %v38 = vpop.xlane.xlu0 %37
  %v39 = vrcp.pop 128.0
  %v40 = vmul.f32 %v28, %v39
  %v41 = vmul.f32 %v30, %v39
  %v42 = vmul.f32 %v32, %v39
  %v43 = vmul.f32 %v34, %v39
  %v44 = vmul.f32 %v36, %v39
  %v45 = vmul.f32 %v38, %v39
  %v46 = vsub.f32 %v21, %v40
  %v47 = vsub.f32 %v22, %v41
  %v48 = vsub.f32 %v23, %v42
  %v49 = vsub.f32 %v24, %v43
  %v50 = vsub.f32 %v25, %v44
  %v51 = vsub.f32 %v26, %v45
  %v52 = vmul.f32 %v46, %v46
  %v53 = vmul.f32 %v47, %v47
  %v54 = vmul.f32 %v48, %v48
  %v55 = vmul.f32 %v49, %v49
  %v56 = vmul.f32 %v50, %v50
  %v57 = vmul.f32 %v51, %v51
  %58 = vadd.xlane.f32.xlu0 %v52
  %v59 = vpop.xlane.xlu0 %58
  %60 = vadd.xlane.f32.xlu0 %v53
  %v61 = vpop.xlane.xlu0 %60
  %62 = vadd.xlane.f32.xlu0 %v54
  %v63 = vpop.xlane.xlu0 %62
  %64 = vadd.xlane.f32.xlu0 %v55
  %v65 = vpop.xlane.xlu0 %64
  %66 = vadd.xlane.f32.xlu0 %v56
  %v67 = vpop.xlane.xlu0 %66
  %68 = vadd.xlane.f32.xlu0 %v57
  %v69 = vpop.xlane.xlu0 %68
  %v70 = vmul.f32 %v59, %v39
  %v71 = vmul.f32 %v61, %v39
  %v72 = vmul.f32 %v63, %v39
  %v73 = vmul.f32 %v65, %v39
  %v74 = vmul.f32 %v67, %v39
  %v75 = vmul.f32 %v69, %v39
  %v76 = vadd.f32 %v70, 1e-06
  %v77 = vadd.f32 %v71, 1e-06
  %v78 = vadd.f32 %v72, 1e-06
  %v79 = vadd.f32 %v73, 1e-06
  %v80 = vadd.f32 %v74, 1e-06
  %v81 = vadd.f32 %v75, 1e-06
  %v82 = vrsqrt.pop %v76
  %v83 = vrsqrt.pop %v77
  %v84 = vrsqrt.pop %v78
  %v85 = vrsqrt.pop %v79
  %v86 = vrsqrt.pop %v80
  %v87 = vrsqrt.pop %v81
  %v88 = vmul.f32 %v46, %v82
  %v89 = vmul.f32 %v47, %v83
  %v90 = vmul.f32 %v48, %v84
  %v91 = vmul.f32 %v49, %v85
  %v92 = vmul.f32 %v50, %v86
  %v93 = vmul.f32 %v51, %v87
  %v94 = vld [vmem:[%s1] sm:$0x1]
  %v96 = vlaneseq
  %v97 = vshrl.u32 %v96, 7
  %v98 = vsub.s32 0, %v97
  %v99 = vrot.slane %v94, %v98
  %v101 = vmul.f32 %v88, %v99
  %v102 = vmul.f32 %v89, %v99
  %v103 = vmul.f32 %v90, %v99
  %v104 = vmul.f32 %v91, %v99
  %v105 = vmul.f32 %v92, %v99
  %v106 = vmul.f32 %v93, %v99
  %v107 = vld [vmem:[%s2] sm:$0x1]
  %v109 = vlaneseq
  %v110 = vshrl.u32 %v109, 7
  %v111 = vsub.s32 0, %v110
  %v112 = vrot.slane %v107, %v111
  %v114 = vadd.f32 %v101, %v112
  %v115 = vadd.f32 %v102, %v112
  %v116 = vadd.f32 %v103, %v112
  %v117 = vadd.f32 %v104, %v112
  %v118 = vadd.f32 %v105, %v112
  %v119 = vadd.f32 %v106, %v112
  %v120 = vpack.c.bf16 %v115, %v114
  %v121 = vpack.c.bf16 %v117, %v116
  %v122 = vpack.c.bf16 %v119, %v118
  %v123 = vld [vmem:[%s3] sm:$0xff]
  %v124 = vld [vmem:[%s3 + $0x8] sm:$0xff]
  %v125 = vld [vmem:[%s3 + $0x10] sm:$0xff]
  %v126 = vld [vmem:[%s3 + $0x18] sm:$0xff]
  %v127 = vld [vmem:[%s3 + $0x20] sm:$0xff]
  %v128 = vld [vmem:[%s3 + $0x28] sm:$0xff]
  %v129 = vld [vmem:[%s3 + $0x30] sm:$0xff]
  %v130 = vld [vmem:[%s3 + $0x38] sm:$0xff]
  %v131 = vld [vmem:[%s3 + $0x40] sm:$0xff]
  %v132 = vld [vmem:[%s3 + $0x48] sm:$0xff]
  %v133 = vld [vmem:[%s3 + $0x50] sm:$0xff]
  %v134 = vld [vmem:[%s3 + $0x58] sm:$0xff]
  %v135 = vld [vmem:[%s3 + $0x60] sm:$0xff]
  %v136 = vld [vmem:[%s3 + $0x68] sm:$0xff]
  %v137 = vld [vmem:[%s3 + $0x70] sm:$0xff]
  %v138 = vld [vmem:[%s3 + $0x78] sm:$0xff]
  %v139 = vld [vmem:[%s4] sm:$0x3]
  %v141 = vlaneseq
  %v142 = vshrl.u32 %v141, 7
  %v143 = vsub.s32 0, %v142
  %v144 = vrot.slane %v139, %v143
  %v145 = vlaneseq
  %v146 = vshrl.u32 %v145, 7
  %v147 = vsub.s32 1, %v146
  %v148 = vrot.slane %v139, %v147
  %v167 = vunpack.c.l.b16 %v123
  %v168 = vunpack.c.h.b16 %v123
  %v169 = vunpack.c.l.b16 %v124
  %v170 = vunpack.c.h.b16 %v124
  %v171 = vunpack.c.l.b16 %v125
  %v172 = vunpack.c.h.b16 %v125
  %v173 = vunpack.c.l.b16 %v126
  %v174 = vunpack.c.h.b16 %v126
  %v175 = vunpack.c.l.b16 %v127
  %v176 = vunpack.c.h.b16 %v127
  %v177 = vunpack.c.l.b16 %v128
  %v178 = vunpack.c.h.b16 %v128
  %v179 = vunpack.c.l.b16 %v129
  %v180 = vunpack.c.h.b16 %v129
  %v181 = vunpack.c.l.b16 %v130
  %v182 = vunpack.c.h.b16 %v130
  %v183 = vunpack.c.l.b16 %v131
  %v184 = vunpack.c.h.b16 %v131
  %v185 = vunpack.c.l.b16 %v132
  %v186 = vunpack.c.h.b16 %v132
  %v187 = vunpack.c.l.b16 %v133
  %v188 = vunpack.c.h.b16 %v133
  %v189 = vunpack.c.l.b16 %v134
  %v190 = vunpack.c.h.b16 %v134
  %v191 = vunpack.c.l.b16 %v135
  %v192 = vunpack.c.h.b16 %v135
  %v193 = vunpack.c.l.b16 %v136
  %v194 = vunpack.c.h.b16 %v136
  %v195 = vunpack.c.l.b16 %v137
  %v196 = vunpack.c.h.b16 %v137
  %v197 = vunpack.c.l.b16 %v138
  %v198 = vunpack.c.h.b16 %v138
  %v199 = vpack.c.b16 %v169, %v167
  %v200 = vpack.c.b16 %v170, %v168
  %v201 = vpack.c.b16 %v173, %v171
  %v202 = vpack.c.b16 %v174, %v172
  %v203 = vpack.c.b16 %v177, %v175
  %v204 = vpack.c.b16 %v178, %v176
  %v205 = vpack.c.b16 %v181, %v179
  %v206 = vpack.c.b16 %v182, %v180
  %v207 = vpack.c.b16 %v185, %v183
  %v208 = vpack.c.b16 %v186, %v184
  %v209 = vpack.c.b16 %v189, %v187
  %v210 = vpack.c.b16 %v190, %v188
  %v211 = vpack.c.b16 %v193, %v191
  %v212 = vpack.c.b16 %v194, %v192
  %v213 = vpack.c.b16 %v197, %v195
  %v214 = vpack.c.b16 %v198, %v196
  %231 = vmatprep.subr.bf16.mxu0 %v200
  %232 = vmatpush1.bf16.msra.mxu0 %v199
  %233 = vmatprep.subr.bf16.mxu0 %v202
  %234 = vmatpush1.bf16.msra.mxu0 %v201
  %235 = vmatprep.subr.bf16.mxu0 %v204
  %236 = vmatpush1.bf16.msra.mxu0 %v203
  %237 = vmatprep.subr.bf16.mxu0 %v206
  %238 = vmatpush1.bf16.msra.mxu0 %v205
  %239 = vmatprep.subr.bf16.mxu0 %v208
  %240 = vmatpush1.bf16.msra.mxu0 %v207
  %241 = vmatprep.subr.bf16.mxu0 %v210
  %242 = vmatpush1.bf16.msra.mxu0 %v209
  %243 = vmatprep.subr.bf16.mxu0 %v212
  %244 = vmatpush1.bf16.msra.mxu0 %v211
  %245 = vmatprep.subr.bf16.mxu0 %v214
  %246 = vmatpush1.bf16.msra.mxu0 %v213
  %247 = vmatprep.subr.bf16.mxu0 0
  %248 = vmatpush1.bf16.msra.mxu0 0
  %249 = vmatprep.subr.bf16.mxu0 0
  %250 = vmatpush1.bf16.msra.mxu0 0
  %251 = vmatprep.subr.bf16.mxu0 0
  %252 = vmatpush1.bf16.msra.mxu0 0
  %253 = vmatprep.subr.bf16.mxu0 0
  %254 = vmatpush1.bf16.msra.mxu0 0
  %255 = vmatprep.subr.bf16.mxu0 0
  %256 = vmatpush1.bf16.msra.mxu0 0
  %257 = vmatprep.subr.bf16.mxu0 0
  %258 = vmatpush1.bf16.msra.mxu0 0
  %259 = vmatprep.subr.bf16.mxu0 0
  %260 = vmatpush1.bf16.msra.mxu0 0
  %261 = vmatprep.subr.bf16.mxu0 0
  %262 = vmatpush1.bf16.msra.mxu0 0
  %263 = vmatprep.mubr.bf16.mxu0 0
  %264 = vmatmul.mubr.bf16.gmra.mrb[0].mxu0 %v120
  %v265 = vpop.f32.mrb[0].mxu0
  %v266 = vadd.f32 %v144, %v265
  %v267 = vpop.f32.mrb[0].mxu0
  %v268 = vadd.f32 %v148, %v267
  %v269 = vpop.f32.mrb[0].mxu0
  %v270 = vadd.f32 %v144, %v269
  %v271 = vpop.f32.mrb[0].mxu0
  %v272 = vadd.f32 %v148, %v271
  %273 = vmatprep.mubr.bf16.mxu0 0
  %274 = vmatmul.mubr.bf16.gmra.mrb[0].mxu0 %v121
  %v275 = vpop.f32.mrb[0].mxu0
  %v276 = vadd.f32 %v144, %v275
  %v277 = vpop.f32.mrb[0].mxu0
  %v278 = vadd.f32 %v148, %v277
  %v279 = vpop.f32.mrb[0].mxu0
  %v280 = vadd.f32 %v144, %v279
  %v281 = vpop.f32.mrb[0].mxu0
  %v282 = vadd.f32 %v148, %v281
  %283 = vmatprep.mubr.bf16.mxu0 0
  %284 = vmatmul.mubr.bf16.gmra.mrb[0].mxu0 %v122
  %v285 = vpop.f32.mrb[0].mxu0
  %v286 = vadd.f32 %v144, %v285
  %v287 = vpop.f32.mrb[0].mxu0
  %v288 = vadd.f32 %v148, %v287
  %v289 = vpop.f32.mrb[0].mxu0
  %v290 = vadd.f32 %v144, %v289
  %v291 = vpop.f32.mrb[0].mxu0
  %v292 = vadd.f32 %v148, %v291
  %293 = vdwg.mxu0
  %v294 = vmul.f32 %v266, %v266
  %v295 = vmul.f32 %v268, %v268
  %v296 = vmul.f32 %v270, %v270
  %v297 = vmul.f32 %v272, %v272
  %v298 = vmul.f32 %v276, %v276
  %v299 = vmul.f32 %v278, %v278
  %v300 = vmul.f32 %v280, %v280
  %v301 = vmul.f32 %v282, %v282
  %v302 = vmul.f32 %v286, %v286
  %v303 = vmul.f32 %v288, %v288
  %v304 = vmul.f32 %v290, %v290
  %v305 = vmul.f32 %v292, %v292
  %v306 = vmul.f32 %v266, %v294
  %v307 = vmul.f32 %v268, %v295
  %v308 = vmul.f32 %v270, %v296
  %v309 = vmul.f32 %v272, %v297
  %v310 = vmul.f32 %v276, %v298
  %v311 = vmul.f32 %v278, %v299
  %v312 = vmul.f32 %v280, %v300
  %v313 = vmul.f32 %v282, %v301
  %v314 = vmul.f32 %v286, %v302
  %v315 = vmul.f32 %v288, %v303
  %v316 = vmul.f32 %v290, %v304
  %v317 = vmul.f32 %v292, %v305
  %v318 = vmul.f32 %v306, 0.044715
  %v319 = vmul.f32 %v307, 0.044715
  %v320 = vmul.f32 %v308, 0.044715
  %v321 = vmul.f32 %v309, 0.044715
  %v322 = vmul.f32 %v310, 0.044715
  %v323 = vmul.f32 %v311, 0.044715
  %v324 = vmul.f32 %v312, 0.044715
  %v325 = vmul.f32 %v313, 0.044715
  %v326 = vmul.f32 %v314, 0.044715
  %v327 = vmul.f32 %v315, 0.044715
  %v328 = vmul.f32 %v316, 0.044715
  %v329 = vmul.f32 %v317, 0.044715
  %v330 = vadd.f32 %v266, %v318
  %v331 = vadd.f32 %v268, %v319
  %v332 = vadd.f32 %v270, %v320
  %v333 = vadd.f32 %v272, %v321
  %v334 = vadd.f32 %v276, %v322
  %v335 = vadd.f32 %v278, %v323
  %v336 = vadd.f32 %v280, %v324
  %v337 = vadd.f32 %v282, %v325
  %v338 = vadd.f32 %v286, %v326
  %v339 = vadd.f32 %v288, %v327
  %v340 = vadd.f32 %v290, %v328
  %v341 = vadd.f32 %v292, %v329
  %v342 = vmul.f32 %v330, 0.7978846
  %v343 = vmul.f32 %v331, 0.7978846
  %v344 = vmul.f32 %v332, 0.7978846
  %v345 = vmul.f32 %v333, 0.7978846
  %v346 = vmul.f32 %v334, 0.7978846
  %v347 = vmul.f32 %v335, 0.7978846
  %v348 = vmul.f32 %v336, 0.7978846
  %v349 = vmul.f32 %v337, 0.7978846
  %v350 = vmul.f32 %v338, 0.7978846
  %v351 = vmul.f32 %v339, 0.7978846
  %v352 = vmul.f32 %v340, 0.7978846
  %v353 = vmul.f32 %v341, 0.7978846
  %v354 = vtanh.pop %v342
  %v355 = vtanh.pop %v343
  %v356 = vtanh.pop %v344
  %v357 = vtanh.pop %v345
  %v358 = vtanh.pop %v346
  %v359 = vtanh.pop %v347
  %v360 = vtanh.pop %v348
  %v361 = vtanh.pop %v349
  %v362 = vtanh.pop %v350
  %v363 = vtanh.pop %v351
  %v364 = vtanh.pop %v352
  %v365 = vtanh.pop %v353
  %v366 = vadd.f32 %v354, 1.0
  %v367 = vadd.f32 %v355, 1.0
  %v368 = vadd.f32 %v356, 1.0
  %v369 = vadd.f32 %v357, 1.0
  %v370 = vadd.f32 %v358, 1.0
  %v371 = vadd.f32 %v359, 1.0
  %v372 = vadd.f32 %v360, 1.0
  %v373 = vadd.f32 %v361, 1.0
  %v374 = vadd.f32 %v362, 1.0
  %v375 = vadd.f32 %v363, 1.0
  %v376 = vadd.f32 %v364, 1.0
  %v377 = vadd.f32 %v365, 1.0
  %v378 = vmul.f32 %v366, 0.5
  %v379 = vmul.f32 %v367, 0.5
  %v380 = vmul.f32 %v368, 0.5
  %v381 = vmul.f32 %v369, 0.5
  %v382 = vmul.f32 %v370, 0.5
  %v383 = vmul.f32 %v371, 0.5
  %v384 = vmul.f32 %v372, 0.5
  %v385 = vmul.f32 %v373, 0.5
  %v386 = vmul.f32 %v374, 0.5
  %v387 = vmul.f32 %v375, 0.5
  %v388 = vmul.f32 %v376, 0.5
  %v389 = vmul.f32 %v377, 0.5
  %v390 = vmul.f32 %v266, %v378
  %v391 = vmul.f32 %v268, %v379
  %v392 = vmul.f32 %v270, %v380
  %v393 = vmul.f32 %v272, %v381
  %v394 = vmul.f32 %v276, %v382
  %v395 = vmul.f32 %v278, %v383
  %v396 = vmul.f32 %v280, %v384
  %v397 = vmul.f32 %v282, %v385
  %v398 = vmul.f32 %v286, %v386
  %v399 = vmul.f32 %v288, %v387
  %v400 = vmul.f32 %v290, %v388
  %v401 = vmul.f32 %v292, %v389
  %v402 = vpack.c.bf16 %v392, %v390
  %v403 = vpack.c.bf16 %v393, %v391
  %v404 = vpack.c.bf16 %v396, %v394
  %v405 = vpack.c.bf16 %v397, %v395
  %v406 = vpack.c.bf16 %v400, %v398
  %v407 = vpack.c.bf16 %v401, %v399
  %v414 = vunpack.c.l.b16 %v402
  %v415 = vunpack.c.l.b16 %v403
  %v416 = vunpack.c.h.b16 %v402
  %v417 = vunpack.c.h.b16 %v403
  %v418 = vunpack.c.l.b16 %v404
  %v419 = vunpack.c.l.b16 %v405
  %v420 = vunpack.c.h.b16 %v404
  %v421 = vunpack.c.h.b16 %v405
  %v422 = vunpack.c.l.b16 %v406
  %v423 = vunpack.c.l.b16 %v407
  %v424 = vunpack.c.h.b16 %v406
  %v425 = vunpack.c.h.b16 %v407
  %v426 = vpack.c.b16 %v415, %v414
  %v427 = vpack.c.b16 %v417, %v416
  %v428 = vpack.c.b16 %v419, %v418
  %v429 = vpack.c.b16 %v421, %v420
  %v430 = vpack.c.b16 %v423, %v422
  %v431 = vpack.c.b16 %v425, %v424
  %438 = vst [vmem:[%s5] sm:$0xff] %v426
  %439 = vst [vmem:[%s5 + $0x8] sm:$0xff] %v427
  %440 = vst [vmem:[%s5 + $0x10] sm:$0xff] %v428
  %441 = vst [vmem:[%s5 + $0x18] sm:$0xff] %v429
  %442 = vst [vmem:[%s5 + $0x20] sm:$0xff] %v430
  %443 = vst [vmem:[%s5 + $0x28] sm:$0xff] %v431
  // Predicated region
  $region22: #{dino_v2_encoder_lora_forward.17} parent=0 // pred_check
    _
  $region23: #{dino_v2_encoder_lora_forward.17} parent=0 // pred_check_branch
    %445 = sbr.rel (0) target = $region25
  $region24: #{dino_v2_encoder_lora_forward.17} parent=0 // pred_region
    _
  $region25: #{dino_v2_encoder_lora_forward.17} parent=0 // pred_fallthru
    _
  // Predicated region
  $region26: #{dino_v2_encoder_lora_forward.17} parent=0 // pred_check
    _
  $region27: #{dino_v2_encoder_lora_forward.17} parent=0 // pred_check_branch
    %447 = sbr.rel (0) target = $region29
  $region28: #{dino_v2_encoder_lora_forward.17} parent=0 // pred_region
    _
  $region29: #{dino_v2_encoder_lora_forward.17} parent=0 // pred_fallthru
    _

// kernel: dino_v2_encoder_lora_forward.18
$region0: #{dino_v2_encoder_lora_forward.18}
  #allocation0 [shape = 'u32[]', space=smem, size = 0x4, offset = 0x4, fixed_abs, tag = 'smem constant byte address 0x4 - core index']
  #allocation1 [shape = 'u32[144,128]{1,0:T(1,128)}', space=vmem, size = 0x12000, scoped, tag = 'internal scratch']
  %s0 = inlined_call_operand.vmem [shape: bf16[48,256], index: 0, kind: input, shape index: {}]
  %s1 = inlined_call_operand.vmem [shape: bf16[256,128], index: 1, kind: input, shape index: {}]
  %s2 = inlined_call_operand.vmem [shape: f32[1,128], index: 2, kind: input, shape index: {}]
  %s3 = inlined_call_operand.vmem [shape: f32[48,128], index: 3, kind: input, shape index: {}]
  %s4 = inlined_call_operand.vmem [shape: f32[48,128], index: 4, kind: output, shape index: {}]
  %s5 = sld [smem:[#allocation0]]
  $region26: #{dino_v2_encoder_lora_forward.18} parent=0
    _
  %s7 = ssub.s32 1, %s5
  %s8 = scalar_select 0, %s7, %s5
  // Predicated region
  $region2: #{dino_v2_encoder_lora_forward.18} parent=0 // pred_check
    _
  $region3: #{dino_v2_encoder_lora_forward.18} parent=0 // pred_check_branch
    %10 = sbr.rel (0) target = $region5
  $region4: #{dino_v2_encoder_lora_forward.18} parent=0 // pred_region
    _
  $region5: #{dino_v2_encoder_lora_forward.18} parent=0 // pred_fallthru
    _
  // Predicated region
  $region6: #{dino_v2_encoder_lora_forward.18} parent=0 // pred_check
    _
  $region7: #{dino_v2_encoder_lora_forward.18} parent=0 // pred_check_branch
    %12 = sbr.rel (0) target = $region9
  $region8: #{dino_v2_encoder_lora_forward.18} parent=0 // pred_region
    _
  $region9: #{dino_v2_encoder_lora_forward.18} parent=0 // pred_fallthru
    _
  // Predicated region
  $region10: #{dino_v2_encoder_lora_forward.18} parent=0 // pred_check
    _
  $region11: #{dino_v2_encoder_lora_forward.18} parent=0 // pred_check_branch
    %14 = sbr.rel (0) target = $region13
  $region12: #{dino_v2_encoder_lora_forward.18} parent=0 // pred_region
    _
  $region13: #{dino_v2_encoder_lora_forward.18} parent=0 // pred_fallthru
    _
  // Predicated region
  $region14: #{dino_v2_encoder_lora_forward.18} parent=0 // pred_check
    _
  $region15: #{dino_v2_encoder_lora_forward.18} parent=0 // pred_check_branch
    %16 = sbr.rel (0) target = $region17
  $region16: #{dino_v2_encoder_lora_forward.18} parent=0 // pred_region
    _
  $region17: #{dino_v2_encoder_lora_forward.18} parent=0 // pred_fallthru
    _
  %v18 = vld [vmem:[%s0] sm:$0xff]
  %v19 = vld [vmem:[%s0 + $0x8] sm:$0xff]
  %v20 = vld [vmem:[%s0 + $0x10] sm:$0xff]
  %v21 = vld [vmem:[%s0 + $0x18] sm:$0xff]
  %v22 = vld [vmem:[%s0 + $0x20] sm:$0xff]
  %v23 = vld [vmem:[%s0 + $0x28] sm:$0xff]
  %v24 = vld [vmem:[%s1] sm:$0xf]
  %v25 = vld [vmem:[%s1 + $0x4] sm:$0xf]
  %v26 = vld [vmem:[%s1 + $0x8] sm:$0xf]
  %v27 = vld [vmem:[%s1 + $0xc] sm:$0xf]
  %v28 = vld [vmem:[%s1 + $0x10] sm:$0xf]
  %v29 = vld [vmem:[%s1 + $0x14] sm:$0xf]
  %v30 = vld [vmem:[%s1 + $0x18] sm:$0xf]
  %v31 = vld [vmem:[%s1 + $0x1c] sm:$0xf]
  %v32 = vld [vmem:[%s1 + $0x20] sm:$0xf]
  %v33 = vld [vmem:[%s1 + $0x24] sm:$0xf]
  %v34 = vld [vmem:[%s1 + $0x28] sm:$0xf]
  %v35 = vld [vmem:[%s1 + $0x2c] sm:$0xf]
  %v36 = vld [vmem:[%s1 + $0x30] sm:$0xf]
  %v37 = vld [vmem:[%s1 + $0x34] sm:$0xf]
  %v38 = vld [vmem:[%s1 + $0x38] sm:$0xf]
  %v39 = vld [vmem:[%s1 + $0x3c] sm:$0xf]
  %v40 = vld [vmem:[%s1 + $0x40] sm:$0xf]
  %v41 = vld [vmem:[%s1 + $0x44] sm:$0xf]
  %v42 = vld [vmem:[%s1 + $0x48] sm:$0xf]
  %v43 = vld [vmem:[%s1 + $0x4c] sm:$0xf]
  %v44 = vld [vmem:[%s1 + $0x50] sm:$0xf]
  %v45 = vld [vmem:[%s1 + $0x54] sm:$0xf]
  %v46 = vld [vmem:[%s1 + $0x58] sm:$0xf]
  %v47 = vld [vmem:[%s1 + $0x5c] sm:$0xf]
  %v48 = vld [vmem:[%s1 + $0x60] sm:$0xf]
  %v49 = vld [vmem:[%s1 + $0x64] sm:$0xf]
  %v50 = vld [vmem:[%s1 + $0x68] sm:$0xf]
  %v51 = vld [vmem:[%s1 + $0x6c] sm:$0xf]
  %v52 = vld [vmem:[%s1 + $0x70] sm:$0xf]
  %v53 = vld [vmem:[%s1 + $0x74] sm:$0xf]
  %v54 = vld [vmem:[%s1 + $0x78] sm:$0xf]
  %v55 = vld [vmem:[%s1 + $0x7c] sm:$0xf]
  %v56 = vld [vmem:[%s2] sm:$0x1]
  %v58 = vlaneseq
  %v59 = vshrl.u32 %v58, 7
  %v60 = vsub.s32 0, %v59
  %v61 = vrot.slane %v56, %v60
  %v69 = vunpack.c.l.b16 %v18
  %v70 = vunpack.c.h.b16 %v18
  %v71 = vunpack.c.l.b16 %v19
  %v72 = vunpack.c.h.b16 %v19
  %v73 = vunpack.c.l.b16 %v20
  %v74 = vunpack.c.h.b16 %v20
  %v75 = vunpack.c.l.b16 %v21
  %v76 = vunpack.c.h.b16 %v21
  %v77 = vunpack.c.l.b16 %v22
  %v78 = vunpack.c.h.b16 %v22
  %v79 = vunpack.c.l.b16 %v23
  %v80 = vunpack.c.h.b16 %v23
  %v81 = vpack.c.b16 %v71, %v69
  %v82 = vpack.c.b16 %v72, %v70
  %v83 = vpack.c.b16 %v75, %v73
  %v84 = vpack.c.b16 %v76, %v74
  %v85 = vpack.c.b16 %v79, %v77
  %v86 = vpack.c.b16 %v80, %v78
  %v125 = vunpack.c.l.b16 %v24
  %v126 = vunpack.c.l.b16 %v25
  %v127 = vunpack.c.l.b16 %v26
  %v128 = vunpack.c.l.b16 %v27
  %v129 = vunpack.c.l.b16 %v28
  %v130 = vunpack.c.l.b16 %v29
  %v131 = vunpack.c.l.b16 %v30
  %v132 = vunpack.c.l.b16 %v31
  %v133 = vunpack.c.l.b16 %v32
  %v134 = vunpack.c.l.b16 %v33
  %v135 = vunpack.c.l.b16 %v34
  %v136 = vunpack.c.l.b16 %v35
  %v137 = vunpack.c.l.b16 %v36
  %v138 = vunpack.c.l.b16 %v37
  %v139 = vunpack.c.l.b16 %v38
  %v140 = vunpack.c.l.b16 %v39
  %v141 = vunpack.c.l.b16 %v40
  %v142 = vunpack.c.l.b16 %v41
  %v143 = vunpack.c.l.b16 %v42
  %v144 = vunpack.c.l.b16 %v43
  %v145 = vunpack.c.l.b16 %v44
  %v146 = vunpack.c.l.b16 %v45
  %v147 = vunpack.c.l.b16 %v46
  %v148 = vunpack.c.l.b16 %v47
  %v149 = vunpack.c.l.b16 %v48
  %v150 = vunpack.c.l.b16 %v49
  %v151 = vunpack.c.l.b16 %v50
  %v152 = vunpack.c.l.b16 %v51
  %v153 = vunpack.c.l.b16 %v52
  %v154 = vunpack.c.l.b16 %v53
  %v155 = vunpack.c.l.b16 %v54
  %v156 = vunpack.c.l.b16 %v55
  %v157 = vpack.c.b16 %v126, %v125
  %v158 = vpack.c.b16 %v128, %v127
  %v159 = vpack.c.b16 %v130, %v129
  %v160 = vpack.c.b16 %v132, %v131
  %v161 = vpack.c.b16 %v134, %v133
  %v162 = vpack.c.b16 %v136, %v135
  %v163 = vpack.c.b16 %v138, %v137
  %v164 = vpack.c.b16 %v140, %v139
  %v165 = vpack.c.b16 %v142, %v141
  %v166 = vpack.c.b16 %v144, %v143
  %v167 = vpack.c.b16 %v146, %v145
  %v168 = vpack.c.b16 %v148, %v147
  %v169 = vpack.c.b16 %v150, %v149
  %v170 = vpack.c.b16 %v152, %v151
  %v171 = vpack.c.b16 %v154, %v153
  %v172 = vpack.c.b16 %v156, %v155
  %189 = vmatprep.subr.bf16.mxu0 0
  %190 = vmatpush1.bf16.msra.mxu0 %v157
  %191 = vmatprep.subr.bf16.mxu0 0
  %192 = vmatpush1.bf16.msra.mxu0 %v158
  %193 = vmatprep.subr.bf16.mxu0 0
  %194 = vmatpush1.bf16.msra.mxu0 %v159
  %195 = vmatprep.subr.bf16.mxu0 0
  %196 = vmatpush1.bf16.msra.mxu0 %v160
  %197 = vmatprep.subr.bf16.mxu0 0
  %198 = vmatpush1.bf16.msra.mxu0 %v161
  %199 = vmatprep.subr.bf16.mxu0 0
  %200 = vmatpush1.bf16.msra.mxu0 %v162
  %201 = vmatprep.subr.bf16.mxu0 0
  %202 = vmatpush1.bf16.msra.mxu0 %v163
  %203 = vmatprep.subr.bf16.mxu0 0
  %204 = vmatpush1.bf16.msra.mxu0 %v164
  %205 = vmatprep.subr.bf16.mxu0 0
  %206 = vmatpush1.bf16.msra.mxu0 %v165
  %207 = vmatprep.subr.bf16.mxu0 0
  %208 = vmatpush1.bf16.msra.mxu0 %v166
  %209 = vmatprep.subr.bf16.mxu0 0
  %210 = vmatpush1.bf16.msra.mxu0 %v167
  %211 = vmatprep.subr.bf16.mxu0 0
  %212 = vmatpush1.bf16.msra.mxu0 %v168
  %213 = vmatprep.subr.bf16.mxu0 0
  %214 = vmatpush1.bf16.msra.mxu0 %v169
  %215 = vmatprep.subr.bf16.mxu0 0
  %216 = vmatpush1.bf16.msra.mxu0 %v170
  %217 = vmatprep.subr.bf16.mxu0 0
  %218 = vmatpush1.bf16.msra.mxu0 %v171
  %219 = vmatprep.subr.bf16.mxu0 0
  %220 = vmatpush1.bf16.msra.mxu0 %v172
  %221 = vmatprep.mubr.bf16.mxu0 %v82
  %222 = vmatmul.mubr.bf16.gmra.mrb[0].mxu0 %v81
  %v223 = vpop.f32.mrb[0].mxu0
  %v224 = vadd.f32 %v61, %v223
  %v225 = vpop.f32.mrb[0].mxu0
  %v226 = vpop.f32.mrb[0].mxu0
  %v227 = vadd.f32 %v61, %v226
  %v228 = vpop.f32.mrb[0].mxu0
  %229 = vmatprep.mubr.bf16.mxu0 %v84
  %230 = vmatmul.mubr.bf16.gmra.mrb[0].mxu0 %v83
  %v231 = vpop.f32.mrb[0].mxu0
  %v232 = vadd.f32 %v61, %v231
  %v233 = vpop.f32.mrb[0].mxu0
  %v234 = vpop.f32.mrb[0].mxu0
  %v235 = vadd.f32 %v61, %v234
  %v236 = vpop.f32.mrb[0].mxu0
  %237 = vmatprep.mubr.bf16.mxu0 %v86
  %238 = vmatmul.mubr.bf16.gmra.mrb[0].mxu0 %v85
  %v239 = vpop.f32.mrb[0].mxu0
  %v240 = vadd.f32 %v61, %v239
  %v241 = vpop.f32.mrb[0].mxu0
  %v242 = vpop.f32.mrb[0].mxu0
  %v243 = vadd.f32 %v61, %v242
  %v244 = vpop.f32.mrb[0].mxu0
  %245 = vdwg.mxu0
  %v246 = vld [vmem:[%s3] sm:$0xff]
  %v247 = vld [vmem:[%s3 + $0x8] sm:$0xff]
  %v248 = vld [vmem:[%s3 + $0x10] sm:$0xff]
  %v249 = vld [vmem:[%s3 + $0x18] sm:$0xff]
  %v250 = vld [vmem:[%s3 + $0x20] sm:$0xff]
  %v251 = vld [vmem:[%s3 + $0x28] sm:$0xff]
  %v252 = vadd.f32 %v224, %v246
  %v253 = vadd.f32 %v227, %v247
  %v254 = vadd.f32 %v232, %v248
  %v255 = vadd.f32 %v235, %v249
  %v256 = vadd.f32 %v240, %v250
  %v257 = vadd.f32 %v243, %v251
  %258 = vst [vmem:[%s4] sm:$0xff] %v252
  %259 = vst [vmem:[%s4 + $0x8] sm:$0xff] %v253
  %260 = vst [vmem:[%s4 + $0x10] sm:$0xff] %v254
  %261 = vst [vmem:[%s4 + $0x18] sm:$0xff] %v255
  %262 = vst [vmem:[%s4 + $0x20] sm:$0xff] %v256
  %263 = vst [vmem:[%s4 + $0x28] sm:$0xff] %v257
  // Predicated region
  $region18: #{dino_v2_encoder_lora_forward.18} parent=0 // pred_check
    _
  $region19: #{dino_v2_encoder_lora_forward.18} parent=0 // pred_check_branch
    %265 = sbr.rel (0) target = $region21
  $region20: #{dino_v2_encoder_lora_forward.18} parent=0 // pred_region
    _
  $region21: #{dino_v2_encoder_lora_forward.18} parent=0 // pred_fallthru
    _
  // Predicated region
  $region22: #{dino_v2_encoder_lora_forward.18} parent=0 // pred_check
    _
  $region23: #{dino_v2_encoder_lora_forward.18} parent=0 // pred_check_branch
    %267 = sbr.rel (0) target = $region25
  $region24: #{dino_v2_encoder_lora_forward.18} parent=0 // pred_region
    _
  $region25: #{dino_v2_encoder_lora_forward.18} parent=0 // pred_fallthru
    _

// kernel: dino_v2_encoder_lora_forward.24
$region0: #{dino_v2_encoder_lora_forward.24}
  #allocation0 [shape = 'u32[]', space=smem, size = 0x4, offset = 0x4, fixed_abs, tag = 'smem constant byte address 0x4 - core index']
  #allocation1 [shape = 'u32[144,128]{1,0:T(1,128)}', space=vmem, size = 0x12000, scoped, tag = 'internal scratch']
  %s0 = inlined_call_operand.vmem [shape: f32[32,128], index: 0, kind: input, shape index: {}]
  %s1 = inlined_call_operand.vmem [shape: f32[1,128], index: 1, kind: input, shape index: {}]
  %s2 = inlined_call_operand.vmem [shape: f32[1,128], index: 2, kind: input, shape index: {}]
  %s3 = inlined_call_operand.vmem [shape: bf16[128,8], index: 3, kind: input, shape index: {}]
  %s4 = inlined_call_operand.vmem [shape: f32[1,8], index: 4, kind: input, shape index: {}]
  %s5 = inlined_call_operand.vmem [shape: f32[32,8], index: 5, kind: output, shape index: {}]
  %s6 = sld [smem:[#allocation0]]
  $region30: #{dino_v2_encoder_lora_forward.24} parent=0
    _
  %s8 = ssub.s32 1, %s6
  %s9 = scalar_select 0, %s8, %s6
  // Predicated region
  $region2: #{dino_v2_encoder_lora_forward.24} parent=0 // pred_check
    _
  $region3: #{dino_v2_encoder_lora_forward.24} parent=0 // pred_check_branch
    %11 = sbr.rel (0) target = $region5
  $region4: #{dino_v2_encoder_lora_forward.24} parent=0 // pred_region
    _
  $region5: #{dino_v2_encoder_lora_forward.24} parent=0 // pred_fallthru
    _
  // Predicated region
  $region6: #{dino_v2_encoder_lora_forward.24} parent=0 // pred_check
    _
  $region7: #{dino_v2_encoder_lora_forward.24} parent=0 // pred_check_branch
    %13 = sbr.rel (0) target = $region9
  $region8: #{dino_v2_encoder_lora_forward.24} parent=0 // pred_region
    _
  $region9: #{dino_v2_encoder_lora_forward.24} parent=0 // pred_fallthru
    _
  // Predicated region
  $region10: #{dino_v2_encoder_lora_forward.24} parent=0 // pred_check
    _
  $region11: #{dino_v2_encoder_lora_forward.24} parent=0 // pred_check_branch
    %15 = sbr.rel (0) target = $region13
  $region12: #{dino_v2_encoder_lora_forward.24} parent=0 // pred_region
    _
  $region13: #{dino_v2_encoder_lora_forward.24} parent=0 // pred_fallthru
    _
  // Predicated region
  $region14: #{dino_v2_encoder_lora_forward.24} parent=0 // pred_check
    _
  $region15: #{dino_v2_encoder_lora_forward.24} parent=0 // pred_check_branch
    %17 = sbr.rel (0) target = $region17
  $region16: #{dino_v2_encoder_lora_forward.24} parent=0 // pred_region
    _
  $region17: #{dino_v2_encoder_lora_forward.24} parent=0 // pred_fallthru
    _
  // Predicated region
  $region18: #{dino_v2_encoder_lora_forward.24} parent=0 // pred_check
    _
  $region19: #{dino_v2_encoder_lora_forward.24} parent=0 // pred_check_branch
    %19 = sbr.rel (0) target = $region21
  $region20: #{dino_v2_encoder_lora_forward.24} parent=0 // pred_region
    _
  $region21: #{dino_v2_encoder_lora_forward.24} parent=0 // pred_fallthru
    _
  %v21 = vld [vmem:[%s0] sm:$0xff]
  %v22 = vld [vmem:[%s0 + $0x8] sm:$0xff]
  %v23 = vld [vmem:[%s0 + $0x10] sm:$0xff]
  %v24 = vld [vmem:[%s0 + $0x18] sm:$0xff]
  %25 = vadd.xlane.f32.xlu0 %v21
  %v26 = vpop.xlane.xlu0 %25
  %27 = vadd.xlane.f32.xlu0 %v22
  %v28 = vpop.xlane.xlu0 %27
  %29 = vadd.xlane.f32.xlu0 %v23
  %v30 = vpop.xlane.xlu0 %29
  %31 = vadd.xlane.f32.xlu0 %v24
  %v32 = vpop.xlane.xlu0 %31
  %v33 = vrcp.pop 128.0
  %v34 = vmul.f32 %v26, %v33
  %v35 = vmul.f32 %v28, %v33
  %v36 = vmul.f32 %v30, %v33
  %v37 = vmul.f32 %v32, %v33
  %v38 = vsub.f32 %v21, %v34
  %v39 = vsub.f32 %v22, %v35
  %v40 = vsub.f32 %v23, %v36
  %v41 = vsub.f32 %v24, %v37
  %v42 = vmul.f32 %v38, %v38
  %v43 = vmul.f32 %v39, %v39
  %v44 = vmul.f32 %v40, %v40
  %v45 = vmul.f32 %v41, %v41
  %46 = vadd.xlane.f32.xlu0 %v42
  %v47 = vpop.xlane.xlu0 %46
  %48 = vadd.xlane.f32.xlu0 %v43
  %v49 = vpop.xlane.xlu0 %48
  %50 = vadd.xlane.f32.xlu0 %v44
  %v51 = vpop.xlane.xlu0 %50
  %52 = vadd.xlane.f32.xlu0 %v45
  %v53 = vpop.xlane.xlu0 %52
  %v54 = vmul.f32 %v47, %v33
  %v55 = vmul.f32 %v49, %v33
  %v56 = vmul.f32 %v51, %v33
  %v57 = vmul.f32 %v53, %v33
  %v58 = vadd.f32 %v54, 1e-06
  %v59 = vadd.f32 %v55, 1e-06
  %v60 = vadd.f32 %v56, 1e-06
  %v61 = vadd.f32 %v57, 1e-06
  %v62 = vrsqrt.pop %v58
  %v63 = vrsqrt.pop %v59
  %v64 = vrsqrt.pop %v60
  %v65 = vrsqrt.pop %v61
  %v66 = vmul.f32 %v38, %v62
  %v67 = vmul.f32 %v39, %v63
  %v68 = vmul.f32 %v40, %v64
  %v69 = vmul.f32 %v41, %v65
  %v70 = vld [vmem:[%s1] sm:$0x1]
  %v72 = vlaneseq
  %v73 = vshrl.u32 %v72, 7
  %v74 = vsub.s32 0, %v73
  %v75 = vrot.slane %v70, %v74
  %v77 = vmul.f32 %v66, %v75
  %v78 = vmul.f32 %v67, %v75
  %v79 = vmul.f32 %v68, %v75
  %v80 = vmul.f32 %v69, %v75
  %v81 = vld [vmem:[%s2] sm:$0x1]
  %v83 = vlaneseq
  %v84 = vshrl.u32 %v83, 7
  %v85 = vsub.s32 0, %v84
  %v86 = vrot.slane %v81, %v85
  %v88 = vadd.f32 %v77, %v86
  %v89 = vadd.f32 %v78, %v86
  %v90 = vadd.f32 %v79, %v86
  %v91 = vadd.f32 %v80, %v86
  %v92 = vpack.c.bf16 %v89, %v88
  %v93 = vpack.c.bf16 %v91, %v90
  %v94 = vld [vmem:[%s3] sm:$0xf]
  %v95 = vld [vmem:[%s3 + $0x4] sm:$0xf]
  %v96 = vld [vmem:[%s3 + $0x8] sm:$0xf]
  %v97 = vld [vmem:[%s3 + $0xc] sm:$0xf]
  %v98 = vld [vmem:[%s3 + $0x10] sm:$0xf]
  %v99 = vld [vmem:[%s3 + $0x14] sm:$0xf]
  %v100 = vld [vmem:[%s3 + $0x18] sm:$0xf]
  %v101 = vld [vmem:[%s3 + $0x1c] sm:$0xf]
  %v102 = vld [vmem:[%s3 + $0x20] sm:$0xf]
  %v103 = vld [vmem:[%s3 + $0x24] sm:$0xf]
  %v104 = vld [vmem:[%s3 + $0x28] sm:$0xf]
  %v105 = vld [vmem:[%s3 + $0x2c] sm:$0xf]
  %v106 = vld [vmem:[%s3 + $0x30] sm:$0xf]
  %v107 = vld [vmem:[%s3 + $0x34] sm:$0xf]
  %v108 = vld [vmem:[%s3 + $0x38] sm:$0xf]
  %v109 = vld [vmem:[%s3 + $0x3c] sm:$0xf]
  %v110 = vld [vmem:[%s4] sm:$0x1]
  %v112 = vlaneseq
  %v113 = vshrl.u32 %v112, 7
  %v114 = vsub.s32 0, %v113
  %v115 = vrot.slane %v110, %v114
  %v133 = vunpack.c.l.b16 %v94
  %v134 = vunpack.c.l.b16 %v95
  %v135 = vunpack.c.l.b16 %v96
  %v136 = vunpack.c.l.b16 %v97
  %v137 = vunpack.c.l.b16 %v98
  %v138 = vunpack.c.l.b16 %v99
  %v139 = vunpack.c.l.b16 %v100
  %v140 = vunpack.c.l.b16 %v101
  %v141 = vunpack.c.l.b16 %v102
  %v142 = vunpack.c.l.b16 %v103
  %v143 = vunpack.c.l.b16 %v104
  %v144 = vunpack.c.l.b16 %v105
  %v145 = vunpack.c.l.b16 %v106
  %v146 = vunpack.c.l.b16 %v107
  %v147 = vunpack.c.l.b16 %v108
  %v148 = vunpack.c.l.b16 %v109
  %v149 = vpack.c.b16 %v134, %v133
  %v150 = vpack.c.b16 %v136, %v135
  %v151 = vpack.c.b16 %v138, %v137
  %v152 = vpack.c.b16 %v140, %v139
  %v153 = vpack.c.b16 %v142, %v141
  %v154 = vpack.c.b16 %v144, %v143
  %v155 = vpack.c.b16 %v146, %v145
  %v156 = vpack.c.b16 %v148, %v147
  %165 = vmatprep.subr.bf16.mxu0 0
  %166 = vmatpush1.bf16.msra.mxu0 %v149
  %167 = vmatprep.subr.bf16.mxu0 0
  %168 = vmatpush1.bf16.msra.mxu0 %v150
  %169 = vmatprep.subr.bf16.mxu0 0
  %170 = vmatpush1.bf16.msra.mxu0 %v151
  %171 = vmatprep.subr.bf16.mxu0 0
  %172 = vmatpush1.bf16.msra.mxu0 %v152
  %173 = vmatprep.subr.bf16.mxu0 0
  %174 = vmatpush1.bf16.msra.mxu0 %v153
  %175 = vmatprep.subr.bf16.mxu0 0
  %176 = vmatpush1.bf16.msra.mxu0 %v154
  %177 = vmatprep.subr.bf16.mxu0 0
  %178 = vmatpush1.bf16.msra.mxu0 %v155
  %179 = vmatprep.subr.bf16.mxu0 0
  %180 = vmatpush1.bf16.msra.mxu0 %v156
  %181 = vmatprep.subr.bf16.mxu0 0
  %182 = vmatpush1.bf16.msra.mxu0 0
  %183 = vmatprep.subr.bf16.mxu0 0
  %184 = vmatpush1.bf16.msra.mxu0 0
  %185 = vmatprep.subr.bf16.mxu0 0
  %186 = vmatpush1.bf16.msra.mxu0 0
  %187 = vmatprep.subr.bf16.mxu0 0
  %188 = vmatpush1.bf16.msra.mxu0 0
  %189 = vmatprep.subr.bf16.mxu0 0
  %190 = vmatpush1.bf16.msra.mxu0 0
  %191 = vmatprep.subr.bf16.mxu0 0
  %192 = vmatpush1.bf16.msra.mxu0 0
  %193 = vmatprep.subr.bf16.mxu0 0
  %194 = vmatpush1.bf16.msra.mxu0 0
  %195 = vmatprep.subr.bf16.mxu0 0
  %196 = vmatpush1.bf16.msra.mxu0 0
  %197 = vmatprep.mubr.bf16.mxu0 0
  %198 = vmatmul.mubr.bf16.gmra.mrb[0].mxu0 %v92
  %v199 = vpop.f32.mrb[0].mxu0
  %v200 = vadd.f32 %v115, %v199
  %v201 = vpop.f32.mrb[0].mxu0
  %v202 = vpop.f32.mrb[0].mxu0
  %v203 = vadd.f32 %v115, %v202
  %v204 = vpop.f32.mrb[0].mxu0
  %205 = vmatprep.mubr.bf16.mxu0 0
  %206 = vmatmul.mubr.bf16.gmra.mrb[0].mxu0 %v93
  %v207 = vpop.f32.mrb[0].mxu0
  %v208 = vadd.f32 %v115, %v207
  %v209 = vpop.f32.mrb[0].mxu0
  %v210 = vpop.f32.mrb[0].mxu0
  %v211 = vadd.f32 %v115, %v210
  %v212 = vpop.f32.mrb[0].mxu0
  %213 = vdwg.mxu0
  %vm214 = vcmask 64512
  %215 = vst.msk [vmem:[%s5] sm:$0xff] %vm214, %v200
  %216 = vst.msk [vmem:[%s5 + $0x8] sm:$0xff] %vm214, %v203
  %217 = vst.msk [vmem:[%s5 + $0x10] sm:$0xff] %vm214, %v208
  %218 = vst.msk [vmem:[%s5 + $0x18] sm:$0xff] %vm214, %v211
  // Predicated region
  $region22: #{dino_v2_encoder_lora_forward.24} parent=0 // pred_check
    _
  $region23: #{dino_v2_encoder_lora_forward.24} parent=0 // pred_check_branch
    %220 = sbr.rel (0) target = $region25
  $region24: #{dino_v2_encoder_lora_forward.24} parent=0 // pred_region
    _
  $region25: #{dino_v2_encoder_lora_forward.24} parent=0 // pred_fallthru
    _
  // Predicated region
  $region26: #{dino_v2_encoder_lora_forward.24} parent=0 // pred_check
    _
  $region27: #{dino_v2_encoder_lora_forward.24} parent=0 // pred_check_branch
    %222 = sbr.rel (0) target = $region29
  $region28: #{dino_v2_encoder_lora_forward.24} parent=0 // pred_region
    _
  $region29: #{dino_v2_encoder_lora_forward.24} parent=0 // pred_fallthru
    _

// kernel: dino_v2_encoder_lora_forward.25
$region0: #{dino_v2_encoder_lora_forward.25}
  #allocation0 [shape = 'u32[]', space=smem, size = 0x4, offset = 0x4, fixed_abs, tag = 'smem constant byte address 0x4 - core index']
  #allocation1 [shape = 'u32[144,128]{1,0:T(1,128)}', space=vmem, size = 0x12000, scoped, tag = 'internal scratch']
  %s0 = inlined_call_operand.vmem [shape: f32[16,4,4], index: 0, kind: input, shape index: {}]
  %s1 = inlined_call_operand.vmem [shape: f32[16,4], index: 1, kind: input, shape index: {}, may-alias: {1,2}]
  %s2 = inlined_call_operand.vmem [shape: f32[16,4], index: 2, kind: input, shape index: {}, may-alias: {1,2}]
  %s3 = inlined_call_operand.hbm [shape: f32[16,16,16], index: 3, kind: output, shape index: {}]
  %s4 = sld [smem:[#allocation0]]
  $region45: #{dino_v2_encoder_lora_forward.25} parent=0
    _
  %s6 = ssub.s32 1, %s4
  %s7 = scalar_select 0, %s6, %s4
  $region1: #{dino_v2_encoder_lora_forward.25} parent=0
    #allocation2 [shape = 'u8[16384]{0}', space=vmem, size = 0x4000, scoped, tag = 'output window, operand 0']
    #allocation3 [shape = 's32[2]{0}', space=sflag, size = 0x8, scoped, tag = 'scoped memory for dino_v2_encoder_lora_forward.25']
    %8 = vsyncpa [#allocation3], 0
    %s9 = scalar_lea.sflag [#allocation3], 1
    %10 = vsyncpa %s9, 0
    loop: start=0, step=1, limit=18
    $region2: #{dino_v2_encoder_lora_forward.25} parent=1 // loop_pre_header
      _
    $region3: #{dino_v2_encoder_lora_forward.25} parent=1 // loop_header
      %s12 = sphi 0, %s16
      %p13 = scmp.ge.s32.totalorder %s12, 18
      %s22 = sphi 0, %s24
      %s25 = sphi 0, %s22
      %s26 = sphi 0, %s25
      %s42 = sphi 0, %s26
      %s46 = sphi 0, %s46
      %s48 = sphi 0, %s46
      %s49 = sphi 0, %s48
      %s63 = sphi 0, %s49
      %s67 = sphi 0, %s67
      %s69 = sphi 0, %s67
      %s70 = sphi 0, %s69
      %s84 = sphi 0, %s70
      %s90 = sphi 0, %s92
      %s93 = sphi 0, %s90
      %s94 = sphi 0, %s93
      %s110 = sphi 0, %s94
    $region4: #{dino_v2_encoder_lora_forward.25} parent=1 // loop_header_branch
      %15 = sbr.rel (%p13) target = $region8
    $region5: #{dino_v2_encoder_lora_forward.25} parent=1 // loop_body
      %s17 = ssub.s32 %s12, 1
      %s18 = ssub.s32 %s12, 2
      %s19 = sadd.s32 %s12, 1
      %s20 = ssub.s32 %s12, %s19
      %p21 = scmp.eq.s32.totalorder %s20, 0
      %s23 = sadd.s32 %s22, 1
      %s24 = scalar_select %p21, %s22, %s23
      %p27 = pneg %p21
      %p28 = scmp.eq.s32.totalorder %s12, 15
      %p29 = por %p27, %p28
      %p30 = scmp.ne.s32.totalorder %s22, %s25
      %p31 = scmp.eq.s32.totalorder %s12, 0
      %p32 = por %p30, %p31
      %p33 = scmp.ne.s32.totalorder %s22, %s25
      %p34 = scmp.eq.s32.totalorder %s17, 15
      %p35 = por %p33, %p34
      %p36 = scmp.ne.s32.totalorder %s25, %s26
      %p37 = scmp.eq.s32.totalorder %s17, 0
      %p38 = por %p36, %p37
      %p39 = scmp.ne.s32.totalorder %s25, %s26
      %p40 = scmp.eq.s32.totalorder %s18, 15
      %p41 = por %p39, %p40
      %p43 = scmp.ne.s32.totalorder %s26, %s42
      %p44 = scmp.eq.s32.totalorder %s18, 0
      %p45 = por %p43, %p44
      %s47 = sadd.s32 %s46, 1
      %p50 = scmp.eq.s32.totalorder %s12, 15
      %p51 = scmp.ne.s32.totalorder %s46, %s48
      %p52 = scmp.eq.s32.totalorder %s12, 0
      %p53 = por %p51, %p52
      %p54 = scmp.ne.s32.totalorder %s46, %s48
      %p55 = scmp.eq.s32.totalorder %s17, 15
      %p56 = por %p54, %p55
      %p57 = scmp.ne.s32.totalorder %s48, %s49
      %p58 = scmp.eq.s32.totalorder %s17, 0
      %p59 = por %p57, %p58
      %p60 = scmp.ne.s32.totalorder %s48, %s49
      %p61 = scmp.eq.s32.totalorder %s18, 15
      %p62 = por %p60, %p61
      %p64 = scmp.ne.s32.totalorder %s49, %s63
      %p65 = scmp.eq.s32.totalorder %s18, 0
      %p66 = por %p64, %p65
      %s68 = sadd.s32 %s67, 1
      %p71 = scmp.eq.s32.totalorder %s12, 15
      %p72 = scmp.ne.s32.totalorder %s67, %s69
      %p73 = scmp.eq.s32.totalorder %s12, 0
      %p74 = por %p72, %p73
      %p75 = scmp.ne.s32.totalorder %s67, %s69
      %p76 = scmp.eq.s32.totalorder %s17, 15
      %p77 = por %p75, %p76
      %p78 = scmp.ne.s32.totalorder %s69, %s70
      %p79 = scmp.eq.s32.totalorder %s17, 0
      %p80 = por %p78, %p79
      %p81 = scmp.ne.s32.totalorder %s69, %s70
      %p82 = scmp.eq.s32.totalorder %s18, 15
      %p83 = por %p81, %p82
      %p85 = scmp.ne.s32.totalorder %s70, %s84
      %p86 = scmp.eq.s32.totalorder %s18, 0
      %p87 = por %p85, %p86
      %s88 = ssub.s32 %s12, %s19
      %p89 = scmp.eq.s32.totalorder %s88, 0
      %s91 = sadd.s32 %s90, 1
      %s92 = scalar_select %p89, %s90, %s91
      %p95 = pneg %p89
      %p96 = scmp.eq.s32.totalorder %s12, 15
      %p97 = por %p95, %p96
      %p98 = scmp.ne.s32.totalorder %s90, %s93
      %p99 = scmp.eq.s32.totalorder %s12, 0
      %p100 = por %p98, %p99
      %p101 = scmp.ne.s32.totalorder %s90, %s93
      %p102 = scmp.eq.s32.totalorder %s17, 15
      %p103 = por %p101, %p102
      %p104 = scmp.ne.s32.totalorder %s93, %s94
      %p105 = scmp.eq.s32.totalorder %s17, 0
      %p106 = por %p104, %p105
      %p107 = scmp.ne.s32.totalorder %s93, %s94
      %p108 = scmp.eq.s32.totalorder %s18, 15
      %p109 = por %p107, %p108
      %p111 = scmp.ne.s32.totalorder %s94, %s110
      %p112 = scmp.eq.s32.totalorder %s18, 0
      %p113 = por %p111, %p112
      %p114 = scmp.le.s32.totalorder 1, %s12
      %p115 = scmp.lt.s32.totalorder %s12, 17
      %p116 = pnand %p114, %p115
      %p117 = pneg %p116
      // Predicated region
      $region9: #{dino_v2_encoder_lora_forward.25} parent=5 // pred_check
        _
      $region10: #{dino_v2_encoder_lora_forward.25} parent=5 // pred_check_branch
        %119 = sbr.rel (%p116) target = $region12
      $region11: #{dino_v2_encoder_lora_forward.25} parent=5 // pred_region
        %s120 = ssub.s32 %s12, 1
        // Predicated region
        $region13: #{dino_v2_encoder_lora_forward.25} parent=11 // pred_check
          %p121 = pneg %p59
        $region14: #{dino_v2_encoder_lora_forward.25} parent=11 // pred_check_branch
          %123 = sbr.rel (%p121) target = $region16
        $region15: #{dino_v2_encoder_lora_forward.25} parent=11 // pred_region
          _
        $region16: #{dino_v2_encoder_lora_forward.25} parent=11 // pred_fallthru
          _
        // Predicated region
        $region17: #{dino_v2_encoder_lora_forward.25} parent=11 // pred_check
          %p124 = pneg %p80
        $region18: #{dino_v2_encoder_lora_forward.25} parent=11 // pred_check_branch
          %126 = sbr.rel (%p124) target = $region20
        $region19: #{dino_v2_encoder_lora_forward.25} parent=11 // pred_region
          _
        $region20: #{dino_v2_encoder_lora_forward.25} parent=11 // pred_fallthru
          _
      $region12: #{dino_v2_encoder_lora_forward.25} parent=5 // pred_fallthru
        _
      %p127 = scmp.lt.s32.totalorder %s12, 16
      // Predicated region
      $region21: #{dino_v2_encoder_lora_forward.25} parent=5 // pred_check
        %p128 = pneg %p127
      $region22: #{dino_v2_encoder_lora_forward.25} parent=5 // pred_check_branch
        %130 = sbr.rel (%p128) target = $region24
      $region23: #{dino_v2_encoder_lora_forward.25} parent=5 // pred_region
        // Predicated region
        $region25: #{dino_v2_encoder_lora_forward.25} parent=23 // pred_check
          %p131 = pneg %p32
        $region26: #{dino_v2_encoder_lora_forward.25} parent=23 // pred_check_branch
          %133 = sbr.rel (%p131) target = $region28
        $region27: #{dino_v2_encoder_lora_forward.25} parent=23 // pred_region
          %p134 = scmp.lt.s32.totalorder %s12, 15
          %s135 = scalar_select %p134, %s12, 15
          %s136 = smul.addr %s135, 4
          %s137 = scalar_lea.vmem %s0, %s136
        $region28: #{dino_v2_encoder_lora_forward.25} parent=23 // pred_fallthru
          _
      $region24: #{dino_v2_encoder_lora_forward.25} parent=5 // pred_fallthru
        _
      %p138 = scmp.le.s32.totalorder 1, %s12
      %p139 = scmp.lt.s32.totalorder %s12, 17
      %p140 = pnand %p138, %p139
      %p141 = pneg %p140
      // Predicated region
      $region29: #{dino_v2_encoder_lora_forward.25} parent=5 // pred_check
        _
      $region30: #{dino_v2_encoder_lora_forward.25} parent=5 // pred_check_branch
        %143 = sbr.rel (%p140) target = $region32
      $region31: #{dino_v2_encoder_lora_forward.25} parent=5 // pred_region
        %s144 = ssub.s32 %s12, 1
        %p145 = scmp.lt.s32.totalorder %s17, 15
        %s146 = scalar_select %p145, %s17, 15
        %s147 = smul.addr %s146, 4
        %s148 = scalar_lea.vmem %s0, %s147
        %p149 = pneg %p38
        %p150 = pneg %p35
        %p151 = pneg %p59
        %p152 = pneg %p56
        %p153 = pneg %p80
        %p154 = pneg %p77
        %p155 = pneg %p106
        %p156 = pneg %p103
        %s157 = sand.u32 %s93, 1
        %s158 = scalar_lea.sflag [#allocation3], %s157
        %s159 = sand.u32 %s93, 1
        %s160 = smul.addr %s159, 16
        %s161 = scalar_lea.vmem [#allocation2], %s160
        %p162 = scmp.lt.s32.totalorder %s17, 15
        %s163 = scalar_select %p162, %s17, 15
        %s164 = smul.addr %s163, 4
        %s165 = scalar_lea.vmem %s0, %s164
        %v166 = vld [vmem:[%s165] sm:$0xf]
        %v167 = vld [vmem:[%s1] sm:$0xff]
        %v168 = vld [vmem:[%s1 + $0x8] sm:$0xff]
        %vm169 = vcmask 31744
        %v171 = vsel %vm169, %v167, 0
        %v174 = vsel %vm169, %v168, 0
        %vm176 = vcmask 1043456
        %v178 = vsel %vm176, %v166, 0
        %180 = vmatprep.subr.mxu0 0.0
        %181 = vmatpush1.msra.mxu0 %v178
        %182 = vmatprep.subr.mxu0 0.0
        %183 = vmatpush1.msra.mxu0 0.0
        %184 = vmatprep.subr.mxu0 0.0
        %185 = vmatpush1.msra.mxu0 0.0
        %186 = vmatprep.subr.mxu0 0.0
        %187 = vmatpush1.msra.mxu0 0.0
        %188 = vmatprep.subr.mxu0 0.0
        %189 = vmatpush1.msra.mxu0 0.0
        %190 = vmatprep.subr.mxu0 0.0
        %191 = vmatpush1.msra.mxu0 0.0
        %192 = vmatprep.subr.mxu0 0.0
        %193 = vmatpush1.msra.mxu0 0.0
        %194 = vmatprep.subr.mxu0 0.0
        %195 = vmatpush1.msra.mxu0 0.0
        %196 = vmatprep.subr.mxu0 0.0
        %197 = vmatpush1.msra.mxu0 0.0
        %198 = vmatprep.subr.mxu0 0.0
        %199 = vmatpush1.msra.mxu0 0.0
        %200 = vmatprep.subr.mxu0 0.0
        %201 = vmatpush1.msra.mxu0 0.0
        %202 = vmatprep.subr.mxu0 0.0
        %203 = vmatpush1.msra.mxu0 0.0
        %204 = vmatprep.subr.mxu0 0.0
        %205 = vmatpush1.msra.mxu0 0.0
        %206 = vmatprep.subr.mxu0 0.0
        %207 = vmatpush1.msra.mxu0 0.0
        %208 = vmatprep.subr.mxu0 0.0
        %209 = vmatpush1.msra.mxu0 0.0
        %210 = vmatprep.subr.mxu0 0.0
        %211 = vmatpush1.msra.mxu0 0.0
        %212 = vmatprep.subr.mxu0 0.0
        %213 = vmatpush1.msra.mxu0 0.0
        %214 = vmatprep.subr.mxu0 0.0
        %215 = vmatpush1.msra.mxu0 0.0
        %216 = vmatprep.subr.mxu0 0.0
        %217 = vmatpush1.msra.mxu0 0.0
        %218 = vmatprep.subr.mxu0 0.0
        %219 = vmatpush1.msra.mxu0 0.0
        %220 = vmatprep.subr.mxu0 0.0
        %221 = vmatpush1.msra.mxu0 0.0
        %222 = vmatprep.subr.mxu0 0.0
        %223 = vmatpush1.msra.mxu0 0.0
        %224 = vmatprep.subr.mxu0 0.0
        %225 = vmatpush1.msra.mxu0 0.0
        %226 = vmatprep.subr.mxu0 0.0
        %227 = vmatpush1.msra.mxu0 0.0
        %228 = vmatprep.subr.mxu0 0.0
        %229 = vmatpush1.msra.mxu0 0.0
        %230 = vmatprep.subr.mxu0 0.0
        %231 = vmatpush1.msra.mxu0 0.0
        %232 = vmatprep.subr.mxu0 0.0
        %233 = vmatpush1.msra.mxu0 0.0
        %234 = vmatprep.subr.mxu0 0.0
        %235 = vmatpush1.msra.mxu0 0.0
        %236 = vmatprep.subr.mxu0 0.0
        %237 = vmatpush1.msra.mxu0 0.0
        %238 = vmatprep.subr.mxu0 0.0
        %239 = vmatpush1.msra.mxu0 0.0
        %240 = vmatprep.subr.mxu0 0.0
        %241 = vmatpush1.msra.mxu0 0.0
        %242 = vmatprep.subr.mxu0 0.0
        %243 = vmatpush1.msra.mxu0 0.0
        %244 = vmatprep.mubr.f32.mxu0 0.0
        %245 = vmatmul.mubr.f32.gmra.mrb[0].mxu0 %v171
        %v246 = vpop.f32.mrb[0].mxu0
        %v247 = vadd.f32 0.0, %v246
        %v248 = vpop.f32.mrb[0].mxu0
        %249 = vmatprep.mubr.f32.mxu0 0.0
        %250 = vmatmul.mubr.f32.gmra.mrb[0].mxu0 %v174
        %v251 = vpop.f32.mrb[0].mxu0
        %v252 = vadd.f32 0.0, %v251
        %v253 = vpop.f32.mrb[0].mxu0
        %254 = vdwg.mxu0
        %v255 = vld [vmem:[%s2] sm:$0xff]
        %v256 = vld [vmem:[%s2 + $0x8] sm:$0xff]
        %v258 = vsel %vm169, %v247, 0
        %v261 = vsel %vm169, %v252, 0
        %v264 = vsel %vm169, %v255, 0
        %v267 = vsel %vm169, %v256, 0
        %269 = vmatprep.subr.mxu0 0.0
        %270 = vmatpush1.xpose.msra.mxu0 %v264
        %271 = vmatprep.subr.mxu0 0.0
        %272 = vmatpush1.xpose.msra.mxu0 %v267
        %273 = vmatprep.subr.mxu0 0.0
        %274 = vmatpush1.xpose.msra.mxu0 0.0
        %275 = vmatprep.subr.mxu0 0.0
        %276 = vmatpush1.xpose.msra.mxu0 0.0
        %277 = vmatprep.subr.mxu0 0.0
        %278 = vmatpush1.xpose.msra.mxu0 0.0
        %279 = vmatprep.subr.mxu0 0.0
        %280 = vmatpush1.xpose.msra.mxu0 0.0
        %281 = vmatprep.subr.mxu0 0.0
        %282 = vmatpush1.xpose.msra.mxu0 0.0
        %283 = vmatprep.subr.mxu0 0.0
        %284 = vmatpush1.xpose.msra.mxu0 0.0
        %285 = vmatprep.subr.mxu0 0.0
        %286 = vmatpush1.xpose.msra.mxu0 0.0
        %287 = vmatprep.subr.mxu0 0.0
        %288 = vmatpush1.xpose.msra.mxu0 0.0
        %289 = vmatprep.subr.mxu0 0.0
        %290 = vmatpush1.xpose.msra.mxu0 0.0
        %291 = vmatprep.subr.mxu0 0.0
        %292 = vmatpush1.xpose.msra.mxu0 0.0
        %293 = vmatprep.subr.mxu0 0.0
        %294 = vmatpush1.xpose.msra.mxu0 0.0
        %295 = vmatprep.subr.mxu0 0.0
        %296 = vmatpush1.xpose.msra.mxu0 0.0
        %297 = vmatprep.subr.mxu0 0.0
        %298 = vmatpush1.xpose.msra.mxu0 0.0
        %299 = vmatprep.subr.mxu0 0.0
        %300 = vmatpush1.xpose.msra.mxu0 0.0
        %301 = vmatprep.subr.mxu0 0.0
        %302 = vmatpush1.xpose.msra.mxu0 0.0
        %303 = vmatprep.subr.mxu0 0.0
        %304 = vmatpush1.xpose.msra.mxu0 0.0
        %305 = vmatprep.subr.mxu0 0.0
        %306 = vmatpush1.xpose.msra.mxu0 0.0
        %307 = vmatprep.subr.mxu0 0.0
        %308 = vmatpush1.xpose.msra.mxu0 0.0
        %309 = vmatprep.subr.mxu0 0.0
        %310 = vmatpush1.xpose.msra.mxu0 0.0
        %311 = vmatprep.subr.mxu0 0.0
        %312 = vmatpush1.xpose.msra.mxu0 0.0
        %313 = vmatprep.subr.mxu0 0.0
        %314 = vmatpush1.xpose.msra.mxu0 0.0
        %315 = vmatprep.subr.mxu0 0.0
        %316 = vmatpush1.xpose.msra.mxu0 0.0
        %317 = vmatprep.subr.mxu0 0.0
        %318 = vmatpush1.xpose.msra.mxu0 0.0
        %319 = vmatprep.subr.mxu0 0.0
        %320 = vmatpush1.xpose.msra.mxu0 0.0
        %321 = vmatprep.subr.mxu0 0.0
        %322 = vmatpush1.xpose.msra.mxu0 0.0
        %323 = vmatprep.subr.mxu0 0.0
        %324 = vmatpush1.xpose.msra.mxu0 0.0
        %325 = vmatprep.subr.mxu0 0.0
        %326 = vmatpush1.xpose.msra.mxu0 0.0
        %327 = vmatprep.subr.mxu0 0.0
        %328 = vmatpush1.xpose.msra.mxu0 0.0
        %329 = vmatprep.subr.mxu0 0.0
        %330 = vmatpush1.xpose.msra.mxu0 0.0
        %331 = vmatprep.subr.mxu0 0.0
        %332 = vmatpush1.xpose.msra.mxu0 0.0
        %333 = vmatprep.mubr.f32.mxu0 0.0
        %334 = vmatmul.mubr.f32.gmra.mrb[0].mxu0 %v258
        %v335 = vpop.f32.mrb[0].mxu0
        %v336 = vadd.f32 0.0, %v335
        %v337 = vpop.f32.mrb[0].mxu0
        %338 = vmatprep.mubr.f32.mxu0 0.0
        %339 = vmatmul.mubr.f32.gmra.mrb[0].mxu0 %v261
        %v340 = vpop.f32.mrb[0].mxu0
        %v341 = vadd.f32 0.0, %v340
        %v342 = vpop.f32.mrb[0].mxu0
        %343 = vdwg.mxu0
        %vm344 = vcmask 130048
        %345 = vst.msk [vmem:[%s161] sm:$0xff] %vm344, %v336
        %346 = vst.msk [vmem:[%s161 + $0x8] sm:$0xff] %vm344, %v341
        %s347 = sand.u32 %s93, 1
        %s348 = scalar_lea.sflag [#allocation3], %s347
        %s349 = sand.u32 %s93, 1
        %s350 = smul.addr %s349, 16
        %s351 = scalar_lea.vmem [#allocation2], %s350
        // Predicated region
        $region33: #{dino_v2_encoder_lora_forward.25} parent=31 // pred_check
          %p352 = pneg %p103
        $region34: #{dino_v2_encoder_lora_forward.25} parent=31 // pred_check_branch
          %354 = sbr.rel (%p352) target = $region36
        $region35: #{dino_v2_encoder_lora_forward.25} parent=31 // pred_region
          %s356 = ssub.s32 256, 256
          %357 = vsyncadd %s348, %s356
          %s358 = smul.addr %s17, 2
          %s359 = smul.addr %s358, 128
          %s360 = scalar_lea.hbm %s3, %s359
          %s361 = sshll.u32 %s351, 4
          %s362 = int_to_ptr.vmem [resolvable:$true] %s361
          %367 = dma.vmem_to_hbm [thread:$0]  %s362, 256, %s360, %s348, 128, 128, 8
        $region36: #{dino_v2_encoder_lora_forward.25} parent=31 // pred_fallthru
          _
      $region32: #{dino_v2_encoder_lora_forward.25} parent=5 // pred_fallthru
        _
      %p368 = scmp.le.s32.totalorder 2, %s12
      // Predicated region
      $region37: #{dino_v2_encoder_lora_forward.25} parent=5 // pred_check
        %p369 = pneg %p368
      $region38: #{dino_v2_encoder_lora_forward.25} parent=5 // pred_check_branch
        %371 = sbr.rel (%p369) target = $region40
      $region39: #{dino_v2_encoder_lora_forward.25} parent=5 // pred_region
        %s372 = ssub.s32 %s12, 2
        // Predicated region
        $region41: #{dino_v2_encoder_lora_forward.25} parent=39 // pred_check
          %p373 = pneg %p109
        $region42: #{dino_v2_encoder_lora_forward.25} parent=39 // pred_check_branch
          %375 = sbr.rel (%p373) target = $region44
        $region43: #{dino_v2_encoder_lora_forward.25} parent=39 // pred_region
          %s376 = sand.u32 %s94, 1
          %s377 = scalar_lea.sflag [#allocation3], %s376
          %s378 = sand.u32 %s94, 1
          %s379 = smul.addr %s378, 16
          %s380 = scalar_lea.vmem [#allocation2], %s379
          %381 = dma.done %s377, 256
        $region44: #{dino_v2_encoder_lora_forward.25} parent=39 // pred_fallthru
          _
      $region40: #{dino_v2_encoder_lora_forward.25} parent=5 // pred_fallthru
        _
    $region6: #{dino_v2_encoder_lora_forward.25} parent=1 // loop_footer
      %s16 = sadd.s32 1, %s12
    $region7: #{dino_v2_encoder_lora_forward.25} parent=1 // loop_footer_branch
      %11 = sbr.rel target = $region3
    $region8: #{dino_v2_encoder_lora_forward.25} parent=1 // loop_exit
      _
    %382 = vsyncpa [#allocation3], 1
    %s383 = scalar_lea.sflag [#allocation3], 1
    %384 = vsyncpa %s383, 1

</llo_original>
